<compile_context>
chip_gen: v7x
topology: tpu7x:2x2x1
jax: 0.10.0
libtpu: 0.0.40
codegen_flags: <defaults>
</compile_context>

<pallas_src>
import numpy as np
import jax
import jax.numpy as jnp
from jax import lax
from jax.experimental import pallas as pl
from jax.experimental.pallas import tpu as pltpu

# ------------------------ hyperparameters (FlatSMN) ------------------------
EMBEDDING_DIM = 32          # E
MAX_LEN = 16                # M
PAD = 1
VOCAB_LEN = 50
BATCH = 2

E = EMBEDDING_DIM
M = MAX_LEN
P = MAX_LEN // 3            # max_pool2d(3) output spatial size (=5)
O_DIM = 8 * P * P           # flattened conv feature dim (=200)
MM = M * M                  # flattened spatial size (=256)

# 3x3 tap offsets (dr, dc), ki-major / kj-minor — matches conv weight layout.
OFFS9 = tuple((dr, dc) for dr in (-1, 0, 1) for dc in (-1, 0, 1))


# ----------------------------- host-side constants --------------------------
def _build_tapmask9():
    msk = np.zeros((9, MM), np.float32)
    yy, xx = np.meshgrid(np.arange(M), np.arange(M), indexing='ij')
    for j, (dr, dc) in enumerate(OFFS9):
        ok = (yy + dr >= 0) & (yy + dr < M) & (xx + dc >= 0) & (xx + dc < M)
        msk[j] = ok.astype(np.float32).reshape(-1)
    return msk


def _build_sel():
    sel = np.zeros((MM, P * P), np.float32)
    for pi in range(P):
        for pj in range(P):
            sel[(3 * pi) * M + 3 * pj, pi * P + pj] = 1.0
    return sel


_TAPMASK9 = _build_tapmask9()                                            # (9, 256)
_SEL = _build_sel()                                                      # (256, 25)
_SPREAD_M = np.tile(np.eye(M, dtype=np.float32), (1, M))                 # (16, 256)
_ROWMASK_M = np.kron(np.eye(M, dtype=np.float32),
                     np.ones((1, M), np.float32))                        # (16, 256)
_SPREAD_P = np.tile(np.eye(P * P, dtype=np.float32), (1, 8))             # (25, 200)
_ROWMASK_P = np.kron(np.eye(8, dtype=np.float32),
                     np.ones((1, P * P), np.float32))                    # (8, 200)


# ----------------------------- in-kernel helpers -----------------------------
def _lane_shift(x, s):
    """y[:, a] = x[:, a + s] with zero fill outside the array (2-D values)."""
    if s == 0:
        return x
    r, l = x.shape
    if s > 0:
        return jnp.concatenate([x[:, s:], jnp.zeros((r, s), x.dtype)], axis=1)
    return jnp.concatenate([jnp.zeros((r, -s), x.dtype), x[:, :l + s]], axis=1)


def _flatten_c_order(x, spread, rowmask):
    """(R, C) -> (1, R*C) in C-order via a constant spread matmul (MXU)."""
    y = jnp.dot(x, spread, preferred_element_type=jnp.float32) * rowmask
    return jnp.sum(y, axis=0, keepdims=True)


def _gru_direction(xs, wihT, whhT, bih, bhh):
    """Unrolled GRU over the (short) list of inputs xs, each (N, E)."""
    h = jnp.zeros((xs[0].shape[0], E), jnp.float32)
    outs = []
    for xt in xs:
        gi = jnp.dot(xt, wihT, preferred_element_type=jnp.float32) + bih
        gh = jnp.dot(h, whhT, preferred_element_type=jnp.float32) + bhh
        r = jax.nn.sigmoid(gi[:, :E] + gh[:, :E])
        z = jax.nn.sigmoid(gi[:, E:2 * E] + gh[:, E:2 * E])
        n = jnp.tanh(gi[:, 2 * E:] + r * gh[:, 2 * E:])
        h = (1.0 - z) * n + z * h
        outs.append(h)
    return outs


# ------------------------------- fused kernel --------------------------------
def _flat_smn_kernel(
        xx1_ref, xx2_ref, ck_ref, rk_ref,
        wihT_f_ref, whhT_f_ref, bih_f_ref, bhh_f_ref,
        wihT_b_ref, whhT_b_ref, bih_b_ref, bhh_b_ref,
        w_ref, w18_ref, convb_ref, tapmask_ref,
        spread_m_ref, rowmask_m_ref, sel_ref, spread_p_ref, rowmask_p_ref,
        w1t_ref, b1_ref, w2t_ref, b2_ref,
        out_ref):
    B = xx1_ref.shape[0]

    # ---- bidirectional GRU, recurrence over the leading (batch) axis, T = B ----
    xs = [jnp.concatenate([xx1_ref[t], xx2_ref[t]], axis=0) for t in range(B)]
    fwd = _gru_direction(xs, wihT_f_ref[...], whhT_f_ref[...],
                         bih_f_ref[...], bhh_f_ref[...])
    bwd = _gru_direction(xs[::-1], wihT_b_ref[...], whhT_b_ref[...],
                         bih_b_ref[...], bhh_b_ref[...])[::-1]

    w = w_ref[...]
    w18 = w18_ref[...]
    convb = convb_ref[...]
    tapmask = tapmask_ref[...]
    spread_m = spread_m_ref[...]
    rowmask_m = rowmask_m_ref[...]
    sel = sel_ref[...]
    spread_p = spread_p_ref[...]
    rowmask_p = rowmask_p_ref[...]
    w1t = w1t_ref[...]
    b1 = b1_ref[...]
    w2t = w2t_ref[...]
    b2 = b2_ref[...]

    ys = []
    for b in range(B):
        # -------- similarity maps + ReLU + pad masking --------
        g = jnp.concatenate([fwd[b], bwd[b]], axis=1)           # (2M, 2E)
        g1, g2 = g[:M, :], g[M:, :]
        a1, a2 = xx1_ref[b], xx2_ref[b]
        keep = ck_ref[b] * rk_ref[b]                            # (M,1)*(1,M)->(M,M)

        m1 = jnp.einsum('me,ne->mn', a1, a2,
                        preferred_element_type=jnp.float32)
        tmat = jnp.dot(g1, w, preferred_element_type=jnp.float32)
        m2 = jnp.einsum('mf,nf->mn', tmat, g2,
                        preferred_element_type=jnp.float32)
        m1 = jnp.maximum(m1, 0.0) * keep
        m2 = jnp.maximum(m2, 0.0) * keep

        # lane-dense flattened maps, torch C-order: each (1, 256)
        fm = (_flatten_c_order(m1, spread_m, rowmask_m),
              _flatten_c_order(m2, spread_m, rowmask_m))

        # ---- 3x3 conv (2->8 ch, padding=1) as 18 vectorized broadcast-FMAs ----
        conv = jnp.zeros((8, MM), jnp.float32)
        for j, (dr, dc) in enumerate(OFFS9):
            msk = tapmask[j:j + 1, :]                           # (1, 256)
            for ic in range(2):
                sh = _lane_shift(fm[ic], dr * M + dc) * msk     # (1, 256)
                col = 2 * j + ic
                conv = conv + w18[:, col:col + 1] * sh          # (8,1)*(1,256)
        conv = jnp.maximum(conv + convb, 0.0)                   # (8, 256)

        # ---- max_pool2d(3,3): window max via lane shifts + anchor selection ----
        cmax = jnp.maximum(conv, jnp.maximum(_lane_shift(conv, 1),
                                             _lane_shift(conv, 2)))
        wmax = jnp.maximum(cmax, jnp.maximum(_lane_shift(cmax, M),
                                             _lane_shift(cmax, 2 * M)))
        pooled = jnp.dot(wmax, sel, preferred_element_type=jnp.float32)  # (8, 25)

        # ---- flatten (torch .view order) + final MLP ----
        flat = _flatten_c_order(pooled, spread_p, rowmask_p)    # (1, 200)
        h = jnp.maximum(
            jnp.dot(flat, w1t, preferred_element_type=jnp.float32) + b1, 0.0)
        ys.append(jnp.dot(h, w2t, preferred_element_type=jnp.float32) + b2)

    out_ref[...] = jnp.concatenate(ys, axis=1)                  # (1, B)


def _flat_smn_pallas(args, batch):
    vmem = pl.BlockSpec(memory_space=pltpu.MemorySpace.VMEM)
    return pl.pallas_call(
        _flat_smn_kernel,
        out_shape=jax.ShapeDtypeStruct((1, batch), jnp.float32),
        in_specs=[vmem] * len(args),
        out_specs=vmem,
    )(*args)


# ------------------------------ forward wrapper -------------------------------
@jax.jit
def flat_smn_forward(params, x1, x2):
    B = x1.shape[0]
    xx1 = params['emb'][x1]                                     # (B, M, E)
    xx2 = params['emb'][x2]
    ckeep = (x1 != PAD).astype(jnp.float32)[:, :, None]         # (B, M, 1)
    rkeep = (x2 != PAD).astype(jnp.float32)[:, None, :]         # (B, 1, M)

    # conv weight reordered so column index = 2*(ki*3+kj) + ic
    w18 = params['conv_w'].transpose(0, 2, 3, 1).reshape(8, 18)
    convb = params['conv_b'].reshape(8, 1)

    args = [
        xx1, xx2, ckeep, rkeep,
        params['Wih_f'].T, params['Whh_f'].T,
        params['bih_f'].reshape(1, -1), params['bhh_f'].reshape(1, -1),
        params['Wih_b'].T, params['Whh_b'].T,
        params['bih_b'].reshape(1, -1), params['bhh_b'].reshape(1, -1),
        params['w'], w18, convb, jnp.asarray(_TAPMASK9),
        jnp.asarray(_SPREAD_M), jnp.asarray(_ROWMASK_M),
        jnp.asarray(_SEL), jnp.asarray(_SPREAD_P), jnp.asarray(_ROWMASK_P),
        params['W1'].T, params['b1'].reshape(1, E),
        params['W2'].T, params['b2'].reshape(1, 1),
    ]
    out = _flat_smn_pallas(args, B)                             # (1, B)
    return out[0]                                               # (B,), == .squeeze(-1)


# --------------------------- pure-JAX reference path --------------------------
_HI = lax.Precision.HIGHEST


def _ref_gru_dir(x, Wih, Whh, bih, bhh):
    def step(h, xt):
        gi = jnp.dot(xt, Wih.T, precision=_HI) + bih
        gh = jnp.dot(h, Whh.T, precision=_HI) + bhh
        ir, iz, inn = jnp.split(gi, 3, axis=-1)
        hr, hz, hn = jnp.split(gh, 3, axis=-1)
        r = jax.nn.sigmoid(ir + hr)
        z = jax.nn.sigmoid(iz + hz)
        n = jnp.tanh(inn + r * hn)
        h_new = (1.0 - z) * n + z * h
        return h_new, h_new
    h0 = jnp.zeros((x.shape[1], E), x.dtype)
    return lax.scan(step, h0, x)[1]


@jax.jit
def _reference_forward(params, x1, x2):
    xx1 = params['emb'][x1]
    xx2 = params['emb'][x2]

    def bi(x):
        f = _ref_gru_dir(x, params['Wih_f'], params['Whh_f'],
                         params['bih_f'], params['bhh_f'])
        bwd = _ref_gru_dir(x[::-1], params['Wih_b'], params['Whh_b'],
                           params['bih_b'], params['bhh_b'])[::-1]
        return jnp.concatenate([f, bwd], axis=-1)

    g1, g2 = bi(xx1), bi(xx2)
    m1 = jnp.maximum(jnp.einsum('bme,bne->bmn', xx1, xx2, precision=_HI), 0.0)
    m2 = jnp.maximum(jnp.einsum('bme,ef,bnf->bmn', g1, params['w'], g2,
                                precision=_HI), 0.0)
    m = jnp.stack([m1, m2], axis=1)
    mask = (x1 == PAD)[:, None, :, None] | (x2 == PAD)[:, None, None, :]
    m = jnp.where(mask, 0.0, m)
    o = lax.conv_general_dilated(m, params['conv_w'], (1, 1), ((1, 1), (1, 1)),
                                 dimension_numbers=('NCHW', 'OIHW', 'NCHW'),
                                 precision=_HI)
    o = jnp.maximum(o + params['conv_b'][None, :, None, None], 0.0)
    o = lax.reduce_window(o, -jnp.inf, lax.max, (1, 1, 3, 3), (1, 1, 3, 3),
                          'VALID')
    flat = o.reshape(o.shape[0], -1)
    h = jnp.maximum(jnp.dot(flat, params['W1'].T, precision=_HI)
                    + params['b1'], 0.0)
    return (jnp.dot(h, params['W2'].T, precision=_HI) + params['b2'])[:, 0]


# ------------------------------ parameter setup --------------------------------
def init_params(key):
    ks = jax.random.split(key, 16)
    nrm = lambda k, shape, s: jax.random.normal(k, shape, jnp.float32) * s
    p = {}
    emb = nrm(ks[0], (VOCAB_LEN, E), 0.1)
    p['emb'] = emb.at[PAD].set(0.0)                         # padding_idx=PAD
    for i, d in enumerate(('f', 'b')):                      # bidirectional GRU
        p[f'Wih_{d}'] = nrm(ks[1 + 4 * i], (3 * E, E), 1.0 / np.sqrt(E))
        p[f'Whh_{d}'] = nrm(ks[2 + 4 * i], (3 * E, E), 1.0 / np.sqrt(E))
        p[f'bih_{d}'] = nrm(ks[3 + 4 * i], (3 * E,), 0.1)
        p[f'bhh_{d}'] = nrm(ks[4 + 4 * i], (3 * E,), 0.1)
    p['w'] = nrm(ks[9], (2 * E, 2 * E), np.sqrt(2.0 / (2 * E)))   # kaiming_normal_
    p['conv_w'] = nrm(ks[10], (8, 2, 3, 3), np.sqrt(2.0 / (2 * 9)))
    p['conv_b'] = nrm(ks[11], (8,), 0.1)
    p['W1'] = nrm(ks[12], (E, O_DIM), 1.0 / np.sqrt(O_DIM))
    p['b1'] = nrm(ks[13], (E,), 0.1)
    p['W2'] = nrm(ks[14], (1, E), 1.0 / np.sqrt(E))
    p['b2'] = nrm(ks[15], (1,), 0.1)
    return p


if __name__ == "__main__":
    key = jax.random.PRNGKey(0)
    pkey, k1, k2 = jax.random.split(key, 3)
    params = init_params(pkey)

    x1 = jax.random.randint(k1, (BATCH, M), 2, VOCAB_LEN, dtype=jnp.int32)
    x2 = jax.random.randint(k2, (BATCH, M), 2, VOCAB_LEN, dtype=jnp.int32)
    # introduce PAD tokens so the masking path is exercised
    x1 = x1.at[:, M - 3:].set(PAD)
    x2 = x2.at[:, M - 5:].set(PAD)

    out = flat_smn_forward(params, x1, x2)
    out = jax.block_until_ready(out)
    assert out.shape == (BATCH,)
    assert bool(jnp.all(jnp.isfinite(out)))

    ref = jax.block_until_ready(_reference_forward(params, x1, x2))
    np.testing.assert_allclose(np.asarray(out), np.asarray(ref),
                               rtol=2e-3, atol=2e-3)
    print("KERNEL_OK")
</pallas_src>

<mosaic_0001>
module attributes {stable_mosaic.version = 11 : i64} {
  func.func @_flat_smn_kernel(%arg0: memref<2x16x32xf32, #tpu.memory_space<vmem>>, %arg1: memref<2x16x32xf32, #tpu.memory_space<vmem>>, %arg2: memref<2x16x1xf32, #tpu.memory_space<vmem>>, %arg3: memref<2x1x16xf32, #tpu.memory_space<vmem>>, %arg4: memref<32x96xf32, #tpu.memory_space<vmem>>, %arg5: memref<32x96xf32, #tpu.memory_space<vmem>>, %arg6: memref<1x96xf32, #tpu.memory_space<vmem>>, %arg7: memref<1x96xf32, #tpu.memory_space<vmem>>, %arg8: memref<32x96xf32, #tpu.memory_space<vmem>>, %arg9: memref<32x96xf32, #tpu.memory_space<vmem>>, %arg10: memref<1x96xf32, #tpu.memory_space<vmem>>, %arg11: memref<1x96xf32, #tpu.memory_space<vmem>>, %arg12: memref<64x64xf32, #tpu.memory_space<vmem>>, %arg13: memref<8x18xf32, #tpu.memory_space<vmem>>, %arg14: memref<8x1xf32, #tpu.memory_space<vmem>>, %arg15: memref<9x256xf32, #tpu.memory_space<vmem>>, %arg16: memref<16x256xf32, #tpu.memory_space<vmem>>, %arg17: memref<16x256xf32, #tpu.memory_space<vmem>>, %arg18: memref<256x25xf32, #tpu.memory_space<vmem>>, %arg19: memref<25x200xf32, #tpu.memory_space<vmem>>, %arg20: memref<8x200xf32, #tpu.memory_space<vmem>>, %arg21: memref<200x32xf32, #tpu.memory_space<vmem>>, %arg22: memref<1x32xf32, #tpu.memory_space<vmem>>, %arg23: memref<32x1xf32, #tpu.memory_space<vmem>>, %arg24: memref<1x1xf32, #tpu.memory_space<vmem>>, %arg25: memref<1x2xf32, #tpu.memory_space<vmem>>) attributes {dimension_semantics = [], scalar_prefetch = 0 : i64, scratch_operands = 0 : i64, tpu.core_type = #tpu.core_type<tc>} {
    %c0 = arith.constant 0 : index
    %c0_0 = arith.constant 0 : index
    %c0_1 = arith.constant 0 : index
    %0 = vector.load %arg0[%c0, %c0_0, %c0_1] : memref<2x16x32xf32, #tpu.memory_space<vmem>>, vector<1x16x32xf32>
    %1 = vector.shape_cast %0 : vector<1x16x32xf32> to vector<16x32xf32>
    %c0_2 = arith.constant 0 : index
    %c0_3 = arith.constant 0 : index
    %c0_4 = arith.constant 0 : index
    %2 = vector.load %arg1[%c0_2, %c0_3, %c0_4] : memref<2x16x32xf32, #tpu.memory_space<vmem>>, vector<1x16x32xf32>
    %3 = vector.shape_cast %2 : vector<1x16x32xf32> to vector<16x32xf32>
    %4 = tpu.concatenate %1, %3 in 0 : vector<16x32xf32>, vector<16x32xf32> -> vector<32x32xf32>
    %c1 = arith.constant 1 : index
    %c0_5 = arith.constant 0 : index
    %c0_6 = arith.constant 0 : index
    %5 = vector.load %arg0[%c1, %c0_5, %c0_6] : memref<2x16x32xf32, #tpu.memory_space<vmem>>, vector<1x16x32xf32>
    %6 = vector.shape_cast %5 : vector<1x16x32xf32> to vector<16x32xf32>
    %c1_7 = arith.constant 1 : index
    %c0_8 = arith.constant 0 : index
    %c0_9 = arith.constant 0 : index
    %7 = vector.load %arg1[%c1_7, %c0_8, %c0_9] : memref<2x16x32xf32, #tpu.memory_space<vmem>>, vector<1x16x32xf32>
    %8 = vector.shape_cast %7 : vector<1x16x32xf32> to vector<16x32xf32>
    %9 = tpu.concatenate %6, %8 in 0 : vector<16x32xf32>, vector<16x32xf32> -> vector<32x32xf32>
    %c0_10 = arith.constant 0 : index
    %c0_11 = arith.constant 0 : index
    %10 = vector.load %arg4[%c0_10, %c0_11] : memref<32x96xf32, #tpu.memory_space<vmem>>, vector<32x96xf32>
    %c0_12 = arith.constant 0 : index
    %c0_13 = arith.constant 0 : index
    %11 = vector.load %arg5[%c0_12, %c0_13] : memref<32x96xf32, #tpu.memory_space<vmem>>, vector<32x96xf32>
    %c0_14 = arith.constant 0 : index
    %c0_15 = arith.constant 0 : index
    %12 = vector.load %arg6[%c0_14, %c0_15] : memref<1x96xf32, #tpu.memory_space<vmem>>, vector<1x96xf32>
    %c0_16 = arith.constant 0 : index
    %c0_17 = arith.constant 0 : index
    %13 = vector.load %arg7[%c0_16, %c0_17] : memref<1x96xf32, #tpu.memory_space<vmem>>, vector<1x96xf32>
    %cst = arith.constant 0.000000e+00 : f32
    %14 = vector.broadcast %cst : f32 to vector<32x32xf32>
    %cst_18 = arith.constant dense<0.000000e+00> : vector<32x96xf32>
    %15 = tpu.matmul %4, %10, %cst_18 {dimension_numbers = #tpu.dot_dimension_numbers<[1], [0], [0], [1], [0, 0, 1, 1], [], []>} : vector<32x32xf32>, vector<32x96xf32>, vector<32x96xf32> -> vector<32x96xf32>
    %16 = vector.broadcast %12 : vector<1x96xf32> to vector<32x96xf32>
    %17 = arith.addf %15, %16 : vector<32x96xf32>
    %cst_19 = arith.constant dense<0.000000e+00> : vector<32x96xf32>
    %18 = tpu.matmul %14, %11, %cst_19 {dimension_numbers = #tpu.dot_dimension_numbers<[1], [0], [0], [1], [0, 0, 1, 1], [], []>} : vector<32x32xf32>, vector<32x96xf32>, vector<32x96xf32> -> vector<32x96xf32>
    %19 = vector.broadcast %13 : vector<1x96xf32> to vector<32x96xf32>
    %20 = arith.addf %18, %19 : vector<32x96xf32>
    %21 = vector.extract_strided_slice %17 {offsets = [0, 0], sizes = [32, 32], strides = [1, 1]} : vector<32x96xf32> to vector<32x32xf32>
    %22 = vector.extract_strided_slice %20 {offsets = [0, 0], sizes = [32, 32], strides = [1, 1]} : vector<32x96xf32> to vector<32x32xf32>
    %23 = arith.addf %21, %22 : vector<32x32xf32>
    %24 = arith.negf %23 : vector<32x32xf32>
    %25 = math.exp %24 : vector<32x32xf32>
    %cst_20 = arith.constant 1.000000e+00 : f32
    %26 = vector.broadcast %cst_20 : f32 to vector<32x32xf32>
    %27 = arith.addf %26, %25 : vector<32x32xf32>
    %28 = arith.divf %26, %27 : vector<32x32xf32>
    %29 = vector.extract_strided_slice %17 {offsets = [0, 32], sizes = [32, 32], strides = [1, 1]} : vector<32x96xf32> to vector<32x32xf32>
    %30 = vector.extract_strided_slice %20 {offsets = [0, 32], sizes = [32, 32], strides = [1, 1]} : vector<32x96xf32> to vector<32x32xf32>
    %31 = arith.addf %29, %30 : vector<32x32xf32>
    %32 = arith.negf %31 : vector<32x32xf32>
    %33 = math.exp %32 : vector<32x32xf32>
    %cst_21 = arith.constant 1.000000e+00 : f32
    %34 = vector.broadcast %cst_21 : f32 to vector<32x32xf32>
    %35 = arith.addf %34, %33 : vector<32x32xf32>
    %36 = arith.divf %34, %35 : vector<32x32xf32>
    %37 = vector.extract_strided_slice %17 {offsets = [0, 64], sizes = [32, 32], strides = [1, 1]} : vector<32x96xf32> to vector<32x32xf32>
    %38 = vector.extract_strided_slice %20 {offsets = [0, 64], sizes = [32, 32], strides = [1, 1]} : vector<32x96xf32> to vector<32x32xf32>
    %39 = arith.mulf %28, %38 : vector<32x32xf32>
    %40 = arith.addf %37, %39 : vector<32x32xf32>
    %41 = math.tanh %40 : vector<32x32xf32>
    %cst_22 = arith.constant 1.000000e+00 : f32
    %42 = vector.broadcast %cst_22 : f32 to vector<32x32xf32>
    %43 = arith.subf %42, %36 : vector<32x32xf32>
    %44 = arith.mulf %43, %41 : vector<32x32xf32>
    %45 = arith.mulf %36, %14 : vector<32x32xf32>
    %46 = arith.addf %44, %45 : vector<32x32xf32>
    %cst_23 = arith.constant dense<0.000000e+00> : vector<32x96xf32>
    %47 = tpu.matmul %9, %10, %cst_23 {dimension_numbers = #tpu.dot_dimension_numbers<[1], [0], [0], [1], [0, 0, 1, 1], [], []>} : vector<32x32xf32>, vector<32x96xf32>, vector<32x96xf32> -> vector<32x96xf32>
    %48 = vector.broadcast %12 : vector<1x96xf32> to vector<32x96xf32>
    %49 = arith.addf %47, %48 : vector<32x96xf32>
    %cst_24 = arith.constant dense<0.000000e+00> : vector<32x96xf32>
    %50 = tpu.matmul %46, %11, %cst_24 {dimension_numbers = #tpu.dot_dimension_numbers<[1], [0], [0], [1], [0, 0, 1, 1], [], []>} : vector<32x32xf32>, vector<32x96xf32>, vector<32x96xf32> -> vector<32x96xf32>
    %51 = vector.broadcast %13 : vector<1x96xf32> to vector<32x96xf32>
    %52 = arith.addf %50, %51 : vector<32x96xf32>
    %53 = vector.extract_strided_slice %49 {offsets = [0, 0], sizes = [32, 32], strides = [1, 1]} : vector<32x96xf32> to vector<32x32xf32>
    %54 = vector.extract_strided_slice %52 {offsets = [0, 0], sizes = [32, 32], strides = [1, 1]} : vector<32x96xf32> to vector<32x32xf32>
    %55 = arith.addf %53, %54 : vector<32x32xf32>
    %56 = arith.negf %55 : vector<32x32xf32>
    %57 = math.exp %56 : vector<32x32xf32>
    %cst_25 = arith.constant 1.000000e+00 : f32
    %58 = vector.broadcast %cst_25 : f32 to vector<32x32xf32>
    %59 = arith.addf %58, %57 : vector<32x32xf32>
    %60 = arith.divf %58, %59 : vector<32x32xf32>
    %61 = vector.extract_strided_slice %49 {offsets = [0, 32], sizes = [32, 32], strides = [1, 1]} : vector<32x96xf32> to vector<32x32xf32>
    %62 = vector.extract_strided_slice %52 {offsets = [0, 32], sizes = [32, 32], strides = [1, 1]} : vector<32x96xf32> to vector<32x32xf32>
    %63 = arith.addf %61, %62 : vector<32x32xf32>
    %64 = arith.negf %63 : vector<32x32xf32>
    %65 = math.exp %64 : vector<32x32xf32>
    %cst_26 = arith.constant 1.000000e+00 : f32
    %66 = vector.broadcast %cst_26 : f32 to vector<32x32xf32>
    %67 = arith.addf %66, %65 : vector<32x32xf32>
    %68 = arith.divf %66, %67 : vector<32x32xf32>
    %69 = vector.extract_strided_slice %49 {offsets = [0, 64], sizes = [32, 32], strides = [1, 1]} : vector<32x96xf32> to vector<32x32xf32>
    %70 = vector.extract_strided_slice %52 {offsets = [0, 64], sizes = [32, 32], strides = [1, 1]} : vector<32x96xf32> to vector<32x32xf32>
    %71 = arith.mulf %60, %70 : vector<32x32xf32>
    %72 = arith.addf %69, %71 : vector<32x32xf32>
    %73 = math.tanh %72 : vector<32x32xf32>
    %cst_27 = arith.constant 1.000000e+00 : f32
    %74 = vector.broadcast %cst_27 : f32 to vector<32x32xf32>
    %75 = arith.subf %74, %68 : vector<32x32xf32>
    %76 = arith.mulf %75, %73 : vector<32x32xf32>
    %77 = arith.mulf %68, %46 : vector<32x32xf32>
    %78 = arith.addf %76, %77 : vector<32x32xf32>
    %c0_28 = arith.constant 0 : index
    %c0_29 = arith.constant 0 : index
    %79 = vector.load %arg8[%c0_28, %c0_29] : memref<32x96xf32, #tpu.memory_space<vmem>>, vector<32x96xf32>
    %c0_30 = arith.constant 0 : index
    %c0_31 = arith.constant 0 : index
    %80 = vector.load %arg9[%c0_30, %c0_31] : memref<32x96xf32, #tpu.memory_space<vmem>>, vector<32x96xf32>
    %c0_32 = arith.constant 0 : index
    %c0_33 = arith.constant 0 : index
    %81 = vector.load %arg10[%c0_32, %c0_33] : memref<1x96xf32, #tpu.memory_space<vmem>>, vector<1x96xf32>
    %c0_34 = arith.constant 0 : index
    %c0_35 = arith.constant 0 : index
    %82 = vector.load %arg11[%c0_34, %c0_35] : memref<1x96xf32, #tpu.memory_space<vmem>>, vector<1x96xf32>
    %cst_36 = arith.constant 0.000000e+00 : f32
    %83 = vector.broadcast %cst_36 : f32 to vector<32x32xf32>
    %cst_37 = arith.constant dense<0.000000e+00> : vector<32x96xf32>
    %84 = tpu.matmul %9, %79, %cst_37 {dimension_numbers = #tpu.dot_dimension_numbers<[1], [0], [0], [1], [0, 0, 1, 1], [], []>} : vector<32x32xf32>, vector<32x96xf32>, vector<32x96xf32> -> vector<32x96xf32>
    %85 = vector.broadcast %81 : vector<1x96xf32> to vector<32x96xf32>
    %86 = arith.addf %84, %85 : vector<32x96xf32>
    %cst_38 = arith.constant dense<0.000000e+00> : vector<32x96xf32>
    %87 = tpu.matmul %83, %80, %cst_38 {dimension_numbers = #tpu.dot_dimension_numbers<[1], [0], [0], [1], [0, 0, 1, 1], [], []>} : vector<32x32xf32>, vector<32x96xf32>, vector<32x96xf32> -> vector<32x96xf32>
    %88 = vector.broadcast %82 : vector<1x96xf32> to vector<32x96xf32>
    %89 = arith.addf %87, %88 : vector<32x96xf32>
    %90 = vector.extract_strided_slice %86 {offsets = [0, 0], sizes = [32, 32], strides = [1, 1]} : vector<32x96xf32> to vector<32x32xf32>
    %91 = vector.extract_strided_slice %89 {offsets = [0, 0], sizes = [32, 32], strides = [1, 1]} : vector<32x96xf32> to vector<32x32xf32>
    %92 = arith.addf %90, %91 : vector<32x32xf32>
    %93 = arith.negf %92 : vector<32x32xf32>
    %94 = math.exp %93 : vector<32x32xf32>
    %cst_39 = arith.constant 1.000000e+00 : f32
    %95 = vector.broadcast %cst_39 : f32 to vector<32x32xf32>
    %96 = arith.addf %95, %94 : vector<32x32xf32>
    %97 = arith.divf %95, %96 : vector<32x32xf32>
    %98 = vector.extract_strided_slice %86 {offsets = [0, 32], sizes = [32, 32], strides = [1, 1]} : vector<32x96xf32> to vector<32x32xf32>
    %99 = vector.extract_strided_slice %89 {offsets = [0, 32], sizes = [32, 32], strides = [1, 1]} : vector<32x96xf32> to vector<32x32xf32>
    %100 = arith.addf %98, %99 : vector<32x32xf32>
    %101 = arith.negf %100 : vector<32x32xf32>
    %102 = math.exp %101 : vector<32x32xf32>
    %cst_40 = arith.constant 1.000000e+00 : f32
    %103 = vector.broadcast %cst_40 : f32 to vector<32x32xf32>
    %104 = arith.addf %103, %102 : vector<32x32xf32>
    %105 = arith.divf %103, %104 : vector<32x32xf32>
    %106 = vector.extract_strided_slice %86 {offsets = [0, 64], sizes = [32, 32], strides = [1, 1]} : vector<32x96xf32> to vector<32x32xf32>
    %107 = vector.extract_strided_slice %89 {offsets = [0, 64], sizes = [32, 32], strides = [1, 1]} : vector<32x96xf32> to vector<32x32xf32>
    %108 = arith.mulf %97, %107 : vector<32x32xf32>
    %109 = arith.addf %106, %108 : vector<32x32xf32>
    %110 = math.tanh %109 : vector<32x32xf32>
    %cst_41 = arith.constant 1.000000e+00 : f32
    %111 = vector.broadcast %cst_41 : f32 to vector<32x32xf32>
    %112 = arith.subf %111, %105 : vector<32x32xf32>
    %113 = arith.mulf %112, %110 : vector<32x32xf32>
    %114 = arith.mulf %105, %83 : vector<32x32xf32>
    %115 = arith.addf %113, %114 : vector<32x32xf32>
    %cst_42 = arith.constant dense<0.000000e+00> : vector<32x96xf32>
    %116 = tpu.matmul %4, %79, %cst_42 {dimension_numbers = #tpu.dot_dimension_numbers<[1], [0], [0], [1], [0, 0, 1, 1], [], []>} : vector<32x32xf32>, vector<32x96xf32>, vector<32x96xf32> -> vector<32x96xf32>
    %117 = vector.broadcast %81 : vector<1x96xf32> to vector<32x96xf32>
    %118 = arith.addf %116, %117 : vector<32x96xf32>
    %cst_43 = arith.constant dense<0.000000e+00> : vector<32x96xf32>
    %119 = tpu.matmul %115, %80, %cst_43 {dimension_numbers = #tpu.dot_dimension_numbers<[1], [0], [0], [1], [0, 0, 1, 1], [], []>} : vector<32x32xf32>, vector<32x96xf32>, vector<32x96xf32> -> vector<32x96xf32>
    %120 = vector.broadcast %82 : vector<1x96xf32> to vector<32x96xf32>
    %121 = arith.addf %119, %120 : vector<32x96xf32>
    %122 = vector.extract_strided_slice %118 {offsets = [0, 0], sizes = [32, 32], strides = [1, 1]} : vector<32x96xf32> to vector<32x32xf32>
    %123 = vector.extract_strided_slice %121 {offsets = [0, 0], sizes = [32, 32], strides = [1, 1]} : vector<32x96xf32> to vector<32x32xf32>
    %124 = arith.addf %122, %123 : vector<32x32xf32>
    %125 = arith.negf %124 : vector<32x32xf32>
    %126 = math.exp %125 : vector<32x32xf32>
    %cst_44 = arith.constant 1.000000e+00 : f32
    %127 = vector.broadcast %cst_44 : f32 to vector<32x32xf32>
    %128 = arith.addf %127, %126 : vector<32x32xf32>
    %129 = arith.divf %127, %128 : vector<32x32xf32>
    %130 = vector.extract_strided_slice %118 {offsets = [0, 32], sizes = [32, 32], strides = [1, 1]} : vector<32x96xf32> to vector<32x32xf32>
    %131 = vector.extract_strided_slice %121 {offsets = [0, 32], sizes = [32, 32], strides = [1, 1]} : vector<32x96xf32> to vector<32x32xf32>
    %132 = arith.addf %130, %131 : vector<32x32xf32>
    %133 = arith.negf %132 : vector<32x32xf32>
    %134 = math.exp %133 : vector<32x32xf32>
    %cst_45 = arith.constant 1.000000e+00 : f32
    %135 = vector.broadcast %cst_45 : f32 to vector<32x32xf32>
    %136 = arith.addf %135, %134 : vector<32x32xf32>
    %137 = arith.divf %135, %136 : vector<32x32xf32>
    %138 = vector.extract_strided_slice %118 {offsets = [0, 64], sizes = [32, 32], strides = [1, 1]} : vector<32x96xf32> to vector<32x32xf32>
    %139 = vector.extract_strided_slice %121 {offsets = [0, 64], sizes = [32, 32], strides = [1, 1]} : vector<32x96xf32> to vector<32x32xf32>
    %140 = arith.mulf %129, %139 : vector<32x32xf32>
    %141 = arith.addf %138, %140 : vector<32x32xf32>
    %142 = math.tanh %141 : vector<32x32xf32>
    %cst_46 = arith.constant 1.000000e+00 : f32
    %143 = vector.broadcast %cst_46 : f32 to vector<32x32xf32>
    %144 = arith.subf %143, %137 : vector<32x32xf32>
    %145 = arith.mulf %144, %142 : vector<32x32xf32>
    %146 = arith.mulf %137, %115 : vector<32x32xf32>
    %147 = arith.addf %145, %146 : vector<32x32xf32>
    %c0_47 = arith.constant 0 : index
    %c0_48 = arith.constant 0 : index
    %148 = vector.load %arg12[%c0_47, %c0_48] : memref<64x64xf32, #tpu.memory_space<vmem>>, vector<64x64xf32>
    %c0_49 = arith.constant 0 : index
    %c0_50 = arith.constant 0 : index
    %149 = vector.load %arg13[%c0_49, %c0_50] : memref<8x18xf32, #tpu.memory_space<vmem>>, vector<8x18xf32>
    %c0_51 = arith.constant 0 : index
    %c0_52 = arith.constant 0 : index
    %150 = vector.load %arg14[%c0_51, %c0_52] : memref<8x1xf32, #tpu.memory_space<vmem>>, vector<8x1xf32>
    %c0_53 = arith.constant 0 : index
    %c0_54 = arith.constant 0 : index
    %151 = vector.load %arg15[%c0_53, %c0_54] : memref<9x256xf32, #tpu.memory_space<vmem>>, vector<9x256xf32>
    %c0_55 = arith.constant 0 : index
    %c0_56 = arith.constant 0 : index
    %152 = vector.load %arg16[%c0_55, %c0_56] : memref<16x256xf32, #tpu.memory_space<vmem>>, vector<16x256xf32>
    %c0_57 = arith.constant 0 : index
    %c0_58 = arith.constant 0 : index
    %153 = vector.load %arg17[%c0_57, %c0_58] : memref<16x256xf32, #tpu.memory_space<vmem>>, vector<16x256xf32>
    %c0_59 = arith.constant 0 : index
    %c0_60 = arith.constant 0 : index
    %154 = vector.load %arg18[%c0_59, %c0_60] : memref<256x25xf32, #tpu.memory_space<vmem>>, vector<256x25xf32>
    %c0_61 = arith.constant 0 : index
    %c0_62 = arith.constant 0 : index
    %155 = vector.load %arg19[%c0_61, %c0_62] : memref<25x200xf32, #tpu.memory_space<vmem>>, vector<25x200xf32>
    %c0_63 = arith.constant 0 : index
    %c0_64 = arith.constant 0 : index
    %156 = vector.load %arg20[%c0_63, %c0_64] : memref<8x200xf32, #tpu.memory_space<vmem>>, vector<8x200xf32>
    %c0_65 = arith.constant 0 : index
    %c0_66 = arith.constant 0 : index
    %157 = vector.load %arg21[%c0_65, %c0_66] : memref<200x32xf32, #tpu.memory_space<vmem>>, vector<200x32xf32>
    %c0_67 = arith.constant 0 : index
    %c0_68 = arith.constant 0 : index
    %158 = vector.load %arg22[%c0_67, %c0_68] : memref<1x32xf32, #tpu.memory_space<vmem>>, vector<1x32xf32>
    %c0_69 = arith.constant 0 : index
    %c0_70 = arith.constant 0 : index
    %159 = vector.load %arg23[%c0_69, %c0_70] : memref<32x1xf32, #tpu.memory_space<vmem>>, vector<32x1xf32>
    %c0_71 = arith.constant 0 : index
    %c0_72 = arith.constant 0 : index
    %160 = vector.load %arg24[%c0_71, %c0_72] : memref<1x1xf32, #tpu.memory_space<vmem>>, vector<1x1xf32>
    %161 = tpu.concatenate %46, %147 in 1 : vector<32x32xf32>, vector<32x32xf32> -> vector<32x64xf32>
    %162 = vector.extract_strided_slice %161 {offsets = [0, 0], sizes = [16, 64], strides = [1, 1]} : vector<32x64xf32> to vector<16x64xf32>
    %163 = vector.extract_strided_slice %161 {offsets = [16, 0], sizes = [16, 64], strides = [1, 1]} : vector<32x64xf32> to vector<16x64xf32>
    %c0_73 = arith.constant 0 : index
    %c0_74 = arith.constant 0 : index
    %c0_75 = arith.constant 0 : index
    %164 = vector.load %arg0[%c0_73, %c0_74, %c0_75] : memref<2x16x32xf32, #tpu.memory_space<vmem>>, vector<1x16x32xf32>
    %165 = vector.shape_cast %164 : vector<1x16x32xf32> to vector<16x32xf32>
    %c0_76 = arith.constant 0 : index
    %c0_77 = arith.constant 0 : index
    %c0_78 = arith.constant 0 : index
    %166 = vector.load %arg1[%c0_76, %c0_77, %c0_78] : memref<2x16x32xf32, #tpu.memory_space<vmem>>, vector<1x16x32xf32>
    %167 = vector.shape_cast %166 : vector<1x16x32xf32> to vector<16x32xf32>
    %c0_79 = arith.constant 0 : index
    %c0_80 = arith.constant 0 : index
    %c0_81 = arith.constant 0 : index
    %168 = vector.load %arg2[%c0_79, %c0_80, %c0_81] : memref<2x16x1xf32, #tpu.memory_space<vmem>>, vector<1x16x1xf32>
    %169 = vector.shape_cast %168 : vector<1x16x1xf32> to vector<16x1xf32>
    %c0_82 = arith.constant 0 : index
    %c0_83 = arith.constant 0 : index
    %c0_84 = arith.constant 0 : index
    %170 = vector.load %arg3[%c0_82, %c0_83, %c0_84] : memref<2x1x16xf32, #tpu.memory_space<vmem>>, vector<1x1x16xf32>
    %171 = vector.shape_cast %170 : vector<1x1x16xf32> to vector<1x16xf32>
    %172 = vector.broadcast %169 : vector<16x1xf32> to vector<16x16xf32>
    %173 = vector.broadcast %171 : vector<1x16xf32> to vector<16x16xf32>
    %174 = arith.mulf %172, %173 : vector<16x16xf32>
    "tpu.trace_start"() <{level = 10 : i32, message = "me,ne->mn"}> : () -> ()
    %cst_85 = arith.constant dense<0.000000e+00> : vector<16x16xf32>
    %175 = tpu.matmul %165, %167, %cst_85 {dimension_numbers = #tpu.dot_dimension_numbers<[1], [1], [0], [0], [0, 0, 1, 0], [], []>} : vector<16x32xf32>, vector<16x32xf32>, vector<16x16xf32> -> vector<16x16xf32>
    "tpu.trace_stop"() : () -> ()
    %cst_86 = arith.constant dense<0.000000e+00> : vector<16x64xf32>
    %176 = tpu.matmul %162, %148, %cst_86 {dimension_numbers = #tpu.dot_dimension_numbers<[1], [0], [0], [1], [0, 0, 1, 1], [], []>} : vector<16x64xf32>, vector<64x64xf32>, vector<16x64xf32> -> vector<16x64xf32>
    "tpu.trace_start"() <{level = 10 : i32, message = "mf,nf->mn"}> : () -> ()
    %cst_87 = arith.constant dense<0.000000e+00> : vector<16x16xf32>
    %177 = tpu.matmul %176, %163, %cst_87 {dimension_numbers = #tpu.dot_dimension_numbers<[1], [1], [0], [0], [0, 0, 1, 0], [], []>} : vector<16x64xf32>, vector<16x64xf32>, vector<16x16xf32> -> vector<16x16xf32>
    "tpu.trace_stop"() : () -> ()
    %cst_88 = arith.constant 0.000000e+00 : f32
    %178 = vector.broadcast %cst_88 : f32 to vector<16x16xf32>
    %179 = arith.maximumf %175, %178 : vector<16x16xf32>
    %180 = arith.mulf %179, %174 : vector<16x16xf32>
    %cst_89 = arith.constant 0.000000e+00 : f32
    %181 = vector.broadcast %cst_89 : f32 to vector<16x16xf32>
    %182 = arith.maximumf %177, %181 : vector<16x16xf32>
    %183 = arith.mulf %182, %174 : vector<16x16xf32>
    %cst_90 = arith.constant dense<0.000000e+00> : vector<16x256xf32>
    %184 = tpu.matmul %180, %152, %cst_90 {dimension_numbers = #tpu.dot_dimension_numbers<[1], [0], [0], [1], [0, 0, 1, 1], [], []>} : vector<16x16xf32>, vector<16x256xf32>, vector<16x256xf32> -> vector<16x256xf32>
    %185 = arith.mulf %184, %153 : vector<16x256xf32>
    %cst_91 = arith.constant dense<0.000000e+00> : vector<256xf32>
    %186 = vector.multi_reduction <add>, %185, %cst_91 [0] : vector<16x256xf32> to vector<256xf32>
    %187 = vector.shape_cast %186 : vector<256xf32> to vector<1x256xf32>
    %cst_92 = arith.constant dense<0.000000e+00> : vector<16x256xf32>
    %188 = tpu.matmul %183, %152, %cst_92 {dimension_numbers = #tpu.dot_dimension_numbers<[1], [0], [0], [1], [0, 0, 1, 1], [], []>} : vector<16x16xf32>, vector<16x256xf32>, vector<16x256xf32> -> vector<16x256xf32>
    %189 = arith.mulf %188, %153 : vector<16x256xf32>
    %cst_93 = arith.constant dense<0.000000e+00> : vector<256xf32>
    %190 = vector.multi_reduction <add>, %189, %cst_93 [0] : vector<16x256xf32> to vector<256xf32>
    %191 = vector.shape_cast %190 : vector<256xf32> to vector<1x256xf32>
    %cst_94 = arith.constant 0.000000e+00 : f32
    %192 = vector.broadcast %cst_94 : f32 to vector<8x256xf32>
    %193 = vector.extract_strided_slice %151 {offsets = [0, 0], sizes = [1, 256], strides = [1, 1]} : vector<9x256xf32> to vector<1x256xf32>
    %cst_95 = arith.constant 0.000000e+00 : f32
    %194 = vector.broadcast %cst_95 : f32 to vector<1x17xf32>
    %195 = vector.extract_strided_slice %187 {offsets = [0, 0], sizes = [1, 239], strides = [1, 1]} : vector<1x256xf32> to vector<1x239xf32>
    %196 = tpu.concatenate %194, %195 in 1 : vector<1x17xf32>, vector<1x239xf32> -> vector<1x256xf32>
    %197 = arith.mulf %196, %193 : vector<1x256xf32>
    %198 = vector.extract_strided_slice %149 {offsets = [0, 0], sizes = [8, 1], strides = [1, 1]} : vector<8x18xf32> to vector<8x1xf32>
    %199 = vector.broadcast %198 : vector<8x1xf32> to vector<8x256xf32>
    %200 = vector.broadcast %197 : vector<1x256xf32> to vector<8x256xf32>
    %201 = arith.mulf %199, %200 : vector<8x256xf32>
    %202 = arith.addf %192, %201 : vector<8x256xf32>
    %cst_96 = arith.constant 0.000000e+00 : f32
    %203 = vector.broadcast %cst_96 : f32 to vector<1x17xf32>
    %204 = vector.extract_strided_slice %191 {offsets = [0, 0], sizes = [1, 239], strides = [1, 1]} : vector<1x256xf32> to vector<1x239xf32>
    %205 = tpu.concatenate %203, %204 in 1 : vector<1x17xf32>, vector<1x239xf32> -> vector<1x256xf32>
    %206 = arith.mulf %205, %193 : vector<1x256xf32>
    %207 = vector.extract_strided_slice %149 {offsets = [0, 1], sizes = [8, 1], strides = [1, 1]} : vector<8x18xf32> to vector<8x1xf32>
    %208 = vector.broadcast %207 : vector<8x1xf32> to vector<8x256xf32>
    %209 = vector.broadcast %206 : vector<1x256xf32> to vector<8x256xf32>
    %210 = arith.mulf %208, %209 : vector<8x256xf32>
    %211 = arith.addf %202, %210 : vector<8x256xf32>
    %212 = vector.extract_strided_slice %151 {offsets = [1, 0], sizes = [1, 256], strides = [1, 1]} : vector<9x256xf32> to vector<1x256xf32>
    %cst_97 = arith.constant 0.000000e+00 : f32
    %213 = vector.broadcast %cst_97 : f32 to vector<1x16xf32>
    %214 = vector.extract_strided_slice %187 {offsets = [0, 0], sizes = [1, 240], strides = [1, 1]} : vector<1x256xf32> to vector<1x240xf32>
    %215 = tpu.concatenate %213, %214 in 1 : vector<1x16xf32>, vector<1x240xf32> -> vector<1x256xf32>
    %216 = arith.mulf %215, %212 : vector<1x256xf32>
    %217 = vector.extract_strided_slice %149 {offsets = [0, 2], sizes = [8, 1], strides = [1, 1]} : vector<8x18xf32> to vector<8x1xf32>
    %218 = vector.broadcast %217 : vector<8x1xf32> to vector<8x256xf32>
    %219 = vector.broadcast %216 : vector<1x256xf32> to vector<8x256xf32>
    %220 = arith.mulf %218, %219 : vector<8x256xf32>
    %221 = arith.addf %211, %220 : vector<8x256xf32>
    %cst_98 = arith.constant 0.000000e+00 : f32
    %222 = vector.broadcast %cst_98 : f32 to vector<1x16xf32>
    %223 = vector.extract_strided_slice %191 {offsets = [0, 0], sizes = [1, 240], strides = [1, 1]} : vector<1x256xf32> to vector<1x240xf32>
    %224 = tpu.concatenate %222, %223 in 1 : vector<1x16xf32>, vector<1x240xf32> -> vector<1x256xf32>
    %225 = arith.mulf %224, %212 : vector<1x256xf32>
    %226 = vector.extract_strided_slice %149 {offsets = [0, 3], sizes = [8, 1], strides = [1, 1]} : vector<8x18xf32> to vector<8x1xf32>
    %227 = vector.broadcast %226 : vector<8x1xf32> to vector<8x256xf32>
    %228 = vector.broadcast %225 : vector<1x256xf32> to vector<8x256xf32>
    %229 = arith.mulf %227, %228 : vector<8x256xf32>
    %230 = arith.addf %221, %229 : vector<8x256xf32>
    %231 = vector.extract_strided_slice %151 {offsets = [2, 0], sizes = [1, 256], strides = [1, 1]} : vector<9x256xf32> to vector<1x256xf32>
    %cst_99 = arith.constant 0.000000e+00 : f32
    %232 = vector.broadcast %cst_99 : f32 to vector<1x15xf32>
    %233 = vector.extract_strided_slice %187 {offsets = [0, 0], sizes = [1, 241], strides = [1, 1]} : vector<1x256xf32> to vector<1x241xf32>
    %234 = tpu.concatenate %232, %233 in 1 : vector<1x15xf32>, vector<1x241xf32> -> vector<1x256xf32>
    %235 = arith.mulf %234, %231 : vector<1x256xf32>
    %236 = vector.extract_strided_slice %149 {offsets = [0, 4], sizes = [8, 1], strides = [1, 1]} : vector<8x18xf32> to vector<8x1xf32>
    %237 = vector.broadcast %236 : vector<8x1xf32> to vector<8x256xf32>
    %238 = vector.broadcast %235 : vector<1x256xf32> to vector<8x256xf32>
    %239 = arith.mulf %237, %238 : vector<8x256xf32>
    %240 = arith.addf %230, %239 : vector<8x256xf32>
    %cst_100 = arith.constant 0.000000e+00 : f32
    %241 = vector.broadcast %cst_100 : f32 to vector<1x15xf32>
    %242 = vector.extract_strided_slice %191 {offsets = [0, 0], sizes = [1, 241], strides = [1, 1]} : vector<1x256xf32> to vector<1x241xf32>
    %243 = tpu.concatenate %241, %242 in 1 : vector<1x15xf32>, vector<1x241xf32> -> vector<1x256xf32>
    %244 = arith.mulf %243, %231 : vector<1x256xf32>
    %245 = vector.extract_strided_slice %149 {offsets = [0, 5], sizes = [8, 1], strides = [1, 1]} : vector<8x18xf32> to vector<8x1xf32>
    %246 = vector.broadcast %245 : vector<8x1xf32> to vector<8x256xf32>
    %247 = vector.broadcast %244 : vector<1x256xf32> to vector<8x256xf32>
    %248 = arith.mulf %246, %247 : vector<8x256xf32>
    %249 = arith.addf %240, %248 : vector<8x256xf32>
    %250 = vector.extract_strided_slice %151 {offsets = [3, 0], sizes = [1, 256], strides = [1, 1]} : vector<9x256xf32> to vector<1x256xf32>
    %cst_101 = arith.constant 0.000000e+00 : f32
    %251 = vector.broadcast %cst_101 : f32 to vector<1x1xf32>
    %252 = vector.extract_strided_slice %187 {offsets = [0, 0], sizes = [1, 255], strides = [1, 1]} : vector<1x256xf32> to vector<1x255xf32>
    %253 = tpu.concatenate %251, %252 in 1 : vector<1x1xf32>, vector<1x255xf32> -> vector<1x256xf32>
    %254 = arith.mulf %253, %250 : vector<1x256xf32>
    %255 = vector.extract_strided_slice %149 {offsets = [0, 6], sizes = [8, 1], strides = [1, 1]} : vector<8x18xf32> to vector<8x1xf32>
    %256 = vector.broadcast %255 : vector<8x1xf32> to vector<8x256xf32>
    %257 = vector.broadcast %254 : vector<1x256xf32> to vector<8x256xf32>
    %258 = arith.mulf %256, %257 : vector<8x256xf32>
    %259 = arith.addf %249, %258 : vector<8x256xf32>
    %cst_102 = arith.constant 0.000000e+00 : f32
    %260 = vector.broadcast %cst_102 : f32 to vector<1x1xf32>
    %261 = vector.extract_strided_slice %191 {offsets = [0, 0], sizes = [1, 255], strides = [1, 1]} : vector<1x256xf32> to vector<1x255xf32>
    %262 = tpu.concatenate %260, %261 in 1 : vector<1x1xf32>, vector<1x255xf32> -> vector<1x256xf32>
    %263 = arith.mulf %262, %250 : vector<1x256xf32>
    %264 = vector.extract_strided_slice %149 {offsets = [0, 7], sizes = [8, 1], strides = [1, 1]} : vector<8x18xf32> to vector<8x1xf32>
    %265 = vector.broadcast %264 : vector<8x1xf32> to vector<8x256xf32>
    %266 = vector.broadcast %263 : vector<1x256xf32> to vector<8x256xf32>
    %267 = arith.mulf %265, %266 : vector<8x256xf32>
    %268 = arith.addf %259, %267 : vector<8x256xf32>
    %269 = vector.extract_strided_slice %151 {offsets = [4, 0], sizes = [1, 256], strides = [1, 1]} : vector<9x256xf32> to vector<1x256xf32>
    %270 = arith.mulf %187, %269 : vector<1x256xf32>
    %271 = vector.extract_strided_slice %149 {offsets = [0, 8], sizes = [8, 1], strides = [1, 1]} : vector<8x18xf32> to vector<8x1xf32>
    %272 = vector.broadcast %271 : vector<8x1xf32> to vector<8x256xf32>
    %273 = vector.broadcast %270 : vector<1x256xf32> to vector<8x256xf32>
    %274 = arith.mulf %272, %273 : vector<8x256xf32>
    %275 = arith.addf %268, %274 : vector<8x256xf32>
    %276 = arith.mulf %191, %269 : vector<1x256xf32>
    %277 = vector.extract_strided_slice %149 {offsets = [0, 9], sizes = [8, 1], strides = [1, 1]} : vector<8x18xf32> to vector<8x1xf32>
    %278 = vector.broadcast %277 : vector<8x1xf32> to vector<8x256xf32>
    %279 = vector.broadcast %276 : vector<1x256xf32> to vector<8x256xf32>
    %280 = arith.mulf %278, %279 : vector<8x256xf32>
    %281 = arith.addf %275, %280 : vector<8x256xf32>
    %282 = vector.extract_strided_slice %151 {offsets = [5, 0], sizes = [1, 256], strides = [1, 1]} : vector<9x256xf32> to vector<1x256xf32>
    %283 = vector.extract_strided_slice %187 {offsets = [0, 1], sizes = [1, 255], strides = [1, 1]} : vector<1x256xf32> to vector<1x255xf32>
    %cst_103 = arith.constant 0.000000e+00 : f32
    %284 = vector.broadcast %cst_103 : f32 to vector<1x1xf32>
    %285 = tpu.concatenate %283, %284 in 1 : vector<1x255xf32>, vector<1x1xf32> -> vector<1x256xf32>
    %286 = arith.mulf %285, %282 : vector<1x256xf32>
    %287 = vector.extract_strided_slice %149 {offsets = [0, 10], sizes = [8, 1], strides = [1, 1]} : vector<8x18xf32> to vector<8x1xf32>
    %288 = vector.broadcast %287 : vector<8x1xf32> to vector<8x256xf32>
    %289 = vector.broadcast %286 : vector<1x256xf32> to vector<8x256xf32>
    %290 = arith.mulf %288, %289 : vector<8x256xf32>
    %291 = arith.addf %281, %290 : vector<8x256xf32>
    %292 = vector.extract_strided_slice %191 {offsets = [0, 1], sizes = [1, 255], strides = [1, 1]} : vector<1x256xf32> to vector<1x255xf32>
    %cst_104 = arith.constant 0.000000e+00 : f32
    %293 = vector.broadcast %cst_104 : f32 to vector<1x1xf32>
    %294 = tpu.concatenate %292, %293 in 1 : vector<1x255xf32>, vector<1x1xf32> -> vector<1x256xf32>
    %295 = arith.mulf %294, %282 : vector<1x256xf32>
    %296 = vector.extract_strided_slice %149 {offsets = [0, 11], sizes = [8, 1], strides = [1, 1]} : vector<8x18xf32> to vector<8x1xf32>
    %297 = vector.broadcast %296 : vector<8x1xf32> to vector<8x256xf32>
    %298 = vector.broadcast %295 : vector<1x256xf32> to vector<8x256xf32>
    %299 = arith.mulf %297, %298 : vector<8x256xf32>
    %300 = arith.addf %291, %299 : vector<8x256xf32>
    %301 = vector.extract_strided_slice %151 {offsets = [6, 0], sizes = [1, 256], strides = [1, 1]} : vector<9x256xf32> to vector<1x256xf32>
    %302 = vector.extract_strided_slice %187 {offsets = [0, 15], sizes = [1, 241], strides = [1, 1]} : vector<1x256xf32> to vector<1x241xf32>
    %cst_105 = arith.constant 0.000000e+00 : f32
    %303 = vector.broadcast %cst_105 : f32 to vector<1x15xf32>
    %304 = tpu.concatenate %302, %303 in 1 : vector<1x241xf32>, vector<1x15xf32> -> vector<1x256xf32>
    %305 = arith.mulf %304, %301 : vector<1x256xf32>
    %306 = vector.extract_strided_slice %149 {offsets = [0, 12], sizes = [8, 1], strides = [1, 1]} : vector<8x18xf32> to vector<8x1xf32>
    %307 = vector.broadcast %306 : vector<8x1xf32> to vector<8x256xf32>
    %308 = vector.broadcast %305 : vector<1x256xf32> to vector<8x256xf32>
    %309 = arith.mulf %307, %308 : vector<8x256xf32>
    %310 = arith.addf %300, %309 : vector<8x256xf32>
    %311 = vector.extract_strided_slice %191 {offsets = [0, 15], sizes = [1, 241], strides = [1, 1]} : vector<1x256xf32> to vector<1x241xf32>
    %cst_106 = arith.constant 0.000000e+00 : f32
    %312 = vector.broadcast %cst_106 : f32 to vector<1x15xf32>
    %313 = tpu.concatenate %311, %312 in 1 : vector<1x241xf32>, vector<1x15xf32> -> vector<1x256xf32>
    %314 = arith.mulf %313, %301 : vector<1x256xf32>
    %315 = vector.extract_strided_slice %149 {offsets = [0, 13], sizes = [8, 1], strides = [1, 1]} : vector<8x18xf32> to vector<8x1xf32>
    %316 = vector.broadcast %315 : vector<8x1xf32> to vector<8x256xf32>
    %317 = vector.broadcast %314 : vector<1x256xf32> to vector<8x256xf32>
    %318 = arith.mulf %316, %317 : vector<8x256xf32>
    %319 = arith.addf %310, %318 : vector<8x256xf32>
    %320 = vector.extract_strided_slice %151 {offsets = [7, 0], sizes = [1, 256], strides = [1, 1]} : vector<9x256xf32> to vector<1x256xf32>
    %321 = vector.extract_strided_slice %187 {offsets = [0, 16], sizes = [1, 240], strides = [1, 1]} : vector<1x256xf32> to vector<1x240xf32>
    %cst_107 = arith.constant 0.000000e+00 : f32
    %322 = vector.broadcast %cst_107 : f32 to vector<1x16xf32>
    %323 = tpu.concatenate %321, %322 in 1 : vector<1x240xf32>, vector<1x16xf32> -> vector<1x256xf32>
    %324 = arith.mulf %323, %320 : vector<1x256xf32>
    %325 = vector.extract_strided_slice %149 {offsets = [0, 14], sizes = [8, 1], strides = [1, 1]} : vector<8x18xf32> to vector<8x1xf32>
    %326 = vector.broadcast %325 : vector<8x1xf32> to vector<8x256xf32>
    %327 = vector.broadcast %324 : vector<1x256xf32> to vector<8x256xf32>
    %328 = arith.mulf %326, %327 : vector<8x256xf32>
    %329 = arith.addf %319, %328 : vector<8x256xf32>
    %330 = vector.extract_strided_slice %191 {offsets = [0, 16], sizes = [1, 240], strides = [1, 1]} : vector<1x256xf32> to vector<1x240xf32>
    %cst_108 = arith.constant 0.000000e+00 : f32
    %331 = vector.broadcast %cst_108 : f32 to vector<1x16xf32>
    %332 = tpu.concatenate %330, %331 in 1 : vector<1x240xf32>, vector<1x16xf32> -> vector<1x256xf32>
    %333 = arith.mulf %332, %320 : vector<1x256xf32>
    %334 = vector.extract_strided_slice %149 {offsets = [0, 15], sizes = [8, 1], strides = [1, 1]} : vector<8x18xf32> to vector<8x1xf32>
    %335 = vector.broadcast %334 : vector<8x1xf32> to vector<8x256xf32>
    %336 = vector.broadcast %333 : vector<1x256xf32> to vector<8x256xf32>
    %337 = arith.mulf %335, %336 : vector<8x256xf32>
    %338 = arith.addf %329, %337 : vector<8x256xf32>
    %339 = vector.extract_strided_slice %151 {offsets = [8, 0], sizes = [1, 256], strides = [1, 1]} : vector<9x256xf32> to vector<1x256xf32>
    %340 = vector.extract_strided_slice %187 {offsets = [0, 17], sizes = [1, 239], strides = [1, 1]} : vector<1x256xf32> to vector<1x239xf32>
    %cst_109 = arith.constant 0.000000e+00 : f32
    %341 = vector.broadcast %cst_109 : f32 to vector<1x17xf32>
    %342 = tpu.concatenate %340, %341 in 1 : vector<1x239xf32>, vector<1x17xf32> -> vector<1x256xf32>
    %343 = arith.mulf %342, %339 : vector<1x256xf32>
    %344 = vector.extract_strided_slice %149 {offsets = [0, 16], sizes = [8, 1], strides = [1, 1]} : vector<8x18xf32> to vector<8x1xf32>
    %345 = vector.broadcast %344 : vector<8x1xf32> to vector<8x256xf32>
    %346 = vector.broadcast %343 : vector<1x256xf32> to vector<8x256xf32>
    %347 = arith.mulf %345, %346 : vector<8x256xf32>
    %348 = arith.addf %338, %347 : vector<8x256xf32>
    %349 = vector.extract_strided_slice %191 {offsets = [0, 17], sizes = [1, 239], strides = [1, 1]} : vector<1x256xf32> to vector<1x239xf32>
    %cst_110 = arith.constant 0.000000e+00 : f32
    %350 = vector.broadcast %cst_110 : f32 to vector<1x17xf32>
    %351 = tpu.concatenate %349, %350 in 1 : vector<1x239xf32>, vector<1x17xf32> -> vector<1x256xf32>
    %352 = arith.mulf %351, %339 : vector<1x256xf32>
    %353 = vector.extract_strided_slice %149 {offsets = [0, 17], sizes = [8, 1], strides = [1, 1]} : vector<8x18xf32> to vector<8x1xf32>
    %354 = vector.broadcast %353 : vector<8x1xf32> to vector<8x256xf32>
    %355 = vector.broadcast %352 : vector<1x256xf32> to vector<8x256xf32>
    %356 = arith.mulf %354, %355 : vector<8x256xf32>
    %357 = arith.addf %348, %356 : vector<8x256xf32>
    %358 = vector.broadcast %150 : vector<8x1xf32> to vector<8x256xf32>
    %359 = arith.addf %357, %358 : vector<8x256xf32>
    %cst_111 = arith.constant 0.000000e+00 : f32
    %360 = vector.broadcast %cst_111 : f32 to vector<8x256xf32>
    %361 = arith.maximumf %359, %360 : vector<8x256xf32>
    %362 = vector.extract_strided_slice %361 {offsets = [0, 1], sizes = [8, 255], strides = [1, 1]} : vector<8x256xf32> to vector<8x255xf32>
    %cst_112 = arith.constant 0.000000e+00 : f32
    %363 = vector.broadcast %cst_112 : f32 to vector<8x1xf32>
    %364 = tpu.concatenate %362, %363 in 1 : vector<8x255xf32>, vector<8x1xf32> -> vector<8x256xf32>
    %365 = vector.extract_strided_slice %361 {offsets = [0, 2], sizes = [8, 254], strides = [1, 1]} : vector<8x256xf32> to vector<8x254xf32>
    %cst_113 = arith.constant 0.000000e+00 : f32
    %366 = vector.broadcast %cst_113 : f32 to vector<8x2xf32>
    %367 = tpu.concatenate %365, %366 in 1 : vector<8x254xf32>, vector<8x2xf32> -> vector<8x256xf32>
    %368 = arith.maximumf %364, %367 : vector<8x256xf32>
    %369 = arith.maximumf %361, %368 : vector<8x256xf32>
    %370 = vector.extract_strided_slice %369 {offsets = [0, 16], sizes = [8, 240], strides = [1, 1]} : vector<8x256xf32> to vector<8x240xf32>
    %cst_114 = arith.constant 0.000000e+00 : f32
    %371 = vector.broadcast %cst_114 : f32 to vector<8x16xf32>
    %372 = tpu.concatenate %370, %371 in 1 : vector<8x240xf32>, vector<8x16xf32> -> vector<8x256xf32>
    %373 = vector.extract_strided_slice %369 {offsets = [0, 32], sizes = [8, 224], strides = [1, 1]} : vector<8x256xf32> to vector<8x224xf32>
    %cst_115 = arith.constant 0.000000e+00 : f32
    %374 = vector.broadcast %cst_115 : f32 to vector<8x32xf32>
    %375 = tpu.concatenate %373, %374 in 1 : vector<8x224xf32>, vector<8x32xf32> -> vector<8x256xf32>
    %376 = arith.maximumf %372, %375 : vector<8x256xf32>
    %377 = arith.maximumf %369, %376 : vector<8x256xf32>
    %cst_116 = arith.constant dense<0.000000e+00> : vector<8x25xf32>
    %378 = tpu.matmul %377, %154, %cst_116 {dimension_numbers = #tpu.dot_dimension_numbers<[1], [0], [0], [1], [0, 0, 1, 1], [], []>} : vector<8x256xf32>, vector<256x25xf32>, vector<8x25xf32> -> vector<8x25xf32>
    %cst_117 = arith.constant dense<0.000000e+00> : vector<8x200xf32>
    %379 = tpu.matmul %378, %155, %cst_117 {dimension_numbers = #tpu.dot_dimension_numbers<[1], [0], [0], [1], [0, 0, 1, 1], [], []>} : vector<8x25xf32>, vector<25x200xf32>, vector<8x200xf32> -> vector<8x200xf32>
    %380 = arith.mulf %379, %156 : vector<8x200xf32>
    %cst_118 = arith.constant dense<0.000000e+00> : vector<200xf32>
    %381 = vector.multi_reduction <add>, %380, %cst_118 [0] : vector<8x200xf32> to vector<200xf32>
    %382 = vector.shape_cast %381 : vector<200xf32> to vector<1x200xf32>
    %cst_119 = arith.constant dense<0.000000e+00> : vector<1x32xf32>
    %383 = tpu.matmul %382, %157, %cst_119 {dimension_numbers = #tpu.dot_dimension_numbers<[1], [0], [0], [1], [0, 0, 1, 1], [], []>} : vector<1x200xf32>, vector<200x32xf32>, vector<1x32xf32> -> vector<1x32xf32>
    %384 = arith.addf %383, %158 : vector<1x32xf32>
    %cst_120 = arith.constant 0.000000e+00 : f32
    %385 = vector.broadcast %cst_120 : f32 to vector<1x32xf32>
    %386 = arith.maximumf %384, %385 : vector<1x32xf32>
    %cst_121 = arith.constant dense<0.000000e+00> : vector<1x1xf32>
    %387 = tpu.matmul %386, %159, %cst_121 {dimension_numbers = #tpu.dot_dimension_numbers<[1], [0], [0], [1], [0, 0, 1, 1], [], []>} : vector<1x32xf32>, vector<32x1xf32>, vector<1x1xf32> -> vector<1x1xf32>
    %388 = arith.addf %387, %160 : vector<1x1xf32>
    %389 = tpu.concatenate %78, %115 in 1 : vector<32x32xf32>, vector<32x32xf32> -> vector<32x64xf32>
    %390 = vector.extract_strided_slice %389 {offsets = [0, 0], sizes = [16, 64], strides = [1, 1]} : vector<32x64xf32> to vector<16x64xf32>
    %391 = vector.extract_strided_slice %389 {offsets = [16, 0], sizes = [16, 64], strides = [1, 1]} : vector<32x64xf32> to vector<16x64xf32>
    %c1_122 = arith.constant 1 : index
    %c0_123 = arith.constant 0 : index
    %c0_124 = arith.constant 0 : index
    %392 = vector.load %arg0[%c1_122, %c0_123, %c0_124] : memref<2x16x32xf32, #tpu.memory_space<vmem>>, vector<1x16x32xf32>
    %393 = vector.shape_cast %392 : vector<1x16x32xf32> to vector<16x32xf32>
    %c1_125 = arith.constant 1 : index
    %c0_126 = arith.constant 0 : index
    %c0_127 = arith.constant 0 : index
    %394 = vector.load %arg1[%c1_125, %c0_126, %c0_127] : memref<2x16x32xf32, #tpu.memory_space<vmem>>, vector<1x16x32xf32>
    %395 = vector.shape_cast %394 : vector<1x16x32xf32> to vector<16x32xf32>
    %c1_128 = arith.constant 1 : index
    %c0_129 = arith.constant 0 : index
    %c0_130 = arith.constant 0 : index
    %396 = vector.load %arg2[%c1_128, %c0_129, %c0_130] : memref<2x16x1xf32, #tpu.memory_space<vmem>>, vector<1x16x1xf32>
    %397 = vector.shape_cast %396 : vector<1x16x1xf32> to vector<16x1xf32>
    %c1_131 = arith.constant 1 : index
    %c0_132 = arith.constant 0 : index
    %c0_133 = arith.constant 0 : index
    %398 = vector.load %arg3[%c1_131, %c0_132, %c0_133] : memref<2x1x16xf32, #tpu.memory_space<vmem>>, vector<1x1x16xf32>
    %399 = vector.shape_cast %398 : vector<1x1x16xf32> to vector<1x16xf32>
    %400 = vector.broadcast %397 : vector<16x1xf32> to vector<16x16xf32>
    %401 = vector.broadcast %399 : vector<1x16xf32> to vector<16x16xf32>
    %402 = arith.mulf %400, %401 : vector<16x16xf32>
    "tpu.trace_start"() <{level = 10 : i32, message = "me,ne->mn"}> : () -> ()
    %cst_134 = arith.constant dense<0.000000e+00> : vector<16x16xf32>
    %403 = tpu.matmul %393, %395, %cst_134 {dimension_numbers = #tpu.dot_dimension_numbers<[1], [1], [0], [0], [0, 0, 1, 0], [], []>} : vector<16x32xf32>, vector<16x32xf32>, vector<16x16xf32> -> vector<16x16xf32>
    "tpu.trace_stop"() : () -> ()
    %cst_135 = arith.constant dense<0.000000e+00> : vector<16x64xf32>
    %404 = tpu.matmul %390, %148, %cst_135 {dimension_numbers = #tpu.dot_dimension_numbers<[1], [0], [0], [1], [0, 0, 1, 1], [], []>} : vector<16x64xf32>, vector<64x64xf32>, vector<16x64xf32> -> vector<16x64xf32>
    "tpu.trace_start"() <{level = 10 : i32, message = "mf,nf->mn"}> : () -> ()
    %cst_136 = arith.constant dense<0.000000e+00> : vector<16x16xf32>
    %405 = tpu.matmul %404, %391, %cst_136 {dimension_numbers = #tpu.dot_dimension_numbers<[1], [1], [0], [0], [0, 0, 1, 0], [], []>} : vector<16x64xf32>, vector<16x64xf32>, vector<16x16xf32> -> vector<16x16xf32>
    "tpu.trace_stop"() : () -> ()
    %cst_137 = arith.constant 0.000000e+00 : f32
    %406 = vector.broadcast %cst_137 : f32 to vector<16x16xf32>
    %407 = arith.maximumf %403, %406 : vector<16x16xf32>
    %408 = arith.mulf %407, %402 : vector<16x16xf32>
    %cst_138 = arith.constant 0.000000e+00 : f32
    %409 = vector.broadcast %cst_138 : f32 to vector<16x16xf32>
    %410 = arith.maximumf %405, %409 : vector<16x16xf32>
    %411 = arith.mulf %410, %402 : vector<16x16xf32>
    %cst_139 = arith.constant dense<0.000000e+00> : vector<16x256xf32>
    %412 = tpu.matmul %408, %152, %cst_139 {dimension_numbers = #tpu.dot_dimension_numbers<[1], [0], [0], [1], [0, 0, 1, 1], [], []>} : vector<16x16xf32>, vector<16x256xf32>, vector<16x256xf32> -> vector<16x256xf32>
    %413 = arith.mulf %412, %153 : vector<16x256xf32>
    %cst_140 = arith.constant dense<0.000000e+00> : vector<256xf32>
    %414 = vector.multi_reduction <add>, %413, %cst_140 [0] : vector<16x256xf32> to vector<256xf32>
    %415 = vector.shape_cast %414 : vector<256xf32> to vector<1x256xf32>
    %cst_141 = arith.constant dense<0.000000e+00> : vector<16x256xf32>
    %416 = tpu.matmul %411, %152, %cst_141 {dimension_numbers = #tpu.dot_dimension_numbers<[1], [0], [0], [1], [0, 0, 1, 1], [], []>} : vector<16x16xf32>, vector<16x256xf32>, vector<16x256xf32> -> vector<16x256xf32>
    %417 = arith.mulf %416, %153 : vector<16x256xf32>
    %cst_142 = arith.constant dense<0.000000e+00> : vector<256xf32>
    %418 = vector.multi_reduction <add>, %417, %cst_142 [0] : vector<16x256xf32> to vector<256xf32>
    %419 = vector.shape_cast %418 : vector<256xf32> to vector<1x256xf32>
    %cst_143 = arith.constant 0.000000e+00 : f32
    %420 = vector.broadcast %cst_143 : f32 to vector<8x256xf32>
    %421 = vector.extract_strided_slice %151 {offsets = [0, 0], sizes = [1, 256], strides = [1, 1]} : vector<9x256xf32> to vector<1x256xf32>
    %cst_144 = arith.constant 0.000000e+00 : f32
    %422 = vector.broadcast %cst_144 : f32 to vector<1x17xf32>
    %423 = vector.extract_strided_slice %415 {offsets = [0, 0], sizes = [1, 239], strides = [1, 1]} : vector<1x256xf32> to vector<1x239xf32>
    %424 = tpu.concatenate %422, %423 in 1 : vector<1x17xf32>, vector<1x239xf32> -> vector<1x256xf32>
    %425 = arith.mulf %424, %421 : vector<1x256xf32>
    %426 = vector.extract_strided_slice %149 {offsets = [0, 0], sizes = [8, 1], strides = [1, 1]} : vector<8x18xf32> to vector<8x1xf32>
    %427 = vector.broadcast %426 : vector<8x1xf32> to vector<8x256xf32>
    %428 = vector.broadcast %425 : vector<1x256xf32> to vector<8x256xf32>
    %429 = arith.mulf %427, %428 : vector<8x256xf32>
    %430 = arith.addf %420, %429 : vector<8x256xf32>
    %cst_145 = arith.constant 0.000000e+00 : f32
    %431 = vector.broadcast %cst_145 : f32 to vector<1x17xf32>
    %432 = vector.extract_strided_slice %419 {offsets = [0, 0], sizes = [1, 239], strides = [1, 1]} : vector<1x256xf32> to vector<1x239xf32>
    %433 = tpu.concatenate %431, %432 in 1 : vector<1x17xf32>, vector<1x239xf32> -> vector<1x256xf32>
    %434 = arith.mulf %433, %421 : vector<1x256xf32>
    %435 = vector.extract_strided_slice %149 {offsets = [0, 1], sizes = [8, 1], strides = [1, 1]} : vector<8x18xf32> to vector<8x1xf32>
    %436 = vector.broadcast %435 : vector<8x1xf32> to vector<8x256xf32>
    %437 = vector.broadcast %434 : vector<1x256xf32> to vector<8x256xf32>
    %438 = arith.mulf %436, %437 : vector<8x256xf32>
    %439 = arith.addf %430, %438 : vector<8x256xf32>
    %440 = vector.extract_strided_slice %151 {offsets = [1, 0], sizes = [1, 256], strides = [1, 1]} : vector<9x256xf32> to vector<1x256xf32>
    %cst_146 = arith.constant 0.000000e+00 : f32
    %441 = vector.broadcast %cst_146 : f32 to vector<1x16xf32>
    %442 = vector.extract_strided_slice %415 {offsets = [0, 0], sizes = [1, 240], strides = [1, 1]} : vector<1x256xf32> to vector<1x240xf32>
    %443 = tpu.concatenate %441, %442 in 1 : vector<1x16xf32>, vector<1x240xf32> -> vector<1x256xf32>
    %444 = arith.mulf %443, %440 : vector<1x256xf32>
    %445 = vector.extract_strided_slice %149 {offsets = [0, 2], sizes = [8, 1], strides = [1, 1]} : vector<8x18xf32> to vector<8x1xf32>
    %446 = vector.broadcast %445 : vector<8x1xf32> to vector<8x256xf32>
    %447 = vector.broadcast %444 : vector<1x256xf32> to vector<8x256xf32>
    %448 = arith.mulf %446, %447 : vector<8x256xf32>
    %449 = arith.addf %439, %448 : vector<8x256xf32>
    %cst_147 = arith.constant 0.000000e+00 : f32
    %450 = vector.broadcast %cst_147 : f32 to vector<1x16xf32>
    %451 = vector.extract_strided_slice %419 {offsets = [0, 0], sizes = [1, 240], strides = [1, 1]} : vector<1x256xf32> to vector<1x240xf32>
    %452 = tpu.concatenate %450, %451 in 1 : vector<1x16xf32>, vector<1x240xf32> -> vector<1x256xf32>
    %453 = arith.mulf %452, %440 : vector<1x256xf32>
    %454 = vector.extract_strided_slice %149 {offsets = [0, 3], sizes = [8, 1], strides = [1, 1]} : vector<8x18xf32> to vector<8x1xf32>
    %455 = vector.broadcast %454 : vector<8x1xf32> to vector<8x256xf32>
    %456 = vector.broadcast %453 : vector<1x256xf32> to vector<8x256xf32>
    %457 = arith.mulf %455, %456 : vector<8x256xf32>
    %458 = arith.addf %449, %457 : vector<8x256xf32>
    %459 = vector.extract_strided_slice %151 {offsets = [2, 0], sizes = [1, 256], strides = [1, 1]} : vector<9x256xf32> to vector<1x256xf32>
    %cst_148 = arith.constant 0.000000e+00 : f32
    %460 = vector.broadcast %cst_148 : f32 to vector<1x15xf32>
    %461 = vector.extract_strided_slice %415 {offsets = [0, 0], sizes = [1, 241], strides = [1, 1]} : vector<1x256xf32> to vector<1x241xf32>
    %462 = tpu.concatenate %460, %461 in 1 : vector<1x15xf32>, vector<1x241xf32> -> vector<1x256xf32>
    %463 = arith.mulf %462, %459 : vector<1x256xf32>
    %464 = vector.extract_strided_slice %149 {offsets = [0, 4], sizes = [8, 1], strides = [1, 1]} : vector<8x18xf32> to vector<8x1xf32>
    %465 = vector.broadcast %464 : vector<8x1xf32> to vector<8x256xf32>
    %466 = vector.broadcast %463 : vector<1x256xf32> to vector<8x256xf32>
    %467 = arith.mulf %465, %466 : vector<8x256xf32>
    %468 = arith.addf %458, %467 : vector<8x256xf32>
    %cst_149 = arith.constant 0.000000e+00 : f32
    %469 = vector.broadcast %cst_149 : f32 to vector<1x15xf32>
    %470 = vector.extract_strided_slice %419 {offsets = [0, 0], sizes = [1, 241], strides = [1, 1]} : vector<1x256xf32> to vector<1x241xf32>
    %471 = tpu.concatenate %469, %470 in 1 : vector<1x15xf32>, vector<1x241xf32> -> vector<1x256xf32>
    %472 = arith.mulf %471, %459 : vector<1x256xf32>
    %473 = vector.extract_strided_slice %149 {offsets = [0, 5], sizes = [8, 1], strides = [1, 1]} : vector<8x18xf32> to vector<8x1xf32>
    %474 = vector.broadcast %473 : vector<8x1xf32> to vector<8x256xf32>
    %475 = vector.broadcast %472 : vector<1x256xf32> to vector<8x256xf32>
    %476 = arith.mulf %474, %475 : vector<8x256xf32>
    %477 = arith.addf %468, %476 : vector<8x256xf32>
    %478 = vector.extract_strided_slice %151 {offsets = [3, 0], sizes = [1, 256], strides = [1, 1]} : vector<9x256xf32> to vector<1x256xf32>
    %cst_150 = arith.constant 0.000000e+00 : f32
    %479 = vector.broadcast %cst_150 : f32 to vector<1x1xf32>
    %480 = vector.extract_strided_slice %415 {offsets = [0, 0], sizes = [1, 255], strides = [1, 1]} : vector<1x256xf32> to vector<1x255xf32>
    %481 = tpu.concatenate %479, %480 in 1 : vector<1x1xf32>, vector<1x255xf32> -> vector<1x256xf32>
    %482 = arith.mulf %481, %478 : vector<1x256xf32>
    %483 = vector.extract_strided_slice %149 {offsets = [0, 6], sizes = [8, 1], strides = [1, 1]} : vector<8x18xf32> to vector<8x1xf32>
    %484 = vector.broadcast %483 : vector<8x1xf32> to vector<8x256xf32>
    %485 = vector.broadcast %482 : vector<1x256xf32> to vector<8x256xf32>
    %486 = arith.mulf %484, %485 : vector<8x256xf32>
    %487 = arith.addf %477, %486 : vector<8x256xf32>
    %cst_151 = arith.constant 0.000000e+00 : f32
    %488 = vector.broadcast %cst_151 : f32 to vector<1x1xf32>
    %489 = vector.extract_strided_slice %419 {offsets = [0, 0], sizes = [1, 255], strides = [1, 1]} : vector<1x256xf32> to vector<1x255xf32>
    %490 = tpu.concatenate %488, %489 in 1 : vector<1x1xf32>, vector<1x255xf32> -> vector<1x256xf32>
    %491 = arith.mulf %490, %478 : vector<1x256xf32>
    %492 = vector.extract_strided_slice %149 {offsets = [0, 7], sizes = [8, 1], strides = [1, 1]} : vector<8x18xf32> to vector<8x1xf32>
    %493 = vector.broadcast %492 : vector<8x1xf32> to vector<8x256xf32>
    %494 = vector.broadcast %491 : vector<1x256xf32> to vector<8x256xf32>
    %495 = arith.mulf %493, %494 : vector<8x256xf32>
    %496 = arith.addf %487, %495 : vector<8x256xf32>
    %497 = vector.extract_strided_slice %151 {offsets = [4, 0], sizes = [1, 256], strides = [1, 1]} : vector<9x256xf32> to vector<1x256xf32>
    %498 = arith.mulf %415, %497 : vector<1x256xf32>
    %499 = vector.extract_strided_slice %149 {offsets = [0, 8], sizes = [8, 1], strides = [1, 1]} : vector<8x18xf32> to vector<8x1xf32>
    %500 = vector.broadcast %499 : vector<8x1xf32> to vector<8x256xf32>
    %501 = vector.broadcast %498 : vector<1x256xf32> to vector<8x256xf32>
    %502 = arith.mulf %500, %501 : vector<8x256xf32>
    %503 = arith.addf %496, %502 : vector<8x256xf32>
    %504 = arith.mulf %419, %497 : vector<1x256xf32>
    %505 = vector.extract_strided_slice %149 {offsets = [0, 9], sizes = [8, 1], strides = [1, 1]} : vector<8x18xf32> to vector<8x1xf32>
    %506 = vector.broadcast %505 : vector<8x1xf32> to vector<8x256xf32>
    %507 = vector.broadcast %504 : vector<1x256xf32> to vector<8x256xf32>
    %508 = arith.mulf %506, %507 : vector<8x256xf32>
    %509 = arith.addf %503, %508 : vector<8x256xf32>
    %510 = vector.extract_strided_slice %151 {offsets = [5, 0], sizes = [1, 256], strides = [1, 1]} : vector<9x256xf32> to vector<1x256xf32>
    %511 = vector.extract_strided_slice %415 {offsets = [0, 1], sizes = [1, 255], strides = [1, 1]} : vector<1x256xf32> to vector<1x255xf32>
    %cst_152 = arith.constant 0.000000e+00 : f32
    %512 = vector.broadcast %cst_152 : f32 to vector<1x1xf32>
    %513 = tpu.concatenate %511, %512 in 1 : vector<1x255xf32>, vector<1x1xf32> -> vector<1x256xf32>
    %514 = arith.mulf %513, %510 : vector<1x256xf32>
    %515 = vector.extract_strided_slice %149 {offsets = [0, 10], sizes = [8, 1], strides = [1, 1]} : vector<8x18xf32> to vector<8x1xf32>
    %516 = vector.broadcast %515 : vector<8x1xf32> to vector<8x256xf32>
    %517 = vector.broadcast %514 : vector<1x256xf32> to vector<8x256xf32>
    %518 = arith.mulf %516, %517 : vector<8x256xf32>
    %519 = arith.addf %509, %518 : vector<8x256xf32>
    %520 = vector.extract_strided_slice %419 {offsets = [0, 1], sizes = [1, 255], strides = [1, 1]} : vector<1x256xf32> to vector<1x255xf32>
    %cst_153 = arith.constant 0.000000e+00 : f32
    %521 = vector.broadcast %cst_153 : f32 to vector<1x1xf32>
    %522 = tpu.concatenate %520, %521 in 1 : vector<1x255xf32>, vector<1x1xf32> -> vector<1x256xf32>
    %523 = arith.mulf %522, %510 : vector<1x256xf32>
    %524 = vector.extract_strided_slice %149 {offsets = [0, 11], sizes = [8, 1], strides = [1, 1]} : vector<8x18xf32> to vector<8x1xf32>
    %525 = vector.broadcast %524 : vector<8x1xf32> to vector<8x256xf32>
    %526 = vector.broadcast %523 : vector<1x256xf32> to vector<8x256xf32>
    %527 = arith.mulf %525, %526 : vector<8x256xf32>
    %528 = arith.addf %519, %527 : vector<8x256xf32>
    %529 = vector.extract_strided_slice %151 {offsets = [6, 0], sizes = [1, 256], strides = [1, 1]} : vector<9x256xf32> to vector<1x256xf32>
    %530 = vector.extract_strided_slice %415 {offsets = [0, 15], sizes = [1, 241], strides = [1, 1]} : vector<1x256xf32> to vector<1x241xf32>
    %cst_154 = arith.constant 0.000000e+00 : f32
    %531 = vector.broadcast %cst_154 : f32 to vector<1x15xf32>
    %532 = tpu.concatenate %530, %531 in 1 : vector<1x241xf32>, vector<1x15xf32> -> vector<1x256xf32>
    %533 = arith.mulf %532, %529 : vector<1x256xf32>
    %534 = vector.extract_strided_slice %149 {offsets = [0, 12], sizes = [8, 1], strides = [1, 1]} : vector<8x18xf32> to vector<8x1xf32>
    %535 = vector.broadcast %534 : vector<8x1xf32> to vector<8x256xf32>
    %536 = vector.broadcast %533 : vector<1x256xf32> to vector<8x256xf32>
    %537 = arith.mulf %535, %536 : vector<8x256xf32>
    %538 = arith.addf %528, %537 : vector<8x256xf32>
    %539 = vector.extract_strided_slice %419 {offsets = [0, 15], sizes = [1, 241], strides = [1, 1]} : vector<1x256xf32> to vector<1x241xf32>
    %cst_155 = arith.constant 0.000000e+00 : f32
    %540 = vector.broadcast %cst_155 : f32 to vector<1x15xf32>
    %541 = tpu.concatenate %539, %540 in 1 : vector<1x241xf32>, vector<1x15xf32> -> vector<1x256xf32>
    %542 = arith.mulf %541, %529 : vector<1x256xf32>
    %543 = vector.extract_strided_slice %149 {offsets = [0, 13], sizes = [8, 1], strides = [1, 1]} : vector<8x18xf32> to vector<8x1xf32>
    %544 = vector.broadcast %543 : vector<8x1xf32> to vector<8x256xf32>
    %545 = vector.broadcast %542 : vector<1x256xf32> to vector<8x256xf32>
    %546 = arith.mulf %544, %545 : vector<8x256xf32>
    %547 = arith.addf %538, %546 : vector<8x256xf32>
    %548 = vector.extract_strided_slice %151 {offsets = [7, 0], sizes = [1, 256], strides = [1, 1]} : vector<9x256xf32> to vector<1x256xf32>
    %549 = vector.extract_strided_slice %415 {offsets = [0, 16], sizes = [1, 240], strides = [1, 1]} : vector<1x256xf32> to vector<1x240xf32>
    %cst_156 = arith.constant 0.000000e+00 : f32
    %550 = vector.broadcast %cst_156 : f32 to vector<1x16xf32>
    %551 = tpu.concatenate %549, %550 in 1 : vector<1x240xf32>, vector<1x16xf32> -> vector<1x256xf32>
    %552 = arith.mulf %551, %548 : vector<1x256xf32>
    %553 = vector.extract_strided_slice %149 {offsets = [0, 14], sizes = [8, 1], strides = [1, 1]} : vector<8x18xf32> to vector<8x1xf32>
    %554 = vector.broadcast %553 : vector<8x1xf32> to vector<8x256xf32>
    %555 = vector.broadcast %552 : vector<1x256xf32> to vector<8x256xf32>
    %556 = arith.mulf %554, %555 : vector<8x256xf32>
    %557 = arith.addf %547, %556 : vector<8x256xf32>
    %558 = vector.extract_strided_slice %419 {offsets = [0, 16], sizes = [1, 240], strides = [1, 1]} : vector<1x256xf32> to vector<1x240xf32>
    %cst_157 = arith.constant 0.000000e+00 : f32
    %559 = vector.broadcast %cst_157 : f32 to vector<1x16xf32>
    %560 = tpu.concatenate %558, %559 in 1 : vector<1x240xf32>, vector<1x16xf32> -> vector<1x256xf32>
    %561 = arith.mulf %560, %548 : vector<1x256xf32>
    %562 = vector.extract_strided_slice %149 {offsets = [0, 15], sizes = [8, 1], strides = [1, 1]} : vector<8x18xf32> to vector<8x1xf32>
    %563 = vector.broadcast %562 : vector<8x1xf32> to vector<8x256xf32>
    %564 = vector.broadcast %561 : vector<1x256xf32> to vector<8x256xf32>
    %565 = arith.mulf %563, %564 : vector<8x256xf32>
    %566 = arith.addf %557, %565 : vector<8x256xf32>
    %567 = vector.extract_strided_slice %151 {offsets = [8, 0], sizes = [1, 256], strides = [1, 1]} : vector<9x256xf32> to vector<1x256xf32>
    %568 = vector.extract_strided_slice %415 {offsets = [0, 17], sizes = [1, 239], strides = [1, 1]} : vector<1x256xf32> to vector<1x239xf32>
    %cst_158 = arith.constant 0.000000e+00 : f32
    %569 = vector.broadcast %cst_158 : f32 to vector<1x17xf32>
    %570 = tpu.concatenate %568, %569 in 1 : vector<1x239xf32>, vector<1x17xf32> -> vector<1x256xf32>
    %571 = arith.mulf %570, %567 : vector<1x256xf32>
    %572 = vector.extract_strided_slice %149 {offsets = [0, 16], sizes = [8, 1], strides = [1, 1]} : vector<8x18xf32> to vector<8x1xf32>
    %573 = vector.broadcast %572 : vector<8x1xf32> to vector<8x256xf32>
    %574 = vector.broadcast %571 : vector<1x256xf32> to vector<8x256xf32>
    %575 = arith.mulf %573, %574 : vector<8x256xf32>
    %576 = arith.addf %566, %575 : vector<8x256xf32>
    %577 = vector.extract_strided_slice %419 {offsets = [0, 17], sizes = [1, 239], strides = [1, 1]} : vector<1x256xf32> to vector<1x239xf32>
    %cst_159 = arith.constant 0.000000e+00 : f32
    %578 = vector.broadcast %cst_159 : f32 to vector<1x17xf32>
    %579 = tpu.concatenate %577, %578 in 1 : vector<1x239xf32>, vector<1x17xf32> -> vector<1x256xf32>
    %580 = arith.mulf %579, %567 : vector<1x256xf32>
    %581 = vector.extract_strided_slice %149 {offsets = [0, 17], sizes = [8, 1], strides = [1, 1]} : vector<8x18xf32> to vector<8x1xf32>
    %582 = vector.broadcast %581 : vector<8x1xf32> to vector<8x256xf32>
    %583 = vector.broadcast %580 : vector<1x256xf32> to vector<8x256xf32>
    %584 = arith.mulf %582, %583 : vector<8x256xf32>
    %585 = arith.addf %576, %584 : vector<8x256xf32>
    %586 = vector.broadcast %150 : vector<8x1xf32> to vector<8x256xf32>
    %587 = arith.addf %585, %586 : vector<8x256xf32>
    %cst_160 = arith.constant 0.000000e+00 : f32
    %588 = vector.broadcast %cst_160 : f32 to vector<8x256xf32>
    %589 = arith.maximumf %587, %588 : vector<8x256xf32>
    %590 = vector.extract_strided_slice %589 {offsets = [0, 1], sizes = [8, 255], strides = [1, 1]} : vector<8x256xf32> to vector<8x255xf32>
    %cst_161 = arith.constant 0.000000e+00 : f32
    %591 = vector.broadcast %cst_161 : f32 to vector<8x1xf32>
    %592 = tpu.concatenate %590, %591 in 1 : vector<8x255xf32>, vector<8x1xf32> -> vector<8x256xf32>
    %593 = vector.extract_strided_slice %589 {offsets = [0, 2], sizes = [8, 254], strides = [1, 1]} : vector<8x256xf32> to vector<8x254xf32>
    %cst_162 = arith.constant 0.000000e+00 : f32
    %594 = vector.broadcast %cst_162 : f32 to vector<8x2xf32>
    %595 = tpu.concatenate %593, %594 in 1 : vector<8x254xf32>, vector<8x2xf32> -> vector<8x256xf32>
    %596 = arith.maximumf %592, %595 : vector<8x256xf32>
    %597 = arith.maximumf %589, %596 : vector<8x256xf32>
    %598 = vector.extract_strided_slice %597 {offsets = [0, 16], sizes = [8, 240], strides = [1, 1]} : vector<8x256xf32> to vector<8x240xf32>
    %cst_163 = arith.constant 0.000000e+00 : f32
    %599 = vector.broadcast %cst_163 : f32 to vector<8x16xf32>
    %600 = tpu.concatenate %598, %599 in 1 : vector<8x240xf32>, vector<8x16xf32> -> vector<8x256xf32>
    %601 = vector.extract_strided_slice %597 {offsets = [0, 32], sizes = [8, 224], strides = [1, 1]} : vector<8x256xf32> to vector<8x224xf32>
    %cst_164 = arith.constant 0.000000e+00 : f32
    %602 = vector.broadcast %cst_164 : f32 to vector<8x32xf32>
    %603 = tpu.concatenate %601, %602 in 1 : vector<8x224xf32>, vector<8x32xf32> -> vector<8x256xf32>
    %604 = arith.maximumf %600, %603 : vector<8x256xf32>
    %605 = arith.maximumf %597, %604 : vector<8x256xf32>
    %cst_165 = arith.constant dense<0.000000e+00> : vector<8x25xf32>
    %606 = tpu.matmul %605, %154, %cst_165 {dimension_numbers = #tpu.dot_dimension_numbers<[1], [0], [0], [1], [0, 0, 1, 1], [], []>} : vector<8x256xf32>, vector<256x25xf32>, vector<8x25xf32> -> vector<8x25xf32>
    %cst_166 = arith.constant dense<0.000000e+00> : vector<8x200xf32>
    %607 = tpu.matmul %606, %155, %cst_166 {dimension_numbers = #tpu.dot_dimension_numbers<[1], [0], [0], [1], [0, 0, 1, 1], [], []>} : vector<8x25xf32>, vector<25x200xf32>, vector<8x200xf32> -> vector<8x200xf32>
    %608 = arith.mulf %607, %156 : vector<8x200xf32>
    %cst_167 = arith.constant dense<0.000000e+00> : vector<200xf32>
    %609 = vector.multi_reduction <add>, %608, %cst_167 [0] : vector<8x200xf32> to vector<200xf32>
    %610 = vector.shape_cast %609 : vector<200xf32> to vector<1x200xf32>
    %cst_168 = arith.constant dense<0.000000e+00> : vector<1x32xf32>
    %611 = tpu.matmul %610, %157, %cst_168 {dimension_numbers = #tpu.dot_dimension_numbers<[1], [0], [0], [1], [0, 0, 1, 1], [], []>} : vector<1x200xf32>, vector<200x32xf32>, vector<1x32xf32> -> vector<1x32xf32>
    %612 = arith.addf %611, %158 : vector<1x32xf32>
    %cst_169 = arith.constant 0.000000e+00 : f32
    %613 = vector.broadcast %cst_169 : f32 to vector<1x32xf32>
    %614 = arith.maximumf %612, %613 : vector<1x32xf32>
    %cst_170 = arith.constant dense<0.000000e+00> : vector<1x1xf32>
    %615 = tpu.matmul %614, %159, %cst_170 {dimension_numbers = #tpu.dot_dimension_numbers<[1], [0], [0], [1], [0, 0, 1, 1], [], []>} : vector<1x32xf32>, vector<32x1xf32>, vector<1x1xf32> -> vector<1x1xf32>
    %616 = arith.addf %615, %160 : vector<1x1xf32>
    %617 = tpu.concatenate %388, %616 in 1 : vector<1x1xf32>, vector<1x1xf32> -> vector<1x2xf32>
    %c0_171 = arith.constant 0 : index
    %c0_172 = arith.constant 0 : index
    %618 = vector.load %arg25[%c0_171, %c0_172] : memref<1x2xf32, #tpu.memory_space<vmem>>, vector<1x2xf32>
    tpu.vector_store %arg25[%c0_171, %c0_172], %617 {strides = array<i32>} : memref<1x2xf32, #tpu.memory_space<vmem>>, vector<1x2xf32>,
    return
  }
}

</mosaic_0001>

<llo_original>
// kernel: flat_smn_forward.1
$region0: #{flat_smn_forward.1}
  #allocation0 [shape = 'u32[]', space=smem, size = 0x4, offset = 0x4, fixed_abs, tag = 'smem constant byte address 0x4 - core index']
  #allocation1 [shape = 'u32[144,128]{1,0:T(1,128)}', space=vmem, size = 0x12000, scoped, tag = 'internal scratch']
  #allocation2 [shape = 'f32[1,1]{1,0:T(1,128)S(1)}', space=vmem, size = 0x200, scoped, tag = 'scoped memory for flat_smn_forward.1']
  %s0 = inlined_call_operand.vmem [shape: f32[2,16,32], index: 0, kind: input, shape index: {}]
  %s1 = inlined_call_operand.vmem [shape: f32[2,16,32], index: 1, kind: input, shape index: {}]
  %s2 = inlined_call_operand.vmem [shape: f32[2,16,1], index: 2, kind: input, shape index: {}]
  %s3 = inlined_call_operand.vmem [shape: f32[2,1,16], index: 3, kind: input, shape index: {}]
  %s4 = inlined_call_operand.vmem [shape: f32[32,96], index: 4, kind: input, shape index: {}]
  %s5 = inlined_call_operand.vmem [shape: f32[32,96], index: 5, kind: input, shape index: {}]
  %s6 = inlined_call_operand.vmem [shape: f32[1,96], index: 6, kind: input, shape index: {}]
  %s7 = inlined_call_operand.vmem [shape: f32[1,96], index: 7, kind: input, shape index: {}]
  %s8 = inlined_call_operand.vmem [shape: f32[32,96], index: 8, kind: input, shape index: {}]
  %s9 = inlined_call_operand.vmem [shape: f32[32,96], index: 9, kind: input, shape index: {}]
  %s10 = inlined_call_operand.vmem [shape: f32[1,96], index: 10, kind: input, shape index: {}]
  %s11 = inlined_call_operand.vmem [shape: f32[1,96], index: 11, kind: input, shape index: {}]
  %s12 = inlined_call_operand.vmem [shape: f32[64,64], index: 12, kind: input, shape index: {}]
  %s13 = inlined_call_operand.vmem [shape: f32[8,18], index: 13, kind: input, shape index: {}]
  %s14 = inlined_call_operand.vmem [shape: f32[8,1], index: 14, kind: input, shape index: {}]
  %s15 = inlined_call_operand.vmem [shape: f32[9,256], index: 15, kind: input, shape index: {}]
  %s16 = inlined_call_operand.vmem [shape: f32[16,256], index: 16, kind: input, shape index: {}]
  %s17 = inlined_call_operand.vmem [shape: f32[16,256], index: 17, kind: input, shape index: {}]
  %s18 = inlined_call_operand.vmem [shape: f32[256,25], index: 18, kind: input, shape index: {}]
  %s19 = inlined_call_operand.vmem [shape: f32[25,200], index: 19, kind: input, shape index: {}]
  %s20 = inlined_call_operand.vmem [shape: f32[8,200], index: 20, kind: input, shape index: {}]
  %s21 = inlined_call_operand.vmem [shape: f32[200,32], index: 21, kind: input, shape index: {}]
  %s22 = inlined_call_operand.vmem [shape: f32[1,32], index: 22, kind: input, shape index: {}]
  %s23 = inlined_call_operand.vmem [shape: f32[32,1], index: 23, kind: input, shape index: {}]
  %s24 = inlined_call_operand.<no memory space> [shape: f32[1,1], index: 24, kind: input, shape index: {}]
  %s25 = inlined_call_operand.hbm [shape: f32[1,2], index: 25, kind: output, shape index: {}]
  %s26 = sld [smem:[#allocation0]]
  $region110: #{flat_smn_forward.1} parent=0
    _
  %s28 = ssub.s32 1, %s26
  %s29 = scalar_select 0, %s28, %s26
  %v30 = vstv %s24
  %31 = vst [vmem:[#allocation2] sm:$0x1] %v30
  $region1: #{flat_smn_forward.1} parent=0
    #allocation3 [shape = 'u8[512]{0}', space=vmem, size = 0x400, scoped, tag = 'output window, operand 0, single buffered']
    #allocation4 [shape = 's32[1]{0}', space=sflag, size = 0x4, scoped, tag = 'scoped memory for flat_smn_forward.1']
    %32 = vsyncpa [#allocation4], 0
    // Predicated region
    $region2: #{flat_smn_forward.1} parent=1 // pred_check
      _
    $region3: #{flat_smn_forward.1} parent=1 // pred_check_branch
      %34 = sbr.rel (0) target = $region5
    $region4: #{flat_smn_forward.1} parent=1 // pred_region
      _
    $region5: #{flat_smn_forward.1} parent=1 // pred_fallthru
      _
    // Predicated region
    $region6: #{flat_smn_forward.1} parent=1 // pred_check
      _
    $region7: #{flat_smn_forward.1} parent=1 // pred_check_branch
      %36 = sbr.rel (0) target = $region9
    $region8: #{flat_smn_forward.1} parent=1 // pred_region
      _
    $region9: #{flat_smn_forward.1} parent=1 // pred_fallthru
      _
    // Predicated region
    $region10: #{flat_smn_forward.1} parent=1 // pred_check
      _
    $region11: #{flat_smn_forward.1} parent=1 // pred_check_branch
      %38 = sbr.rel (0) target = $region13
    $region12: #{flat_smn_forward.1} parent=1 // pred_region
      _
    $region13: #{flat_smn_forward.1} parent=1 // pred_fallthru
      _
    // Predicated region
    $region14: #{flat_smn_forward.1} parent=1 // pred_check
      _
    $region15: #{flat_smn_forward.1} parent=1 // pred_check_branch
      %40 = sbr.rel (0) target = $region17
    $region16: #{flat_smn_forward.1} parent=1 // pred_region
      _
    $region17: #{flat_smn_forward.1} parent=1 // pred_fallthru
      _
    // Predicated region
    $region18: #{flat_smn_forward.1} parent=1 // pred_check
      _
    $region19: #{flat_smn_forward.1} parent=1 // pred_check_branch
      %42 = sbr.rel (0) target = $region21
    $region20: #{flat_smn_forward.1} parent=1 // pred_region
      _
    $region21: #{flat_smn_forward.1} parent=1 // pred_fallthru
      _
    // Predicated region
    $region22: #{flat_smn_forward.1} parent=1 // pred_check
      _
    $region23: #{flat_smn_forward.1} parent=1 // pred_check_branch
      %44 = sbr.rel (0) target = $region25
    $region24: #{flat_smn_forward.1} parent=1 // pred_region
      _
    $region25: #{flat_smn_forward.1} parent=1 // pred_fallthru
      _
    // Predicated region
    $region26: #{flat_smn_forward.1} parent=1 // pred_check
      _
    $region27: #{flat_smn_forward.1} parent=1 // pred_check_branch
      %46 = sbr.rel (0) target = $region29
    $region28: #{flat_smn_forward.1} parent=1 // pred_region
      _
    $region29: #{flat_smn_forward.1} parent=1 // pred_fallthru
      _
    // Predicated region
    $region30: #{flat_smn_forward.1} parent=1 // pred_check
      _
    $region31: #{flat_smn_forward.1} parent=1 // pred_check_branch
      %48 = sbr.rel (0) target = $region33
    $region32: #{flat_smn_forward.1} parent=1 // pred_region
      _
    $region33: #{flat_smn_forward.1} parent=1 // pred_fallthru
      _
    // Predicated region
    $region34: #{flat_smn_forward.1} parent=1 // pred_check
      _
    $region35: #{flat_smn_forward.1} parent=1 // pred_check_branch
      %50 = sbr.rel (0) target = $region37
    $region36: #{flat_smn_forward.1} parent=1 // pred_region
      _
    $region37: #{flat_smn_forward.1} parent=1 // pred_fallthru
      _
    // Predicated region
    $region38: #{flat_smn_forward.1} parent=1 // pred_check
      _
    $region39: #{flat_smn_forward.1} parent=1 // pred_check_branch
      %52 = sbr.rel (0) target = $region41
    $region40: #{flat_smn_forward.1} parent=1 // pred_region
      _
    $region41: #{flat_smn_forward.1} parent=1 // pred_fallthru
      _
    // Predicated region
    $region42: #{flat_smn_forward.1} parent=1 // pred_check
      _
    $region43: #{flat_smn_forward.1} parent=1 // pred_check_branch
      %54 = sbr.rel (0) target = $region45
    $region44: #{flat_smn_forward.1} parent=1 // pred_region
      _
    $region45: #{flat_smn_forward.1} parent=1 // pred_fallthru
      _
    // Predicated region
    $region46: #{flat_smn_forward.1} parent=1 // pred_check
      _
    $region47: #{flat_smn_forward.1} parent=1 // pred_check_branch
      %56 = sbr.rel (0) target = $region49
    $region48: #{flat_smn_forward.1} parent=1 // pred_region
      _
    $region49: #{flat_smn_forward.1} parent=1 // pred_fallthru
      _
    // Predicated region
    $region50: #{flat_smn_forward.1} parent=1 // pred_check
      _
    $region51: #{flat_smn_forward.1} parent=1 // pred_check_branch
      %58 = sbr.rel (0) target = $region53
    $region52: #{flat_smn_forward.1} parent=1 // pred_region
      _
    $region53: #{flat_smn_forward.1} parent=1 // pred_fallthru
      _
    // Predicated region
    $region54: #{flat_smn_forward.1} parent=1 // pred_check
      _
    $region55: #{flat_smn_forward.1} parent=1 // pred_check_branch
      %60 = sbr.rel (0) target = $region57
    $region56: #{flat_smn_forward.1} parent=1 // pred_region
      _
    $region57: #{flat_smn_forward.1} parent=1 // pred_fallthru
      _
    // Predicated region
    $region58: #{flat_smn_forward.1} parent=1 // pred_check
      _
    $region59: #{flat_smn_forward.1} parent=1 // pred_check_branch
      %62 = sbr.rel (0) target = $region61
    $region60: #{flat_smn_forward.1} parent=1 // pred_region
      _
    $region61: #{flat_smn_forward.1} parent=1 // pred_fallthru
      _
    // Predicated region
    $region62: #{flat_smn_forward.1} parent=1 // pred_check
      _
    $region63: #{flat_smn_forward.1} parent=1 // pred_check_branch
      %64 = sbr.rel (0) target = $region65
    $region64: #{flat_smn_forward.1} parent=1 // pred_region
      _
    $region65: #{flat_smn_forward.1} parent=1 // pred_fallthru
      _
    // Predicated region
    $region66: #{flat_smn_forward.1} parent=1 // pred_check
      _
    $region67: #{flat_smn_forward.1} parent=1 // pred_check_branch
      %66 = sbr.rel (0) target = $region69
    $region68: #{flat_smn_forward.1} parent=1 // pred_region
      _
    $region69: #{flat_smn_forward.1} parent=1 // pred_fallthru
      _
    // Predicated region
    $region70: #{flat_smn_forward.1} parent=1 // pred_check
      _
    $region71: #{flat_smn_forward.1} parent=1 // pred_check_branch
      %68 = sbr.rel (0) target = $region73
    $region72: #{flat_smn_forward.1} parent=1 // pred_region
      _
    $region73: #{flat_smn_forward.1} parent=1 // pred_fallthru
      _
    // Predicated region
    $region74: #{flat_smn_forward.1} parent=1 // pred_check
      _
    $region75: #{flat_smn_forward.1} parent=1 // pred_check_branch
      %70 = sbr.rel (0) target = $region77
    $region76: #{flat_smn_forward.1} parent=1 // pred_region
      _
    $region77: #{flat_smn_forward.1} parent=1 // pred_fallthru
      _
    // Predicated region
    $region78: #{flat_smn_forward.1} parent=1 // pred_check
      _
    $region79: #{flat_smn_forward.1} parent=1 // pred_check_branch
      %72 = sbr.rel (0) target = $region81
    $region80: #{flat_smn_forward.1} parent=1 // pred_region
      _
    $region81: #{flat_smn_forward.1} parent=1 // pred_fallthru
      _
    // Predicated region
    $region82: #{flat_smn_forward.1} parent=1 // pred_check
      _
    $region83: #{flat_smn_forward.1} parent=1 // pred_check_branch
      %74 = sbr.rel (0) target = $region85
    $region84: #{flat_smn_forward.1} parent=1 // pred_region
      _
    $region85: #{flat_smn_forward.1} parent=1 // pred_fallthru
      _
    // Predicated region
    $region86: #{flat_smn_forward.1} parent=1 // pred_check
      _
    $region87: #{flat_smn_forward.1} parent=1 // pred_check_branch
      %76 = sbr.rel (0) target = $region89
    $region88: #{flat_smn_forward.1} parent=1 // pred_region
      _
    $region89: #{flat_smn_forward.1} parent=1 // pred_fallthru
      _
    // Predicated region
    $region90: #{flat_smn_forward.1} parent=1 // pred_check
      _
    $region91: #{flat_smn_forward.1} parent=1 // pred_check_branch
      %78 = sbr.rel (0) target = $region93
    $region92: #{flat_smn_forward.1} parent=1 // pred_region
      _
    $region93: #{flat_smn_forward.1} parent=1 // pred_fallthru
      _
    // Predicated region
    $region94: #{flat_smn_forward.1} parent=1 // pred_check
      _
    $region95: #{flat_smn_forward.1} parent=1 // pred_check_branch
      %80 = sbr.rel (0) target = $region97
    $region96: #{flat_smn_forward.1} parent=1 // pred_region
      _
    $region97: #{flat_smn_forward.1} parent=1 // pred_fallthru
      _
    // Predicated region
    $region98: #{flat_smn_forward.1} parent=1 // pred_check
      _
    $region99: #{flat_smn_forward.1} parent=1 // pred_check_branch
      %82 = sbr.rel (0) target = $region101
    $region100: #{flat_smn_forward.1} parent=1 // pred_region
      _
    $region101: #{flat_smn_forward.1} parent=1 // pred_fallthru
      _
    %v83 = vld [vmem:[%s0] sm:$0xff]
    %v84 = vld [vmem:[%s0 + $0x8] sm:$0xff]
    %v85 = vld [vmem:[%s1] sm:$0xff]
    %v86 = vld [vmem:[%s1 + $0x8] sm:$0xff]
    %s87 = scalar_lea.vmem %s0, 16
    %v88 = vld [vmem:[%s87] sm:$0xff]
    %v89 = vld [vmem:[%s87 + $0x8] sm:$0xff]
    %s90 = scalar_lea.vmem %s1, 16
    %v91 = vld [vmem:[%s90] sm:$0xff]
    %v92 = vld [vmem:[%s90 + $0x8] sm:$0xff]
    %v93 = vld [vmem:[%s4] sm:$0xff]
    %v94 = vld [vmem:[%s4 + $0x8] sm:$0xff]
    %v95 = vld [vmem:[%s4 + $0x10] sm:$0xff]
    %v96 = vld [vmem:[%s4 + $0x18] sm:$0xff]
    %v97 = vld [vmem:[%s5] sm:$0xff]
    %v98 = vld [vmem:[%s5 + $0x8] sm:$0xff]
    %v99 = vld [vmem:[%s5 + $0x10] sm:$0xff]
    %v100 = vld [vmem:[%s5 + $0x18] sm:$0xff]
    %v101 = vld [vmem:[%s6] sm:$0x1]
    %v102 = vld [vmem:[%s7] sm:$0x1]
    %v104 = vlaneseq
    %v105 = vshrl.u32 %v104, 7
    %v106 = vsub.s32 0, %v105
    %v107 = vrot.slane %v101, %v106
    %vm109 = vcmask 261120
    %v111 = vsel %vm109, %v83, 0
    %v114 = vsel %vm109, %v84, 0
    %v117 = vsel %vm109, %v85, 0
    %v120 = vsel %vm109, %v86, 0
    %122 = vmatprep.subr.mxu0 0.0
    %123 = vmatpush1.msra.mxu0 %v93
    %124 = vmatprep.subr.mxu0 0.0
    %125 = vmatpush1.msra.mxu0 %v94
    %126 = vmatprep.subr.mxu0 0.0
    %127 = vmatpush1.msra.mxu0 %v95
    %128 = vmatprep.subr.mxu0 0.0
    %129 = vmatpush1.msra.mxu0 %v96
    %130 = vmatprep.subr.mxu0 0.0
    %131 = vmatpush1.msra.mxu0 0.0
    %132 = vmatprep.subr.mxu0 0.0
    %133 = vmatpush1.msra.mxu0 0.0
    %134 = vmatprep.subr.mxu0 0.0
    %135 = vmatpush1.msra.mxu0 0.0
    %136 = vmatprep.subr.mxu0 0.0
    %137 = vmatpush1.msra.mxu0 0.0
    %138 = vmatprep.subr.mxu0 0.0
    %139 = vmatpush1.msra.mxu0 0.0
    %140 = vmatprep.subr.mxu0 0.0
    %141 = vmatpush1.msra.mxu0 0.0
    %142 = vmatprep.subr.mxu0 0.0
    %143 = vmatpush1.msra.mxu0 0.0
    %144 = vmatprep.subr.mxu0 0.0
    %145 = vmatpush1.msra.mxu0 0.0
    %146 = vmatprep.subr.mxu0 0.0
    %147 = vmatpush1.msra.mxu0 0.0
    %148 = vmatprep.subr.mxu0 0.0
    %149 = vmatpush1.msra.mxu0 0.0
    %150 = vmatprep.subr.mxu0 0.0
    %151 = vmatpush1.msra.mxu0 0.0
    %152 = vmatprep.subr.mxu0 0.0
    %153 = vmatpush1.msra.mxu0 0.0
    %154 = vmatprep.subr.mxu0 0.0
    %155 = vmatpush1.msra.mxu0 0.0
    %156 = vmatprep.subr.mxu0 0.0
    %157 = vmatpush1.msra.mxu0 0.0
    %158 = vmatprep.subr.mxu0 0.0
    %159 = vmatpush1.msra.mxu0 0.0
    %160 = vmatprep.subr.mxu0 0.0
    %161 = vmatpush1.msra.mxu0 0.0
    %162 = vmatprep.subr.mxu0 0.0
    %163 = vmatpush1.msra.mxu0 0.0
    %164 = vmatprep.subr.mxu0 0.0
    %165 = vmatpush1.msra.mxu0 0.0
    %166 = vmatprep.subr.mxu0 0.0
    %167 = vmatpush1.msra.mxu0 0.0
    %168 = vmatprep.subr.mxu0 0.0
    %169 = vmatpush1.msra.mxu0 0.0
    %170 = vmatprep.subr.mxu0 0.0
    %171 = vmatpush1.msra.mxu0 0.0
    %172 = vmatprep.subr.mxu0 0.0
    %173 = vmatpush1.msra.mxu0 0.0
    %174 = vmatprep.subr.mxu0 0.0
    %175 = vmatpush1.msra.mxu0 0.0
    %176 = vmatprep.subr.mxu0 0.0
    %177 = vmatpush1.msra.mxu0 0.0
    %178 = vmatprep.subr.mxu0 0.0
    %179 = vmatpush1.msra.mxu0 0.0
    %180 = vmatprep.subr.mxu0 0.0
    %181 = vmatpush1.msra.mxu0 0.0
    %182 = vmatprep.subr.mxu0 0.0
    %183 = vmatpush1.msra.mxu0 0.0
    %184 = vmatprep.subr.mxu0 0.0
    %185 = vmatpush1.msra.mxu0 0.0
    %186 = vmatprep.mubr.f32.mxu0 0.0
    %187 = vmatmul.mubr.f32.gmra.mrb[0].mxu0 %v111
    %v188 = vpop.f32.mrb[0].mxu0
    %v189 = vadd.f32 %v107, %v188
    %v190 = vpop.f32.mrb[0].mxu0
    %191 = vmatprep.mubr.f32.mxu0 0.0
    %192 = vmatmul.mubr.f32.gmra.mrb[0].mxu0 %v114
    %v193 = vpop.f32.mrb[0].mxu0
    %v194 = vadd.f32 %v107, %v193
    %v195 = vpop.f32.mrb[0].mxu0
    %196 = vmatprep.mubr.f32.mxu0 0.0
    %197 = vmatmul.mubr.f32.gmra.mrb[0].mxu0 %v117
    %v198 = vpop.f32.mrb[0].mxu0
    %v199 = vadd.f32 %v107, %v198
    %v200 = vpop.f32.mrb[0].mxu0
    %201 = vmatprep.mubr.f32.mxu0 0.0
    %202 = vmatmul.mubr.f32.gmra.mrb[0].mxu0 %v120
    %v203 = vpop.f32.mrb[0].mxu0
    %v204 = vadd.f32 %v107, %v203
    %v205 = vpop.f32.mrb[0].mxu0
    %206 = vdwg.mxu0
    %v208 = vlaneseq
    %v209 = vshrl.u32 %v208, 7
    %v210 = vsub.s32 0, %v209
    %v211 = vrot.slane %v102, %v210
    %v214 = vsel %vm109, 0.0, 0
    %216 = vmatprep.subr.mxu0 0.0
    %217 = vmatpush1.msra.mxu0 %v97
    %218 = vmatprep.subr.mxu0 0.0
    %219 = vmatpush1.msra.mxu0 %v98
    %220 = vmatprep.subr.mxu0 0.0
    %221 = vmatpush1.msra.mxu0 %v99
    %222 = vmatprep.subr.mxu0 0.0
    %223 = vmatpush1.msra.mxu0 %v100
    %224 = vmatprep.subr.mxu0 0.0
    %225 = vmatpush1.msra.mxu0 0.0
    %226 = vmatprep.subr.mxu0 0.0
    %227 = vmatpush1.msra.mxu0 0.0
    %228 = vmatprep.subr.mxu0 0.0
    %229 = vmatpush1.msra.mxu0 0.0
    %230 = vmatprep.subr.mxu0 0.0
    %231 = vmatpush1.msra.mxu0 0.0
    %232 = vmatprep.subr.mxu0 0.0
    %233 = vmatpush1.msra.mxu0 0.0
    %234 = vmatprep.subr.mxu0 0.0
    %235 = vmatpush1.msra.mxu0 0.0
    %236 = vmatprep.subr.mxu0 0.0
    %237 = vmatpush1.msra.mxu0 0.0
    %238 = vmatprep.subr.mxu0 0.0
    %239 = vmatpush1.msra.mxu0 0.0
    %240 = vmatprep.subr.mxu0 0.0
    %241 = vmatpush1.msra.mxu0 0.0
    %242 = vmatprep.subr.mxu0 0.0
    %243 = vmatpush1.msra.mxu0 0.0
    %244 = vmatprep.subr.mxu0 0.0
    %245 = vmatpush1.msra.mxu0 0.0
    %246 = vmatprep.subr.mxu0 0.0
    %247 = vmatpush1.msra.mxu0 0.0
    %248 = vmatprep.subr.mxu0 0.0
    %249 = vmatpush1.msra.mxu0 0.0
    %250 = vmatprep.subr.mxu0 0.0
    %251 = vmatpush1.msra.mxu0 0.0
    %252 = vmatprep.subr.mxu0 0.0
    %253 = vmatpush1.msra.mxu0 0.0
    %254 = vmatprep.subr.mxu0 0.0
    %255 = vmatpush1.msra.mxu0 0.0
    %256 = vmatprep.subr.mxu0 0.0
    %257 = vmatpush1.msra.mxu0 0.0
    %258 = vmatprep.subr.mxu0 0.0
    %259 = vmatpush1.msra.mxu0 0.0
    %260 = vmatprep.subr.mxu0 0.0
    %261 = vmatpush1.msra.mxu0 0.0
    %262 = vmatprep.subr.mxu0 0.0
    %263 = vmatpush1.msra.mxu0 0.0
    %264 = vmatprep.subr.mxu0 0.0
    %265 = vmatpush1.msra.mxu0 0.0
    %266 = vmatprep.subr.mxu0 0.0
    %267 = vmatpush1.msra.mxu0 0.0
    %268 = vmatprep.subr.mxu0 0.0
    %269 = vmatpush1.msra.mxu0 0.0
    %270 = vmatprep.subr.mxu0 0.0
    %271 = vmatpush1.msra.mxu0 0.0
    %272 = vmatprep.subr.mxu0 0.0
    %273 = vmatpush1.msra.mxu0 0.0
    %274 = vmatprep.subr.mxu0 0.0
    %275 = vmatpush1.msra.mxu0 0.0
    %276 = vmatprep.subr.mxu0 0.0
    %277 = vmatpush1.msra.mxu0 0.0
    %278 = vmatprep.subr.mxu0 0.0
    %279 = vmatpush1.msra.mxu0 0.0
    %280 = vmatprep.mubr.f32.mxu0 0.0
    %281 = vmatmul.mubr.f32.gmra.mrb[0].mxu0 %v214
    %v282 = vpop.f32.mrb[0].mxu0
    %v283 = vadd.f32 %v211, %v282
    %v284 = vpop.f32.mrb[0].mxu0
    %285 = vmatprep.mubr.f32.mxu0 0.0
    %286 = vmatmul.mubr.f32.gmra.mrb[0].mxu0 %v214
    %v287 = vpop.f32.mrb[0].mxu0
    %v288 = vadd.f32 %v211, %v287
    %v289 = vpop.f32.mrb[0].mxu0
    %290 = vmatprep.mubr.f32.mxu0 0.0
    %291 = vmatmul.mubr.f32.gmra.mrb[0].mxu0 %v214
    %v292 = vpop.f32.mrb[0].mxu0
    %v293 = vadd.f32 %v211, %v292
    %v294 = vpop.f32.mrb[0].mxu0
    %295 = vmatprep.mubr.f32.mxu0 0.0
    %296 = vmatmul.mubr.f32.gmra.mrb[0].mxu0 %v214
    %v297 = vpop.f32.mrb[0].mxu0
    %v298 = vadd.f32 %v211, %v297
    %v299 = vpop.f32.mrb[0].mxu0
    %300 = vdwg.mxu0
    %v301 = vadd.f32 %v189, %v283
    %v302 = vadd.f32 %v194, %v288
    %v303 = vadd.f32 %v199, %v293
    %v304 = vadd.f32 %v204, %v298
    %v305 = vxor.u32 %v301, 2147483648
    %v306 = vxor.u32 %v302, 2147483648
    %v307 = vxor.u32 %v303, 2147483648
    %v308 = vxor.u32 %v304, 2147483648
    %v309 = vmul.f32 %v305, 1.442695
    %v310 = vpow.pop %v309
    %v311 = vmul.f32 %v306, 1.442695
    %v312 = vpow.pop %v311
    %v313 = vmul.f32 %v307, 1.442695
    %v314 = vpow.pop %v313
    %v315 = vmul.f32 %v308, 1.442695
    %v316 = vpow.pop %v315
    %v317 = vadd.f32 %v310, 1.0
    %v318 = vadd.f32 %v312, 1.0
    %v319 = vadd.f32 %v314, 1.0
    %v320 = vadd.f32 %v316, 1.0
    %v321 = vrcp.pop %v317
    %v322 = vmul.f32 1.0, %v321
    %v323 = vrcp.pop %v318
    %v324 = vmul.f32 1.0, %v323
    %v325 = vrcp.pop %v319
    %v326 = vmul.f32 1.0, %v325
    %v327 = vrcp.pop %v320
    %v328 = vmul.f32 1.0, %v327
    %333 = vrot.lane.b32.xlu0 %v283, 64
    %v334 = vpop.permute.xlu0 %333
    %335 = vrot.lane.b32.xlu0 %v288, 64
    %v336 = vpop.permute.xlu0 %335
    %337 = vrot.lane.b32.xlu0 %v293, 64
    %v338 = vpop.permute.xlu0 %337
    %339 = vrot.lane.b32.xlu0 %v298, 64
    %v340 = vpop.permute.xlu0 %339
    %v345 = vmul.f32 %v322, %v334
    %v346 = vmul.f32 %v324, %v336
    %v347 = vmul.f32 %v326, %v338
    %v348 = vmul.f32 %v328, %v340
    %353 = vrot.lane.b32.xlu0 %v345, 64
    %v354 = vpop.permute.xlu0 %353
    %355 = vrot.lane.b32.xlu0 %v346, 64
    %v356 = vpop.permute.xlu0 %355
    %357 = vrot.lane.b32.xlu0 %v347, 64
    %v358 = vpop.permute.xlu0 %357
    %359 = vrot.lane.b32.xlu0 %v348, 64
    %v360 = vpop.permute.xlu0 %359
    %v365 = vadd.f32 %v189, %v354
    %v366 = vadd.f32 %v194, %v356
    %v367 = vadd.f32 %v199, %v358
    %v368 = vadd.f32 %v204, %v360
    %v369 = vtanh.pop %v365
    %v370 = vtanh.pop %v366
    %v371 = vtanh.pop %v367
    %v372 = vtanh.pop %v368
    %v373 = vsub.f32 1.0, %v322
    %v374 = vsub.f32 1.0, %v324
    %v375 = vsub.f32 1.0, %v326
    %v376 = vsub.f32 1.0, %v328
    %381 = vrot.lane.b32.xlu0 %v369, 96
    %v382 = vpop.permute.xlu0 %381
    %383 = vrot.lane.b32.xlu0 %v370, 96
    %v384 = vpop.permute.xlu0 %383
    %385 = vrot.lane.b32.xlu0 %v371, 96
    %v386 = vpop.permute.xlu0 %385
    %387 = vrot.lane.b32.xlu0 %v372, 96
    %v388 = vpop.permute.xlu0 %387
    %v393 = vmul.f32 %v373, %v382
    %v394 = vmul.f32 %v374, %v384
    %v395 = vmul.f32 %v375, %v386
    %v396 = vmul.f32 %v376, %v388
    %v397 = vmul.f32 %v322, 0.0
    %v398 = vmul.f32 %v324, 0.0
    %v399 = vmul.f32 %v326, 0.0
    %v400 = vmul.f32 %v328, 0.0
    %v401 = vadd.f32 %v393, %v397
    %v402 = vadd.f32 %v394, %v398
    %v403 = vadd.f32 %v395, %v399
    %v404 = vadd.f32 %v396, %v400
    %v406 = vsel %vm109, %v88, 0
    %v409 = vsel %vm109, %v89, 0
    %v412 = vsel %vm109, %v91, 0
    %v415 = vsel %vm109, %v92, 0
    %417 = vmatprep.subr.mxu0 0.0
    %418 = vmatpush1.msra.mxu0 %v93
    %419 = vmatprep.subr.mxu0 0.0
    %420 = vmatpush1.msra.mxu0 %v94
    %421 = vmatprep.subr.mxu0 0.0
    %422 = vmatpush1.msra.mxu0 %v95
    %423 = vmatprep.subr.mxu0 0.0
    %424 = vmatpush1.msra.mxu0 %v96
    %425 = vmatprep.subr.mxu0 0.0
    %426 = vmatpush1.msra.mxu0 0.0
    %427 = vmatprep.subr.mxu0 0.0
    %428 = vmatpush1.msra.mxu0 0.0
    %429 = vmatprep.subr.mxu0 0.0
    %430 = vmatpush1.msra.mxu0 0.0
    %431 = vmatprep.subr.mxu0 0.0
    %432 = vmatpush1.msra.mxu0 0.0
    %433 = vmatprep.subr.mxu0 0.0
    %434 = vmatpush1.msra.mxu0 0.0
    %435 = vmatprep.subr.mxu0 0.0
    %436 = vmatpush1.msra.mxu0 0.0
    %437 = vmatprep.subr.mxu0 0.0
    %438 = vmatpush1.msra.mxu0 0.0
    %439 = vmatprep.subr.mxu0 0.0
    %440 = vmatpush1.msra.mxu0 0.0
    %441 = vmatprep.subr.mxu0 0.0
    %442 = vmatpush1.msra.mxu0 0.0
    %443 = vmatprep.subr.mxu0 0.0
    %444 = vmatpush1.msra.mxu0 0.0
    %445 = vmatprep.subr.mxu0 0.0
    %446 = vmatpush1.msra.mxu0 0.0
    %447 = vmatprep.subr.mxu0 0.0
    %448 = vmatpush1.msra.mxu0 0.0
    %449 = vmatprep.subr.mxu0 0.0
    %450 = vmatpush1.msra.mxu0 0.0
    %451 = vmatprep.subr.mxu0 0.0
    %452 = vmatpush1.msra.mxu0 0.0
    %453 = vmatprep.subr.mxu0 0.0
    %454 = vmatpush1.msra.mxu0 0.0
    %455 = vmatprep.subr.mxu0 0.0
    %456 = vmatpush1.msra.mxu0 0.0
    %457 = vmatprep.subr.mxu0 0.0
    %458 = vmatpush1.msra.mxu0 0.0
    %459 = vmatprep.subr.mxu0 0.0
    %460 = vmatpush1.msra.mxu0 0.0
    %461 = vmatprep.subr.mxu0 0.0
    %462 = vmatpush1.msra.mxu0 0.0
    %463 = vmatprep.subr.mxu0 0.0
    %464 = vmatpush1.msra.mxu0 0.0
    %465 = vmatprep.subr.mxu0 0.0
    %466 = vmatpush1.msra.mxu0 0.0
    %467 = vmatprep.subr.mxu0 0.0
    %468 = vmatpush1.msra.mxu0 0.0
    %469 = vmatprep.subr.mxu0 0.0
    %470 = vmatpush1.msra.mxu0 0.0
    %471 = vmatprep.subr.mxu0 0.0
    %472 = vmatpush1.msra.mxu0 0.0
    %473 = vmatprep.subr.mxu0 0.0
    %474 = vmatpush1.msra.mxu0 0.0
    %475 = vmatprep.subr.mxu0 0.0
    %476 = vmatpush1.msra.mxu0 0.0
    %477 = vmatprep.subr.mxu0 0.0
    %478 = vmatpush1.msra.mxu0 0.0
    %479 = vmatprep.subr.mxu0 0.0
    %480 = vmatpush1.msra.mxu0 0.0
    %481 = vmatprep.mubr.f32.mxu0 0.0
    %482 = vmatmul.mubr.f32.gmra.mrb[0].mxu0 %v406
    %v483 = vpop.f32.mrb[0].mxu0
    %v484 = vadd.f32 %v107, %v483
    %v485 = vpop.f32.mrb[0].mxu0
    %486 = vmatprep.mubr.f32.mxu0 0.0
    %487 = vmatmul.mubr.f32.gmra.mrb[0].mxu0 %v409
    %v488 = vpop.f32.mrb[0].mxu0
    %v489 = vadd.f32 %v107, %v488
    %v490 = vpop.f32.mrb[0].mxu0
    %491 = vmatprep.mubr.f32.mxu0 0.0
    %492 = vmatmul.mubr.f32.gmra.mrb[0].mxu0 %v412
    %v493 = vpop.f32.mrb[0].mxu0
    %v494 = vadd.f32 %v107, %v493
    %v495 = vpop.f32.mrb[0].mxu0
    %496 = vmatprep.mubr.f32.mxu0 0.0
    %497 = vmatmul.mubr.f32.gmra.mrb[0].mxu0 %v415
    %v498 = vpop.f32.mrb[0].mxu0
    %v499 = vadd.f32 %v107, %v498
    %v500 = vpop.f32.mrb[0].mxu0
    %501 = vdwg.mxu0
    %506 = vrot.lane.b32.xlu0 %v401, 96
    %v507 = vpop.permute.xlu0 %506
    %508 = vrot.lane.b32.xlu0 %v402, 96
    %v509 = vpop.permute.xlu0 %508
    %510 = vrot.lane.b32.xlu0 %v403, 96
    %v511 = vpop.permute.xlu0 %510
    %512 = vrot.lane.b32.xlu0 %v404, 96
    %v513 = vpop.permute.xlu0 %512
    %v514 = vsel %vm109, %v507, 0
    %v516 = vsel %vm109, %v509, 0
    %v518 = vsel %vm109, %v511, 0
    %v520 = vsel %vm109, %v513, 0
    %522 = vmatprep.subr.mxu0 0.0
    %523 = vmatpush1.msra.mxu0 %v97
    %524 = vmatprep.subr.mxu0 0.0
    %525 = vmatpush1.msra.mxu0 %v98
    %526 = vmatprep.subr.mxu0 0.0
    %527 = vmatpush1.msra.mxu0 %v99
    %528 = vmatprep.subr.mxu0 0.0
    %529 = vmatpush1.msra.mxu0 %v100
    %530 = vmatprep.subr.mxu0 0.0
    %531 = vmatpush1.msra.mxu0 0.0
    %532 = vmatprep.subr.mxu0 0.0
    %533 = vmatpush1.msra.mxu0 0.0
    %534 = vmatprep.subr.mxu0 0.0
    %535 = vmatpush1.msra.mxu0 0.0
    %536 = vmatprep.subr.mxu0 0.0
    %537 = vmatpush1.msra.mxu0 0.0
    %538 = vmatprep.subr.mxu0 0.0
    %539 = vmatpush1.msra.mxu0 0.0
    %540 = vmatprep.subr.mxu0 0.0
    %541 = vmatpush1.msra.mxu0 0.0
    %542 = vmatprep.subr.mxu0 0.0
    %543 = vmatpush1.msra.mxu0 0.0
    %544 = vmatprep.subr.mxu0 0.0
    %545 = vmatpush1.msra.mxu0 0.0
    %546 = vmatprep.subr.mxu0 0.0
    %547 = vmatpush1.msra.mxu0 0.0
    %548 = vmatprep.subr.mxu0 0.0
    %549 = vmatpush1.msra.mxu0 0.0
    %550 = vmatprep.subr.mxu0 0.0
    %551 = vmatpush1.msra.mxu0 0.0
    %552 = vmatprep.subr.mxu0 0.0
    %553 = vmatpush1.msra.mxu0 0.0
    %554 = vmatprep.subr.mxu0 0.0
    %555 = vmatpush1.msra.mxu0 0.0
    %556 = vmatprep.subr.mxu0 0.0
    %557 = vmatpush1.msra.mxu0 0.0
    %558 = vmatprep.subr.mxu0 0.0
    %559 = vmatpush1.msra.mxu0 0.0
    %560 = vmatprep.subr.mxu0 0.0
    %561 = vmatpush1.msra.mxu0 0.0
    %562 = vmatprep.subr.mxu0 0.0
    %563 = vmatpush1.msra.mxu0 0.0
    %564 = vmatprep.subr.mxu0 0.0
    %565 = vmatpush1.msra.mxu0 0.0
    %566 = vmatprep.subr.mxu0 0.0
    %567 = vmatpush1.msra.mxu0 0.0
    %568 = vmatprep.subr.mxu0 0.0
    %569 = vmatpush1.msra.mxu0 0.0
    %570 = vmatprep.subr.mxu0 0.0
    %571 = vmatpush1.msra.mxu0 0.0
    %572 = vmatprep.subr.mxu0 0.0
    %573 = vmatpush1.msra.mxu0 0.0
    %574 = vmatprep.subr.mxu0 0.0
    %575 = vmatpush1.msra.mxu0 0.0
    %576 = vmatprep.subr.mxu0 0.0
    %577 = vmatpush1.msra.mxu0 0.0
    %578 = vmatprep.subr.mxu0 0.0
    %579 = vmatpush1.msra.mxu0 0.0
    %580 = vmatprep.subr.mxu0 0.0
    %581 = vmatpush1.msra.mxu0 0.0
    %582 = vmatprep.subr.mxu0 0.0
    %583 = vmatpush1.msra.mxu0 0.0
    %584 = vmatprep.subr.mxu0 0.0
    %585 = vmatpush1.msra.mxu0 0.0
    %586 = vmatprep.mubr.f32.mxu0 0.0
    %587 = vmatmul.mubr.f32.gmra.mrb[0].mxu0 %v514
    %v588 = vpop.f32.mrb[0].mxu0
    %v589 = vadd.f32 %v211, %v588
    %v590 = vpop.f32.mrb[0].mxu0
    %591 = vmatprep.mubr.f32.mxu0 0.0
    %592 = vmatmul.mubr.f32.gmra.mrb[0].mxu0 %v516
    %v593 = vpop.f32.mrb[0].mxu0
    %v594 = vadd.f32 %v211, %v593
    %v595 = vpop.f32.mrb[0].mxu0
    %596 = vmatprep.mubr.f32.mxu0 0.0
    %597 = vmatmul.mubr.f32.gmra.mrb[0].mxu0 %v518
    %v598 = vpop.f32.mrb[0].mxu0
    %v599 = vadd.f32 %v211, %v598
    %v600 = vpop.f32.mrb[0].mxu0
    %601 = vmatprep.mubr.f32.mxu0 0.0
    %602 = vmatmul.mubr.f32.gmra.mrb[0].mxu0 %v520
    %v603 = vpop.f32.mrb[0].mxu0
    %v604 = vadd.f32 %v211, %v603
    %v605 = vpop.f32.mrb[0].mxu0
    %606 = vdwg.mxu0
    %v607 = vadd.f32 %v484, %v589
    %v608 = vadd.f32 %v489, %v594
    %v609 = vadd.f32 %v494, %v599
    %v610 = vadd.f32 %v499, %v604
    %v611 = vxor.u32 %v607, 2147483648
    %v612 = vxor.u32 %v608, 2147483648
    %v613 = vxor.u32 %v609, 2147483648
    %v614 = vxor.u32 %v610, 2147483648
    %v615 = vmul.f32 %v611, 1.442695
    %v616 = vpow.pop %v615
    %v617 = vmul.f32 %v612, 1.442695
    %v618 = vpow.pop %v617
    %v619 = vmul.f32 %v613, 1.442695
    %v620 = vpow.pop %v619
    %v621 = vmul.f32 %v614, 1.442695
    %v622 = vpow.pop %v621
    %v623 = vadd.f32 %v616, 1.0
    %v624 = vadd.f32 %v618, 1.0
    %v625 = vadd.f32 %v620, 1.0
    %v626 = vadd.f32 %v622, 1.0
    %v627 = vrcp.pop %v623
    %v628 = vmul.f32 1.0, %v627
    %v629 = vrcp.pop %v624
    %v630 = vmul.f32 1.0, %v629
    %v631 = vrcp.pop %v625
    %v632 = vmul.f32 1.0, %v631
    %v633 = vrcp.pop %v626
    %v634 = vmul.f32 1.0, %v633
    %639 = vrot.lane.b32.xlu0 %v589, 64
    %v640 = vpop.permute.xlu0 %639
    %641 = vrot.lane.b32.xlu0 %v594, 64
    %v642 = vpop.permute.xlu0 %641
    %643 = vrot.lane.b32.xlu0 %v599, 64
    %v644 = vpop.permute.xlu0 %643
    %645 = vrot.lane.b32.xlu0 %v604, 64
    %v646 = vpop.permute.xlu0 %645
    %v651 = vmul.f32 %v628, %v640
    %v652 = vmul.f32 %v630, %v642
    %v653 = vmul.f32 %v632, %v644
    %v654 = vmul.f32 %v634, %v646
    %659 = vrot.lane.b32.xlu0 %v651, 64
    %v660 = vpop.permute.xlu0 %659
    %661 = vrot.lane.b32.xlu0 %v652, 64
    %v662 = vpop.permute.xlu0 %661
    %663 = vrot.lane.b32.xlu0 %v653, 64
    %v664 = vpop.permute.xlu0 %663
    %665 = vrot.lane.b32.xlu0 %v654, 64
    %v666 = vpop.permute.xlu0 %665
    %v671 = vadd.f32 %v484, %v660
    %v672 = vadd.f32 %v489, %v662
    %v673 = vadd.f32 %v494, %v664
    %v674 = vadd.f32 %v499, %v666
    %v675 = vtanh.pop %v671
    %v676 = vtanh.pop %v672
    %v677 = vtanh.pop %v673
    %v678 = vtanh.pop %v674
    %v679 = vsub.f32 1.0, %v628
    %v680 = vsub.f32 1.0, %v630
    %v681 = vsub.f32 1.0, %v632
    %v682 = vsub.f32 1.0, %v634
    %687 = vrot.lane.b32.xlu0 %v675, 96
    %v688 = vpop.permute.xlu0 %687
    %689 = vrot.lane.b32.xlu0 %v676, 96
    %v690 = vpop.permute.xlu0 %689
    %691 = vrot.lane.b32.xlu0 %v677, 96
    %v692 = vpop.permute.xlu0 %691
    %693 = vrot.lane.b32.xlu0 %v678, 96
    %v694 = vpop.permute.xlu0 %693
    %v699 = vmul.f32 %v679, %v688
    %v700 = vmul.f32 %v680, %v690
    %v701 = vmul.f32 %v681, %v692
    %v702 = vmul.f32 %v682, %v694
    %v703 = vmul.f32 %v628, %v401
    %v704 = vmul.f32 %v630, %v402
    %v705 = vmul.f32 %v632, %v403
    %v706 = vmul.f32 %v634, %v404
    %v707 = vadd.f32 %v699, %v703
    %v708 = vadd.f32 %v700, %v704
    %v709 = vadd.f32 %v701, %v705
    %v710 = vadd.f32 %v702, %v706
    %v711 = vld [vmem:[%s8] sm:$0xff]
    %v712 = vld [vmem:[%s8 + $0x8] sm:$0xff]
    %v713 = vld [vmem:[%s8 + $0x10] sm:$0xff]
    %v714 = vld [vmem:[%s8 + $0x18] sm:$0xff]
    %v715 = vld [vmem:[%s9] sm:$0xff]
    %v716 = vld [vmem:[%s9 + $0x8] sm:$0xff]
    %v717 = vld [vmem:[%s9 + $0x10] sm:$0xff]
    %v718 = vld [vmem:[%s9 + $0x18] sm:$0xff]
    %v719 = vld [vmem:[%s10] sm:$0x1]
    %v720 = vld [vmem:[%s11] sm:$0x1]
    %v722 = vlaneseq
    %v723 = vshrl.u32 %v722, 7
    %v724 = vsub.s32 0, %v723
    %v725 = vrot.slane %v719, %v724
    %727 = vmatprep.subr.mxu0 0.0
    %728 = vmatpush1.msra.mxu0 %v711
    %729 = vmatprep.subr.mxu0 0.0
    %730 = vmatpush1.msra.mxu0 %v712
    %731 = vmatprep.subr.mxu0 0.0
    %732 = vmatpush1.msra.mxu0 %v713
    %733 = vmatprep.subr.mxu0 0.0
    %734 = vmatpush1.msra.mxu0 %v714
    %735 = vmatprep.subr.mxu0 0.0
    %736 = vmatpush1.msra.mxu0 0.0
    %737 = vmatprep.subr.mxu0 0.0
    %738 = vmatpush1.msra.mxu0 0.0
    %739 = vmatprep.subr.mxu0 0.0
    %740 = vmatpush1.msra.mxu0 0.0
    %741 = vmatprep.subr.mxu0 0.0
    %742 = vmatpush1.msra.mxu0 0.0
    %743 = vmatprep.subr.mxu0 0.0
    %744 = vmatpush1.msra.mxu0 0.0
    %745 = vmatprep.subr.mxu0 0.0
    %746 = vmatpush1.msra.mxu0 0.0
    %747 = vmatprep.subr.mxu0 0.0
    %748 = vmatpush1.msra.mxu0 0.0
    %749 = vmatprep.subr.mxu0 0.0
    %750 = vmatpush1.msra.mxu0 0.0
    %751 = vmatprep.subr.mxu0 0.0
    %752 = vmatpush1.msra.mxu0 0.0
    %753 = vmatprep.subr.mxu0 0.0
    %754 = vmatpush1.msra.mxu0 0.0
    %755 = vmatprep.subr.mxu0 0.0
    %756 = vmatpush1.msra.mxu0 0.0
    %757 = vmatprep.subr.mxu0 0.0
    %758 = vmatpush1.msra.mxu0 0.0
    %759 = vmatprep.subr.mxu0 0.0
    %760 = vmatpush1.msra.mxu0 0.0
    %761 = vmatprep.subr.mxu0 0.0
    %762 = vmatpush1.msra.mxu0 0.0
    %763 = vmatprep.subr.mxu0 0.0
    %764 = vmatpush1.msra.mxu0 0.0
    %765 = vmatprep.subr.mxu0 0.0
    %766 = vmatpush1.msra.mxu0 0.0
    %767 = vmatprep.subr.mxu0 0.0
    %768 = vmatpush1.msra.mxu0 0.0
    %769 = vmatprep.subr.mxu0 0.0
    %770 = vmatpush1.msra.mxu0 0.0
    %771 = vmatprep.subr.mxu0 0.0
    %772 = vmatpush1.msra.mxu0 0.0
    %773 = vmatprep.subr.mxu0 0.0
    %774 = vmatpush1.msra.mxu0 0.0
    %775 = vmatprep.subr.mxu0 0.0
    %776 = vmatpush1.msra.mxu0 0.0
    %777 = vmatprep.subr.mxu0 0.0
    %778 = vmatpush1.msra.mxu0 0.0
    %779 = vmatprep.subr.mxu0 0.0
    %780 = vmatpush1.msra.mxu0 0.0
    %781 = vmatprep.subr.mxu0 0.0
    %782 = vmatpush1.msra.mxu0 0.0
    %783 = vmatprep.subr.mxu0 0.0
    %784 = vmatpush1.msra.mxu0 0.0
    %785 = vmatprep.subr.mxu0 0.0
    %786 = vmatpush1.msra.mxu0 0.0
    %787 = vmatprep.subr.mxu0 0.0
    %788 = vmatpush1.msra.mxu0 0.0
    %789 = vmatprep.subr.mxu0 0.0
    %790 = vmatpush1.msra.mxu0 0.0
    %791 = vmatprep.mubr.f32.mxu0 0.0
    %792 = vmatmul.mubr.f32.gmra.mrb[0].mxu0 %v406
    %v793 = vpop.f32.mrb[0].mxu0
    %v794 = vadd.f32 %v725, %v793
    %v795 = vpop.f32.mrb[0].mxu0
    %796 = vmatprep.mubr.f32.mxu0 0.0
    %797 = vmatmul.mubr.f32.gmra.mrb[0].mxu0 %v409
    %v798 = vpop.f32.mrb[0].mxu0
    %v799 = vadd.f32 %v725, %v798
    %v800 = vpop.f32.mrb[0].mxu0
    %801 = vmatprep.mubr.f32.mxu0 0.0
    %802 = vmatmul.mubr.f32.gmra.mrb[0].mxu0 %v412
    %v803 = vpop.f32.mrb[0].mxu0
    %v804 = vadd.f32 %v725, %v803
    %v805 = vpop.f32.mrb[0].mxu0
    %806 = vmatprep.mubr.f32.mxu0 0.0
    %807 = vmatmul.mubr.f32.gmra.mrb[0].mxu0 %v415
    %v808 = vpop.f32.mrb[0].mxu0
    %v809 = vadd.f32 %v725, %v808
    %v810 = vpop.f32.mrb[0].mxu0
    %811 = vdwg.mxu0
    %v813 = vlaneseq
    %v814 = vshrl.u32 %v813, 7
    %v815 = vsub.s32 0, %v814
    %v816 = vrot.slane %v720, %v815
    %818 = vmatprep.subr.mxu0 0.0
    %819 = vmatpush1.msra.mxu0 %v715
    %820 = vmatprep.subr.mxu0 0.0
    %821 = vmatpush1.msra.mxu0 %v716
    %822 = vmatprep.subr.mxu0 0.0
    %823 = vmatpush1.msra.mxu0 %v717
    %824 = vmatprep.subr.mxu0 0.0
    %825 = vmatpush1.msra.mxu0 %v718
    %826 = vmatprep.subr.mxu0 0.0
    %827 = vmatpush1.msra.mxu0 0.0
    %828 = vmatprep.subr.mxu0 0.0
    %829 = vmatpush1.msra.mxu0 0.0
    %830 = vmatprep.subr.mxu0 0.0
    %831 = vmatpush1.msra.mxu0 0.0
    %832 = vmatprep.subr.mxu0 0.0
    %833 = vmatpush1.msra.mxu0 0.0
    %834 = vmatprep.subr.mxu0 0.0
    %835 = vmatpush1.msra.mxu0 0.0
    %836 = vmatprep.subr.mxu0 0.0
    %837 = vmatpush1.msra.mxu0 0.0
    %838 = vmatprep.subr.mxu0 0.0
    %839 = vmatpush1.msra.mxu0 0.0
    %840 = vmatprep.subr.mxu0 0.0
    %841 = vmatpush1.msra.mxu0 0.0
    %842 = vmatprep.subr.mxu0 0.0
    %843 = vmatpush1.msra.mxu0 0.0
    %844 = vmatprep.subr.mxu0 0.0
    %845 = vmatpush1.msra.mxu0 0.0
    %846 = vmatprep.subr.mxu0 0.0
    %847 = vmatpush1.msra.mxu0 0.0
    %848 = vmatprep.subr.mxu0 0.0
    %849 = vmatpush1.msra.mxu0 0.0
    %850 = vmatprep.subr.mxu0 0.0
    %851 = vmatpush1.msra.mxu0 0.0
    %852 = vmatprep.subr.mxu0 0.0
    %853 = vmatpush1.msra.mxu0 0.0
    %854 = vmatprep.subr.mxu0 0.0
    %855 = vmatpush1.msra.mxu0 0.0
    %856 = vmatprep.subr.mxu0 0.0
    %857 = vmatpush1.msra.mxu0 0.0
    %858 = vmatprep.subr.mxu0 0.0
    %859 = vmatpush1.msra.mxu0 0.0
    %860 = vmatprep.subr.mxu0 0.0
    %861 = vmatpush1.msra.mxu0 0.0
    %862 = vmatprep.subr.mxu0 0.0
    %863 = vmatpush1.msra.mxu0 0.0
    %864 = vmatprep.subr.mxu0 0.0
    %865 = vmatpush1.msra.mxu0 0.0
    %866 = vmatprep.subr.mxu0 0.0
    %867 = vmatpush1.msra.mxu0 0.0
    %868 = vmatprep.subr.mxu0 0.0
    %869 = vmatpush1.msra.mxu0 0.0
    %870 = vmatprep.subr.mxu0 0.0
    %871 = vmatpush1.msra.mxu0 0.0
    %872 = vmatprep.subr.mxu0 0.0
    %873 = vmatpush1.msra.mxu0 0.0
    %874 = vmatprep.subr.mxu0 0.0
    %875 = vmatpush1.msra.mxu0 0.0
    %876 = vmatprep.subr.mxu0 0.0
    %877 = vmatpush1.msra.mxu0 0.0
    %878 = vmatprep.subr.mxu0 0.0
    %879 = vmatpush1.msra.mxu0 0.0
    %880 = vmatprep.subr.mxu0 0.0
    %881 = vmatpush1.msra.mxu0 0.0
    %882 = vmatprep.mubr.f32.mxu0 0.0
    %883 = vmatmul.mubr.f32.gmra.mrb[0].mxu0 %v214
    %v884 = vpop.f32.mrb[0].mxu0
    %v885 = vadd.f32 %v816, %v884
    %v886 = vpop.f32.mrb[0].mxu0
    %887 = vmatprep.mubr.f32.mxu0 0.0
    %888 = vmatmul.mubr.f32.gmra.mrb[0].mxu0 %v214
    %v889 = vpop.f32.mrb[0].mxu0
    %v890 = vadd.f32 %v816, %v889
    %v891 = vpop.f32.mrb[0].mxu0
    %892 = vmatprep.mubr.f32.mxu0 0.0
    %893 = vmatmul.mubr.f32.gmra.mrb[0].mxu0 %v214
    %v894 = vpop.f32.mrb[0].mxu0
    %v895 = vadd.f32 %v816, %v894
    %v896 = vpop.f32.mrb[0].mxu0
    %897 = vmatprep.mubr.f32.mxu0 0.0
    %898 = vmatmul.mubr.f32.gmra.mrb[0].mxu0 %v214
    %v899 = vpop.f32.mrb[0].mxu0
    %v900 = vadd.f32 %v816, %v899
    %v901 = vpop.f32.mrb[0].mxu0
    %902 = vdwg.mxu0
    %v903 = vadd.f32 %v794, %v885
    %v904 = vadd.f32 %v799, %v890
    %v905 = vadd.f32 %v804, %v895
    %v906 = vadd.f32 %v809, %v900
    %v907 = vxor.u32 %v903, 2147483648
    %v908 = vxor.u32 %v904, 2147483648
    %v909 = vxor.u32 %v905, 2147483648
    %v910 = vxor.u32 %v906, 2147483648
    %v911 = vmul.f32 %v907, 1.442695
    %v912 = vpow.pop %v911
    %v913 = vmul.f32 %v908, 1.442695
    %v914 = vpow.pop %v913
    %v915 = vmul.f32 %v909, 1.442695
    %v916 = vpow.pop %v915
    %v917 = vmul.f32 %v910, 1.442695
    %v918 = vpow.pop %v917
    %v919 = vadd.f32 %v912, 1.0
    %v920 = vadd.f32 %v914, 1.0
    %v921 = vadd.f32 %v916, 1.0
    %v922 = vadd.f32 %v918, 1.0
    %v923 = vrcp.pop %v919
    %v924 = vmul.f32 1.0, %v923
    %v925 = vrcp.pop %v920
    %v926 = vmul.f32 1.0, %v925
    %v927 = vrcp.pop %v921
    %v928 = vmul.f32 1.0, %v927
    %v929 = vrcp.pop %v922
    %v930 = vmul.f32 1.0, %v929
    %935 = vrot.lane.b32.xlu0 %v885, 64
    %v936 = vpop.permute.xlu0 %935
    %937 = vrot.lane.b32.xlu0 %v890, 64
    %v938 = vpop.permute.xlu0 %937
    %939 = vrot.lane.b32.xlu0 %v895, 64
    %v940 = vpop.permute.xlu0 %939
    %941 = vrot.lane.b32.xlu0 %v900, 64
    %v942 = vpop.permute.xlu0 %941
    %v947 = vmul.f32 %v924, %v936
    %v948 = vmul.f32 %v926, %v938
    %v949 = vmul.f32 %v928, %v940
    %v950 = vmul.f32 %v930, %v942
    %955 = vrot.lane.b32.xlu0 %v947, 64
    %v956 = vpop.permute.xlu0 %955
    %957 = vrot.lane.b32.xlu0 %v948, 64
    %v958 = vpop.permute.xlu0 %957
    %959 = vrot.lane.b32.xlu0 %v949, 64
    %v960 = vpop.permute.xlu0 %959
    %961 = vrot.lane.b32.xlu0 %v950, 64
    %v962 = vpop.permute.xlu0 %961
    %v967 = vadd.f32 %v794, %v956
    %v968 = vadd.f32 %v799, %v958
    %v969 = vadd.f32 %v804, %v960
    %v970 = vadd.f32 %v809, %v962
    %v971 = vtanh.pop %v967
    %v972 = vtanh.pop %v968
    %v973 = vtanh.pop %v969
    %v974 = vtanh.pop %v970
    %v975 = vsub.f32 1.0, %v924
    %v976 = vsub.f32 1.0, %v926
    %v977 = vsub.f32 1.0, %v928
    %v978 = vsub.f32 1.0, %v930
    %983 = vrot.lane.b32.xlu0 %v971, 96
    %v984 = vpop.permute.xlu0 %983
    %985 = vrot.lane.b32.xlu0 %v972, 96
    %v986 = vpop.permute.xlu0 %985
    %987 = vrot.lane.b32.xlu0 %v973, 96
    %v988 = vpop.permute.xlu0 %987
    %989 = vrot.lane.b32.xlu0 %v974, 96
    %v990 = vpop.permute.xlu0 %989
    %v995 = vmul.f32 %v975, %v984
    %v996 = vmul.f32 %v976, %v986
    %v997 = vmul.f32 %v977, %v988
    %v998 = vmul.f32 %v978, %v990
    %v999 = vmul.f32 %v924, 0.0
    %v1000 = vmul.f32 %v926, 0.0
    %v1001 = vmul.f32 %v928, 0.0
    %v1002 = vmul.f32 %v930, 0.0
    %v1003 = vadd.f32 %v995, %v999
    %v1004 = vadd.f32 %v996, %v1000
    %v1005 = vadd.f32 %v997, %v1001
    %v1006 = vadd.f32 %v998, %v1002
    %1007 = vmatprep.subr.mxu0 0.0
    %1008 = vmatpush1.msra.mxu0 %v711
    %1009 = vmatprep.subr.mxu0 0.0
    %1010 = vmatpush1.msra.mxu0 %v712
    %1011 = vmatprep.subr.mxu0 0.0
    %1012 = vmatpush1.msra.mxu0 %v713
    %1013 = vmatprep.subr.mxu0 0.0
    %1014 = vmatpush1.msra.mxu0 %v714
    %1015 = vmatprep.subr.mxu0 0.0
    %1016 = vmatpush1.msra.mxu0 0.0
    %1017 = vmatprep.subr.mxu0 0.0
    %1018 = vmatpush1.msra.mxu0 0.0
    %1019 = vmatprep.subr.mxu0 0.0
    %1020 = vmatpush1.msra.mxu0 0.0
    %1021 = vmatprep.subr.mxu0 0.0
    %1022 = vmatpush1.msra.mxu0 0.0
    %1023 = vmatprep.subr.mxu0 0.0
    %1024 = vmatpush1.msra.mxu0 0.0
    %1025 = vmatprep.subr.mxu0 0.0
    %1026 = vmatpush1.msra.mxu0 0.0
    %1027 = vmatprep.subr.mxu0 0.0
    %1028 = vmatpush1.msra.mxu0 0.0
    %1029 = vmatprep.subr.mxu0 0.0
    %1030 = vmatpush1.msra.mxu0 0.0
    %1031 = vmatprep.subr.mxu0 0.0
    %1032 = vmatpush1.msra.mxu0 0.0
    %1033 = vmatprep.subr.mxu0 0.0
    %1034 = vmatpush1.msra.mxu0 0.0
    %1035 = vmatprep.subr.mxu0 0.0
    %1036 = vmatpush1.msra.mxu0 0.0
    %1037 = vmatprep.subr.mxu0 0.0
    %1038 = vmatpush1.msra.mxu0 0.0
    %1039 = vmatprep.subr.mxu0 0.0
    %1040 = vmatpush1.msra.mxu0 0.0
    %1041 = vmatprep.subr.mxu0 0.0
    %1042 = vmatpush1.msra.mxu0 0.0
    %1043 = vmatprep.subr.mxu0 0.0
    %1044 = vmatpush1.msra.mxu0 0.0
    %1045 = vmatprep.subr.mxu0 0.0
    %1046 = vmatpush1.msra.mxu0 0.0
    %1047 = vmatprep.subr.mxu0 0.0
    %1048 = vmatpush1.msra.mxu0 0.0
    %1049 = vmatprep.subr.mxu0 0.0
    %1050 = vmatpush1.msra.mxu0 0.0
    %1051 = vmatprep.subr.mxu0 0.0
    %1052 = vmatpush1.msra.mxu0 0.0
    %1053 = vmatprep.subr.mxu0 0.0
    %1054 = vmatpush1.msra.mxu0 0.0
    %1055 = vmatprep.subr.mxu0 0.0
    %1056 = vmatpush1.msra.mxu0 0.0
    %1057 = vmatprep.subr.mxu0 0.0
    %1058 = vmatpush1.msra.mxu0 0.0
    %1059 = vmatprep.subr.mxu0 0.0
    %1060 = vmatpush1.msra.mxu0 0.0
    %1061 = vmatprep.subr.mxu0 0.0
    %1062 = vmatpush1.msra.mxu0 0.0
    %1063 = vmatprep.subr.mxu0 0.0
    %1064 = vmatpush1.msra.mxu0 0.0
    %1065 = vmatprep.subr.mxu0 0.0
    %1066 = vmatpush1.msra.mxu0 0.0
    %1067 = vmatprep.subr.mxu0 0.0
    %1068 = vmatpush1.msra.mxu0 0.0
    %1069 = vmatprep.subr.mxu0 0.0
    %1070 = vmatpush1.msra.mxu0 0.0
    %1071 = vmatprep.mubr.f32.mxu0 0.0
    %1072 = vmatmul.mubr.f32.gmra.mrb[0].mxu0 %v111
    %v1073 = vpop.f32.mrb[0].mxu0
    %v1074 = vadd.f32 %v725, %v1073
    %v1075 = vpop.f32.mrb[0].mxu0
    %1076 = vmatprep.mubr.f32.mxu0 0.0
    %1077 = vmatmul.mubr.f32.gmra.mrb[0].mxu0 %v114
    %v1078 = vpop.f32.mrb[0].mxu0
    %v1079 = vadd.f32 %v725, %v1078
    %v1080 = vpop.f32.mrb[0].mxu0
    %1081 = vmatprep.mubr.f32.mxu0 0.0
    %1082 = vmatmul.mubr.f32.gmra.mrb[0].mxu0 %v117
    %v1083 = vpop.f32.mrb[0].mxu0
    %v1084 = vadd.f32 %v725, %v1083
    %v1085 = vpop.f32.mrb[0].mxu0
    %1086 = vmatprep.mubr.f32.mxu0 0.0
    %1087 = vmatmul.mubr.f32.gmra.mrb[0].mxu0 %v120
    %v1088 = vpop.f32.mrb[0].mxu0
    %v1089 = vadd.f32 %v725, %v1088
    %v1090 = vpop.f32.mrb[0].mxu0
    %1091 = vdwg.mxu0
    %1096 = vrot.lane.b32.xlu0 %v1003, 96
    %v1097 = vpop.permute.xlu0 %1096
    %1098 = vrot.lane.b32.xlu0 %v1004, 96
    %v1099 = vpop.permute.xlu0 %1098
    %1100 = vrot.lane.b32.xlu0 %v1005, 96
    %v1101 = vpop.permute.xlu0 %1100
    %1102 = vrot.lane.b32.xlu0 %v1006, 96
    %v1103 = vpop.permute.xlu0 %1102
    %v1104 = vsel %vm109, %v1097, 0
    %v1106 = vsel %vm109, %v1099, 0
    %v1108 = vsel %vm109, %v1101, 0
    %v1110 = vsel %vm109, %v1103, 0
    %1112 = vmatprep.subr.mxu0 0.0
    %1113 = vmatpush1.msra.mxu0 %v715
    %1114 = vmatprep.subr.mxu0 0.0
    %1115 = vmatpush1.msra.mxu0 %v716
    %1116 = vmatprep.subr.mxu0 0.0
    %1117 = vmatpush1.msra.mxu0 %v717
    %1118 = vmatprep.subr.mxu0 0.0
    %1119 = vmatpush1.msra.mxu0 %v718
    %1120 = vmatprep.subr.mxu0 0.0
    %1121 = vmatpush1.msra.mxu0 0.0
    %1122 = vmatprep.subr.mxu0 0.0
    %1123 = vmatpush1.msra.mxu0 0.0
    %1124 = vmatprep.subr.mxu0 0.0
    %1125 = vmatpush1.msra.mxu0 0.0
    %1126 = vmatprep.subr.mxu0 0.0
    %1127 = vmatpush1.msra.mxu0 0.0
    %1128 = vmatprep.subr.mxu0 0.0
    %1129 = vmatpush1.msra.mxu0 0.0
    %1130 = vmatprep.subr.mxu0 0.0
    %1131 = vmatpush1.msra.mxu0 0.0
    %1132 = vmatprep.subr.mxu0 0.0
    %1133 = vmatpush1.msra.mxu0 0.0
    %1134 = vmatprep.subr.mxu0 0.0
    %1135 = vmatpush1.msra.mxu0 0.0
    %1136 = vmatprep.subr.mxu0 0.0
    %1137 = vmatpush1.msra.mxu0 0.0
    %1138 = vmatprep.subr.mxu0 0.0
    %1139 = vmatpush1.msra.mxu0 0.0
    %1140 = vmatprep.subr.mxu0 0.0
    %1141 = vmatpush1.msra.mxu0 0.0
    %1142 = vmatprep.subr.mxu0 0.0
    %1143 = vmatpush1.msra.mxu0 0.0
    %1144 = vmatprep.subr.mxu0 0.0
    %1145 = vmatpush1.msra.mxu0 0.0
    %1146 = vmatprep.subr.mxu0 0.0
    %1147 = vmatpush1.msra.mxu0 0.0
    %1148 = vmatprep.subr.mxu0 0.0
    %1149 = vmatpush1.msra.mxu0 0.0
    %1150 = vmatprep.subr.mxu0 0.0
    %1151 = vmatpush1.msra.mxu0 0.0
    %1152 = vmatprep.subr.mxu0 0.0
    %1153 = vmatpush1.msra.mxu0 0.0
    %1154 = vmatprep.subr.mxu0 0.0
    %1155 = vmatpush1.msra.mxu0 0.0
    %1156 = vmatprep.subr.mxu0 0.0
    %1157 = vmatpush1.msra.mxu0 0.0
    %1158 = vmatprep.subr.mxu0 0.0
    %1159 = vmatpush1.msra.mxu0 0.0
    %1160 = vmatprep.subr.mxu0 0.0
    %1161 = vmatpush1.msra.mxu0 0.0
    %1162 = vmatprep.subr.mxu0 0.0
    %1163 = vmatpush1.msra.mxu0 0.0
    %1164 = vmatprep.subr.mxu0 0.0
    %1165 = vmatpush1.msra.mxu0 0.0
    %1166 = vmatprep.subr.mxu0 0.0
    %1167 = vmatpush1.msra.mxu0 0.0
    %1168 = vmatprep.subr.mxu0 0.0
    %1169 = vmatpush1.msra.mxu0 0.0
    %1170 = vmatprep.subr.mxu0 0.0
    %1171 = vmatpush1.msra.mxu0 0.0
    %1172 = vmatprep.subr.mxu0 0.0
    %1173 = vmatpush1.msra.mxu0 0.0
    %1174 = vmatprep.subr.mxu0 0.0
    %1175 = vmatpush1.msra.mxu0 0.0
    %1176 = vmatprep.mubr.f32.mxu0 0.0
    %1177 = vmatmul.mubr.f32.gmra.mrb[0].mxu0 %v1104
    %v1178 = vpop.f32.mrb[0].mxu0
    %v1179 = vadd.f32 %v816, %v1178
    %v1180 = vpop.f32.mrb[0].mxu0
    %1181 = vmatprep.mubr.f32.mxu0 0.0
    %1182 = vmatmul.mubr.f32.gmra.mrb[0].mxu0 %v1106
    %v1183 = vpop.f32.mrb[0].mxu0
    %v1184 = vadd.f32 %v816, %v1183
    %v1185 = vpop.f32.mrb[0].mxu0
    %1186 = vmatprep.mubr.f32.mxu0 0.0
    %1187 = vmatmul.mubr.f32.gmra.mrb[0].mxu0 %v1108
    %v1188 = vpop.f32.mrb[0].mxu0
    %v1189 = vadd.f32 %v816, %v1188
    %v1190 = vpop.f32.mrb[0].mxu0
    %1191 = vmatprep.mubr.f32.mxu0 0.0
    %1192 = vmatmul.mubr.f32.gmra.mrb[0].mxu0 %v1110
    %v1193 = vpop.f32.mrb[0].mxu0
    %v1194 = vadd.f32 %v816, %v1193
    %v1195 = vpop.f32.mrb[0].mxu0
    %1196 = vdwg.mxu0
    %v1197 = vadd.f32 %v1074, %v1179
    %v1198 = vadd.f32 %v1079, %v1184
    %v1199 = vadd.f32 %v1084, %v1189
    %v1200 = vadd.f32 %v1089, %v1194
    %v1201 = vxor.u32 %v1197, 2147483648
    %v1202 = vxor.u32 %v1198, 2147483648
    %v1203 = vxor.u32 %v1199, 2147483648
    %v1204 = vxor.u32 %v1200, 2147483648
    %v1205 = vmul.f32 %v1201, 1.442695
    %v1206 = vpow.pop %v1205
    %v1207 = vmul.f32 %v1202, 1.442695
    %v1208 = vpow.pop %v1207
    %v1209 = vmul.f32 %v1203, 1.442695
    %v1210 = vpow.pop %v1209
    %v1211 = vmul.f32 %v1204, 1.442695
    %v1212 = vpow.pop %v1211
    %v1213 = vadd.f32 %v1206, 1.0
    %v1214 = vadd.f32 %v1208, 1.0
    %v1215 = vadd.f32 %v1210, 1.0
    %v1216 = vadd.f32 %v1212, 1.0
    %v1217 = vrcp.pop %v1213
    %v1218 = vmul.f32 1.0, %v1217
    %v1219 = vrcp.pop %v1214
    %v1220 = vmul.f32 1.0, %v1219
    %v1221 = vrcp.pop %v1215
    %v1222 = vmul.f32 1.0, %v1221
    %v1223 = vrcp.pop %v1216
    %v1224 = vmul.f32 1.0, %v1223
    %1229 = vrot.lane.b32.xlu0 %v1179, 64
    %v1230 = vpop.permute.xlu0 %1229
    %1231 = vrot.lane.b32.xlu0 %v1184, 64
    %v1232 = vpop.permute.xlu0 %1231
    %1233 = vrot.lane.b32.xlu0 %v1189, 64
    %v1234 = vpop.permute.xlu0 %1233
    %1235 = vrot.lane.b32.xlu0 %v1194, 64
    %v1236 = vpop.permute.xlu0 %1235
    %v1241 = vmul.f32 %v1218, %v1230
    %v1242 = vmul.f32 %v1220, %v1232
    %v1243 = vmul.f32 %v1222, %v1234
    %v1244 = vmul.f32 %v1224, %v1236
    %1249 = vrot.lane.b32.xlu0 %v1241, 64
    %v1250 = vpop.permute.xlu0 %1249
    %1251 = vrot.lane.b32.xlu0 %v1242, 64
    %v1252 = vpop.permute.xlu0 %1251
    %1253 = vrot.lane.b32.xlu0 %v1243, 64
    %v1254 = vpop.permute.xlu0 %1253
    %1255 = vrot.lane.b32.xlu0 %v1244, 64
    %v1256 = vpop.permute.xlu0 %1255
    %v1261 = vadd.f32 %v1074, %v1250
    %v1262 = vadd.f32 %v1079, %v1252
    %v1263 = vadd.f32 %v1084, %v1254
    %v1264 = vadd.f32 %v1089, %v1256
    %v1265 = vtanh.pop %v1261
    %v1266 = vtanh.pop %v1262
    %v1267 = vtanh.pop %v1263
    %v1268 = vtanh.pop %v1264
    %v1269 = vsub.f32 1.0, %v1218
    %v1270 = vsub.f32 1.0, %v1220
    %v1271 = vsub.f32 1.0, %v1222
    %v1272 = vsub.f32 1.0, %v1224
    %1277 = vrot.lane.b32.xlu0 %v1265, 96
    %v1278 = vpop.permute.xlu0 %1277
    %1279 = vrot.lane.b32.xlu0 %v1266, 96
    %v1280 = vpop.permute.xlu0 %1279
    %1281 = vrot.lane.b32.xlu0 %v1267, 96
    %v1282 = vpop.permute.xlu0 %1281
    %1283 = vrot.lane.b32.xlu0 %v1268, 96
    %v1284 = vpop.permute.xlu0 %1283
    %v1289 = vmul.f32 %v1269, %v1278
    %v1290 = vmul.f32 %v1270, %v1280
    %v1291 = vmul.f32 %v1271, %v1282
    %v1292 = vmul.f32 %v1272, %v1284
    %v1293 = vmul.f32 %v1218, %v1003
    %v1294 = vmul.f32 %v1220, %v1004
    %v1295 = vmul.f32 %v1222, %v1005
    %v1296 = vmul.f32 %v1224, %v1006
    %v1297 = vadd.f32 %v1289, %v1293
    %v1298 = vadd.f32 %v1290, %v1294
    %v1299 = vadd.f32 %v1291, %v1295
    %v1300 = vadd.f32 %v1292, %v1296
    %v1301 = vld [vmem:[%s12] sm:$0xff]
    %v1302 = vld [vmem:[%s12 + $0x8] sm:$0xff]
    %v1303 = vld [vmem:[%s12 + $0x10] sm:$0xff]
    %v1304 = vld [vmem:[%s12 + $0x18] sm:$0xff]
    %v1305 = vld [vmem:[%s12 + $0x20] sm:$0xff]
    %v1306 = vld [vmem:[%s12 + $0x28] sm:$0xff]
    %v1307 = vld [vmem:[%s12 + $0x30] sm:$0xff]
    %v1308 = vld [vmem:[%s12 + $0x38] sm:$0xff]
    %v1309 = vld [vmem:[%s13] sm:$0xff]
    %v1310 = vld [vmem:[%s14] sm:$0xff]
    %v1311 = vld [vmem:[%s15] sm:$0xff]
    %v1312 = vld [vmem:[%s15 + $0x8] sm:$0xff]
    %v1313 = vld [vmem:[%s15 + $0x10] sm:$0x1]
    %v1314 = vld [vmem:[%s15 + $0x18] sm:$0x1]
    %v1315 = vld [vmem:[%s16] sm:$0xff]
    %v1316 = vld [vmem:[%s16 + $0x8] sm:$0xff]
    %v1317 = vld [vmem:[%s16 + $0x10] sm:$0xff]
    %v1318 = vld [vmem:[%s16 + $0x18] sm:$0xff]
    %v1319 = vld [vmem:[%s17] sm:$0xff]
    %v1320 = vld [vmem:[%s17 + $0x8] sm:$0xff]
    %v1321 = vld [vmem:[%s17 + $0x10] sm:$0xff]
    %v1322 = vld [vmem:[%s17 + $0x18] sm:$0xff]
    %v1323 = vld [vmem:[%s18] sm:$0xff]
    %v1324 = vld [vmem:[%s18 + $0x8] sm:$0xff]
    %v1325 = vld [vmem:[%s18 + $0x10] sm:$0xff]
    %v1326 = vld [vmem:[%s18 + $0x18] sm:$0xff]
    %v1327 = vld [vmem:[%s18 + $0x20] sm:$0xff]
    %v1328 = vld [vmem:[%s18 + $0x28] sm:$0xff]
    %v1329 = vld [vmem:[%s18 + $0x30] sm:$0xff]
    %v1330 = vld [vmem:[%s18 + $0x38] sm:$0xff]
    %v1331 = vld [vmem:[%s18 + $0x40] sm:$0xff]
    %v1332 = vld [vmem:[%s18 + $0x48] sm:$0xff]
    %v1333 = vld [vmem:[%s18 + $0x50] sm:$0xff]
    %v1334 = vld [vmem:[%s18 + $0x58] sm:$0xff]
    %v1335 = vld [vmem:[%s18 + $0x60] sm:$0xff]
    %v1336 = vld [vmem:[%s18 + $0x68] sm:$0xff]
    %v1337 = vld [vmem:[%s18 + $0x70] sm:$0xff]
    %v1338 = vld [vmem:[%s18 + $0x78] sm:$0xff]
    %v1339 = vld [vmem:[%s18 + $0x80] sm:$0xff]
    %v1340 = vld [vmem:[%s18 + $0x88] sm:$0xff]
    %v1341 = vld [vmem:[%s18 + $0x90] sm:$0xff]
    %v1342 = vld [vmem:[%s18 + $0x98] sm:$0xff]
    %v1343 = vld [vmem:[%s18 + $0xa0] sm:$0xff]
    %v1344 = vld [vmem:[%s18 + $0xa8] sm:$0xff]
    %v1345 = vld [vmem:[%s18 + $0xb0] sm:$0xff]
    %v1346 = vld [vmem:[%s18 + $0xb8] sm:$0xff]
    %v1347 = vld [vmem:[%s18 + $0xc0] sm:$0xff]
    %v1348 = vld [vmem:[%s18 + $0xc8] sm:$0xff]
    %v1349 = vld [vmem:[%s18 + $0xd0] sm:$0xff]
    %v1350 = vld [vmem:[%s18 + $0xd8] sm:$0xff]
    %v1351 = vld [vmem:[%s18 + $0xe0] sm:$0xff]
    %v1352 = vld [vmem:[%s18 + $0xe8] sm:$0xff]
    %v1353 = vld [vmem:[%s18 + $0xf0] sm:$0xff]
    %v1354 = vld [vmem:[%s18 + $0xf8] sm:$0xff]
    %v1355 = vld [vmem:[%s19] sm:$0xff]
    %v1356 = vld [vmem:[%s19 + $0x8] sm:$0xff]
    %v1357 = vld [vmem:[%s19 + $0x10] sm:$0xff]
    %v1358 = vld [vmem:[%s19 + $0x18] sm:$0xff]
    %v1359 = vld [vmem:[%s19 + $0x20] sm:$0xff]
    %v1360 = vld [vmem:[%s19 + $0x28] sm:$0xff]
    %v1361 = vld [vmem:[%s19 + $0x30] sm:$0x1]
    %v1362 = vld [vmem:[%s19 + $0x38] sm:$0x1]
    %v1363 = vld [vmem:[%s20] sm:$0xff]
    %v1364 = vld [vmem:[%s20 + $0x8] sm:$0xff]
    %v1365 = vld [vmem:[%s21] sm:$0xff]
    %v1366 = vld [vmem:[%s21 + $0x8] sm:$0xff]
    %v1367 = vld [vmem:[%s21 + $0x10] sm:$0xff]
    %v1368 = vld [vmem:[%s21 + $0x18] sm:$0xff]
    %v1369 = vld [vmem:[%s21 + $0x20] sm:$0xff]
    %v1370 = vld [vmem:[%s21 + $0x28] sm:$0xff]
    %v1371 = vld [vmem:[%s21 + $0x30] sm:$0xff]
    %v1372 = vld [vmem:[%s21 + $0x38] sm:$0xff]
    %v1373 = vld [vmem:[%s21 + $0x40] sm:$0xff]
    %v1374 = vld [vmem:[%s21 + $0x48] sm:$0xff]
    %v1375 = vld [vmem:[%s21 + $0x50] sm:$0xff]
    %v1376 = vld [vmem:[%s21 + $0x58] sm:$0xff]
    %v1377 = vld [vmem:[%s21 + $0x60] sm:$0xff]
    %v1378 = vld [vmem:[%s21 + $0x68] sm:$0xff]
    %v1379 = vld [vmem:[%s21 + $0x70] sm:$0xff]
    %v1380 = vld [vmem:[%s21 + $0x78] sm:$0xff]
    %v1381 = vld [vmem:[%s21 + $0x80] sm:$0xff]
    %v1382 = vld [vmem:[%s21 + $0x88] sm:$0xff]
    %v1383 = vld [vmem:[%s21 + $0x90] sm:$0xff]
    %v1384 = vld [vmem:[%s21 + $0x98] sm:$0xff]
    %v1385 = vld [vmem:[%s21 + $0xa0] sm:$0xff]
    %v1386 = vld [vmem:[%s21 + $0xa8] sm:$0xff]
    %v1387 = vld [vmem:[%s21 + $0xb0] sm:$0xff]
    %v1388 = vld [vmem:[%s21 + $0xb8] sm:$0xff]
    %v1389 = vld [vmem:[%s21 + $0xc0] sm:$0xff]
    %v1390 = vld [vmem:[%s22] sm:$0x1]
    %v1391 = vld [vmem:[%s23] sm:$0xff]
    %v1392 = vld [vmem:[%s23 + $0x8] sm:$0xff]
    %v1393 = vld [vmem:[%s23 + $0x10] sm:$0xff]
    %v1394 = vld [vmem:[%s23 + $0x18] sm:$0xff]
    %v1395 = vld [vmem:[#allocation2] sm:$0x1]
    %v1400 = vsel %vm109, %v507, %v1297
    %v1401 = vsel %vm109, %v509, %v1298
    %v1402 = vsel %vm109, %v511, %v1299
    %v1403 = vsel %vm109, %v513, %v1300
    %v1404 = vld [vmem:[%s2] sm:$0xff]
    %v1405 = vld [vmem:[%s2 + $0x8] sm:$0xff]
    %v1406 = vld [vmem:[%s3] sm:$0x1]
    %1408 = vset.pattern.permute.xlu0 0
    %1409 = vperm.xlu0 %1408, %v1404
    %v1410 = vpop.permute.xlu0 %1409
    %1413 = vset.pattern.permute.xlu0 0
    %1414 = vperm.xlu0 %1413, %v1405
    %v1415 = vpop.permute.xlu0 %1414
    %v1418 = vlaneseq
    %v1419 = vshrl.u32 %v1418, 7
    %v1420 = vsub.s32 0, %v1419
    %v1421 = vrot.slane %v1406, %v1420
    %v1423 = vmul.f32 %v1410, %v1421
    %v1424 = vmul.f32 %v1415, %v1421
    %1425 = vmatprep.subr.mxu0 0.0
    %1426 = vmatpush1.xpose.msra.mxu0 %v117
    %1427 = vmatprep.subr.mxu0 0.0
    %1428 = vmatpush1.xpose.msra.mxu0 %v120
    %1429 = vmatprep.subr.mxu0 0.0
    %1430 = vmatpush1.xpose.msra.mxu0 0.0
    %1431 = vmatprep.subr.mxu0 0.0
    %1432 = vmatpush1.xpose.msra.mxu0 0.0
    %1433 = vmatprep.subr.mxu0 0.0
    %1434 = vmatpush1.xpose.msra.mxu0 0.0
    %1435 = vmatprep.subr.mxu0 0.0
    %1436 = vmatpush1.xpose.msra.mxu0 0.0
    %1437 = vmatprep.subr.mxu0 0.0
    %1438 = vmatpush1.xpose.msra.mxu0 0.0
    %1439 = vmatprep.subr.mxu0 0.0
    %1440 = vmatpush1.xpose.msra.mxu0 0.0
    %1441 = vmatprep.subr.mxu0 0.0
    %1442 = vmatpush1.xpose.msra.mxu0 0.0
    %1443 = vmatprep.subr.mxu0 0.0
    %1444 = vmatpush1.xpose.msra.mxu0 0.0
    %1445 = vmatprep.subr.mxu0 0.0
    %1446 = vmatpush1.xpose.msra.mxu0 0.0
    %1447 = vmatprep.subr.mxu0 0.0
    %1448 = vmatpush1.xpose.msra.mxu0 0.0
    %1449 = vmatprep.subr.mxu0 0.0
    %1450 = vmatpush1.xpose.msra.mxu0 0.0
    %1451 = vmatprep.subr.mxu0 0.0
    %1452 = vmatpush1.xpose.msra.mxu0 0.0
    %1453 = vmatprep.subr.mxu0 0.0
    %1454 = vmatpush1.xpose.msra.mxu0 0.0
    %1455 = vmatprep.subr.mxu0 0.0
    %1456 = vmatpush1.xpose.msra.mxu0 0.0
    %1457 = vmatprep.subr.mxu0 0.0
    %1458 = vmatpush1.xpose.msra.mxu0 0.0
    %1459 = vmatprep.subr.mxu0 0.0
    %1460 = vmatpush1.xpose.msra.mxu0 0.0
    %1461 = vmatprep.subr.mxu0 0.0
    %1462 = vmatpush1.xpose.msra.mxu0 0.0
    %1463 = vmatprep.subr.mxu0 0.0
    %1464 = vmatpush1.xpose.msra.mxu0 0.0
    %1465 = vmatprep.subr.mxu0 0.0
    %1466 = vmatpush1.xpose.msra.mxu0 0.0
    %1467 = vmatprep.subr.mxu0 0.0
    %1468 = vmatpush1.xpose.msra.mxu0 0.0
    %1469 = vmatprep.subr.mxu0 0.0
    %1470 = vmatpush1.xpose.msra.mxu0 0.0
    %1471 = vmatprep.subr.mxu0 0.0
    %1472 = vmatpush1.xpose.msra.mxu0 0.0
    %1473 = vmatprep.subr.mxu0 0.0
    %1474 = vmatpush1.xpose.msra.mxu0 0.0
    %1475 = vmatprep.subr.mxu0 0.0
    %1476 = vmatpush1.xpose.msra.mxu0 0.0
    %1477 = vmatprep.subr.mxu0 0.0
    %1478 = vmatpush1.xpose.msra.mxu0 0.0
    %1479 = vmatprep.subr.mxu0 0.0
    %1480 = vmatpush1.xpose.msra.mxu0 0.0
    %1481 = vmatprep.subr.mxu0 0.0
    %1482 = vmatpush1.xpose.msra.mxu0 0.0
    %1483 = vmatprep.subr.mxu0 0.0
    %1484 = vmatpush1.xpose.msra.mxu0 0.0
    %1485 = vmatprep.subr.mxu0 0.0
    %1486 = vmatpush1.xpose.msra.mxu0 0.0
    %1487 = vmatprep.subr.mxu0 0.0
    %1488 = vmatpush1.xpose.msra.mxu0 0.0
    %1489 = vmatprep.mubr.f32.mxu0 0.0
    %1490 = vmatmul.mubr.f32.gmra.mrb[0].mxu0 %v111
    %v1491 = vpop.f32.mrb[0].mxu0
    %v1492 = vadd.f32 0.0, %v1491
    %v1493 = vpop.f32.mrb[0].mxu0
    %1494 = vmatprep.mubr.f32.mxu0 0.0
    %1495 = vmatmul.mubr.f32.gmra.mrb[0].mxu0 %v114
    %v1496 = vpop.f32.mrb[0].mxu0
    %v1497 = vadd.f32 0.0, %v1496
    %v1498 = vpop.f32.mrb[0].mxu0
    %1499 = vdwg.mxu0
    %vm1500 = vcmask 523264
    %v1502 = vsel %vm1500, %v1400, 0
    %v1505 = vsel %vm1500, %v1401, 0
    %1507 = vmatprep.subr.mxu0 0.0
    %1508 = vmatpush1.msra.mxu0 %v1301
    %1509 = vmatprep.subr.mxu0 0.0
    %1510 = vmatpush1.msra.mxu0 %v1302
    %1511 = vmatprep.subr.mxu0 0.0
    %1512 = vmatpush1.msra.mxu0 %v1303
    %1513 = vmatprep.subr.mxu0 0.0
    %1514 = vmatpush1.msra.mxu0 %v1304
    %1515 = vmatprep.subr.mxu0 0.0
    %1516 = vmatpush1.msra.mxu0 %v1305
    %1517 = vmatprep.subr.mxu0 0.0
    %1518 = vmatpush1.msra.mxu0 %v1306
    %1519 = vmatprep.subr.mxu0 0.0
    %1520 = vmatpush1.msra.mxu0 %v1307
    %1521 = vmatprep.subr.mxu0 0.0
    %1522 = vmatpush1.msra.mxu0 %v1308
    %1523 = vmatprep.subr.mxu0 0.0
    %1524 = vmatpush1.msra.mxu0 0.0
    %1525 = vmatprep.subr.mxu0 0.0
    %1526 = vmatpush1.msra.mxu0 0.0
    %1527 = vmatprep.subr.mxu0 0.0
    %1528 = vmatpush1.msra.mxu0 0.0
    %1529 = vmatprep.subr.mxu0 0.0
    %1530 = vmatpush1.msra.mxu0 0.0
    %1531 = vmatprep.subr.mxu0 0.0
    %1532 = vmatpush1.msra.mxu0 0.0
    %1533 = vmatprep.subr.mxu0 0.0
    %1534 = vmatpush1.msra.mxu0 0.0
    %1535 = vmatprep.subr.mxu0 0.0
    %1536 = vmatpush1.msra.mxu0 0.0
    %1537 = vmatprep.subr.mxu0 0.0
    %1538 = vmatpush1.msra.mxu0 0.0
    %1539 = vmatprep.subr.mxu0 0.0
    %1540 = vmatpush1.msra.mxu0 0.0
    %1541 = vmatprep.subr.mxu0 0.0
    %1542 = vmatpush1.msra.mxu0 0.0
    %1543 = vmatprep.subr.mxu0 0.0
    %1544 = vmatpush1.msra.mxu0 0.0
    %1545 = vmatprep.subr.mxu0 0.0
    %1546 = vmatpush1.msra.mxu0 0.0
    %1547 = vmatprep.subr.mxu0 0.0
    %1548 = vmatpush1.msra.mxu0 0.0
    %1549 = vmatprep.subr.mxu0 0.0
    %1550 = vmatpush1.msra.mxu0 0.0
    %1551 = vmatprep.subr.mxu0 0.0
    %1552 = vmatpush1.msra.mxu0 0.0
    %1553 = vmatprep.subr.mxu0 0.0
    %1554 = vmatpush1.msra.mxu0 0.0
    %1555 = vmatprep.subr.mxu0 0.0
    %1556 = vmatpush1.msra.mxu0 0.0
    %1557 = vmatprep.subr.mxu0 0.0
    %1558 = vmatpush1.msra.mxu0 0.0
    %1559 = vmatprep.subr.mxu0 0.0
    %1560 = vmatpush1.msra.mxu0 0.0
    %1561 = vmatprep.subr.mxu0 0.0
    %1562 = vmatpush1.msra.mxu0 0.0
    %1563 = vmatprep.subr.mxu0 0.0
    %1564 = vmatpush1.msra.mxu0 0.0
    %1565 = vmatprep.subr.mxu0 0.0
    %1566 = vmatpush1.msra.mxu0 0.0
    %1567 = vmatprep.subr.mxu0 0.0
    %1568 = vmatpush1.msra.mxu0 0.0
    %1569 = vmatprep.subr.mxu0 0.0
    %1570 = vmatpush1.msra.mxu0 0.0
    %1571 = vmatprep.mubr.f32.mxu0 0.0
    %1572 = vmatmul.mubr.f32.gmra.mrb[0].mxu0 %v1502
    %v1573 = vpop.f32.mrb[0].mxu0
    %v1574 = vadd.f32 0.0, %v1573
    %v1575 = vpop.f32.mrb[0].mxu0
    %1576 = vmatprep.mubr.f32.mxu0 0.0
    %1577 = vmatmul.mubr.f32.gmra.mrb[0].mxu0 %v1505
    %v1578 = vpop.f32.mrb[0].mxu0
    %v1579 = vadd.f32 0.0, %v1578
    %v1580 = vpop.f32.mrb[0].mxu0
    %1581 = vdwg.mxu0
    %v1583 = vsel %vm1500, %v1574, 0
    %v1586 = vsel %vm1500, %v1579, 0
    %v1589 = vsel %vm1500, %v1402, 0
    %v1592 = vsel %vm1500, %v1403, 0
    %1594 = vmatprep.subr.mxu0 0.0
    %1595 = vmatpush1.xpose.msra.mxu0 %v1589
    %1596 = vmatprep.subr.mxu0 0.0
    %1597 = vmatpush1.xpose.msra.mxu0 %v1592
    %1598 = vmatprep.subr.mxu0 0.0
    %1599 = vmatpush1.xpose.msra.mxu0 0.0
    %1600 = vmatprep.subr.mxu0 0.0
    %1601 = vmatpush1.xpose.msra.mxu0 0.0
    %1602 = vmatprep.subr.mxu0 0.0
    %1603 = vmatpush1.xpose.msra.mxu0 0.0
    %1604 = vmatprep.subr.mxu0 0.0
    %1605 = vmatpush1.xpose.msra.mxu0 0.0
    %1606 = vmatprep.subr.mxu0 0.0
    %1607 = vmatpush1.xpose.msra.mxu0 0.0
    %1608 = vmatprep.subr.mxu0 0.0
    %1609 = vmatpush1.xpose.msra.mxu0 0.0
    %1610 = vmatprep.subr.mxu0 0.0
    %1611 = vmatpush1.xpose.msra.mxu0 0.0
    %1612 = vmatprep.subr.mxu0 0.0
    %1613 = vmatpush1.xpose.msra.mxu0 0.0
    %1614 = vmatprep.subr.mxu0 0.0
    %1615 = vmatpush1.xpose.msra.mxu0 0.0
    %1616 = vmatprep.subr.mxu0 0.0
    %1617 = vmatpush1.xpose.msra.mxu0 0.0
    %1618 = vmatprep.subr.mxu0 0.0
    %1619 = vmatpush1.xpose.msra.mxu0 0.0
    %1620 = vmatprep.subr.mxu0 0.0
    %1621 = vmatpush1.xpose.msra.mxu0 0.0
    %1622 = vmatprep.subr.mxu0 0.0
    %1623 = vmatpush1.xpose.msra.mxu0 0.0
    %1624 = vmatprep.subr.mxu0 0.0
    %1625 = vmatpush1.xpose.msra.mxu0 0.0
    %1626 = vmatprep.subr.mxu0 0.0
    %1627 = vmatpush1.xpose.msra.mxu0 0.0
    %1628 = vmatprep.subr.mxu0 0.0
    %1629 = vmatpush1.xpose.msra.mxu0 0.0
    %1630 = vmatprep.subr.mxu0 0.0
    %1631 = vmatpush1.xpose.msra.mxu0 0.0
    %1632 = vmatprep.subr.mxu0 0.0
    %1633 = vmatpush1.xpose.msra.mxu0 0.0
    %1634 = vmatprep.subr.mxu0 0.0
    %1635 = vmatpush1.xpose.msra.mxu0 0.0
    %1636 = vmatprep.subr.mxu0 0.0
    %1637 = vmatpush1.xpose.msra.mxu0 0.0
    %1638 = vmatprep.subr.mxu0 0.0
    %1639 = vmatpush1.xpose.msra.mxu0 0.0
    %1640 = vmatprep.subr.mxu0 0.0
    %1641 = vmatpush1.xpose.msra.mxu0 0.0
    %1642 = vmatprep.subr.mxu0 0.0
    %1643 = vmatpush1.xpose.msra.mxu0 0.0
    %1644 = vmatprep.subr.mxu0 0.0
    %1645 = vmatpush1.xpose.msra.mxu0 0.0
    %1646 = vmatprep.subr.mxu0 0.0
    %1647 = vmatpush1.xpose.msra.mxu0 0.0
    %1648 = vmatprep.subr.mxu0 0.0
    %1649 = vmatpush1.xpose.msra.mxu0 0.0
    %1650 = vmatprep.subr.mxu0 0.0
    %1651 = vmatpush1.xpose.msra.mxu0 0.0
    %1652 = vmatprep.subr.mxu0 0.0
    %1653 = vmatpush1.xpose.msra.mxu0 0.0
    %1654 = vmatprep.subr.mxu0 0.0
    %1655 = vmatpush1.xpose.msra.mxu0 0.0
    %1656 = vmatprep.subr.mxu0 0.0
    %1657 = vmatpush1.xpose.msra.mxu0 0.0
    %1658 = vmatprep.mubr.f32.mxu0 0.0
    %1659 = vmatmul.mubr.f32.gmra.mrb[0].mxu0 %v1583
    %v1660 = vpop.f32.mrb[0].mxu0
    %v1661 = vadd.f32 0.0, %v1660
    %v1662 = vpop.f32.mrb[0].mxu0
    %1663 = vmatprep.mubr.f32.mxu0 0.0
    %1664 = vmatmul.mubr.f32.gmra.mrb[0].mxu0 %v1586
    %v1665 = vpop.f32.mrb[0].mxu0
    %v1666 = vadd.f32 0.0, %v1665
    %v1667 = vpop.f32.mrb[0].mxu0
    %1668 = vdwg.mxu0
    %v1669 = vmax.f32 %v1492, 0.0
    %v1670 = vmax.f32 %v1497, 0.0
    %v1671 = vmul.f32 %v1669, %v1423
    %v1672 = vmul.f32 %v1670, %v1424
    %v1673 = vmax.f32 %v1661, 0.0
    %v1674 = vmax.f32 %v1666, 0.0
    %v1675 = vmul.f32 %v1673, %v1423
    %v1676 = vmul.f32 %v1674, %v1424
    %vm1677 = vcmask 130048
    %v1679 = vsel %vm1677, %v1671, 0
    %v1682 = vsel %vm1677, %v1672, 0
    %1684 = vmatprep.subr.mxu0 %v1316
    %1685 = vmatpush1.msra.mxu0 %v1315
    %1686 = vmatprep.subr.mxu0 %v1318
    %1687 = vmatpush1.msra.mxu0 %v1317
    %1688 = vmatprep.subr.mxu0 0.0
    %1689 = vmatpush1.msra.mxu0 0.0
    %1690 = vmatprep.subr.mxu0 0.0
    %1691 = vmatpush1.msra.mxu0 0.0
    %1692 = vmatprep.subr.mxu0 0.0
    %1693 = vmatpush1.msra.mxu0 0.0
    %1694 = vmatprep.subr.mxu0 0.0
    %1695 = vmatpush1.msra.mxu0 0.0
    %1696 = vmatprep.subr.mxu0 0.0
    %1697 = vmatpush1.msra.mxu0 0.0
    %1698 = vmatprep.subr.mxu0 0.0
    %1699 = vmatpush1.msra.mxu0 0.0
    %1700 = vmatprep.subr.mxu0 0.0
    %1701 = vmatpush1.msra.mxu0 0.0
    %1702 = vmatprep.subr.mxu0 0.0
    %1703 = vmatpush1.msra.mxu0 0.0
    %1704 = vmatprep.subr.mxu0 0.0
    %1705 = vmatpush1.msra.mxu0 0.0
    %1706 = vmatprep.subr.mxu0 0.0
    %1707 = vmatpush1.msra.mxu0 0.0
    %1708 = vmatprep.subr.mxu0 0.0
    %1709 = vmatpush1.msra.mxu0 0.0
    %1710 = vmatprep.subr.mxu0 0.0
    %1711 = vmatpush1.msra.mxu0 0.0
    %1712 = vmatprep.subr.mxu0 0.0
    %1713 = vmatpush1.msra.mxu0 0.0
    %1714 = vmatprep.subr.mxu0 0.0
    %1715 = vmatpush1.msra.mxu0 0.0
    %1716 = vmatprep.subr.mxu0 0.0
    %1717 = vmatpush1.msra.mxu0 0.0
    %1718 = vmatprep.subr.mxu0 0.0
    %1719 = vmatpush1.msra.mxu0 0.0
    %1720 = vmatprep.subr.mxu0 0.0
    %1721 = vmatpush1.msra.mxu0 0.0
    %1722 = vmatprep.subr.mxu0 0.0
    %1723 = vmatpush1.msra.mxu0 0.0
    %1724 = vmatprep.subr.mxu0 0.0
    %1725 = vmatpush1.msra.mxu0 0.0
    %1726 = vmatprep.subr.mxu0 0.0
    %1727 = vmatpush1.msra.mxu0 0.0
    %1728 = vmatprep.subr.mxu0 0.0
    %1729 = vmatpush1.msra.mxu0 0.0
    %1730 = vmatprep.subr.mxu0 0.0
    %1731 = vmatpush1.msra.mxu0 0.0
    %1732 = vmatprep.subr.mxu0 0.0
    %1733 = vmatpush1.msra.mxu0 0.0
    %1734 = vmatprep.subr.mxu0 0.0
    %1735 = vmatpush1.msra.mxu0 0.0
    %1736 = vmatprep.subr.mxu0 0.0
    %1737 = vmatpush1.msra.mxu0 0.0
    %1738 = vmatprep.subr.mxu0 0.0
    %1739 = vmatpush1.msra.mxu0 0.0
    %1740 = vmatprep.subr.mxu0 0.0
    %1741 = vmatpush1.msra.mxu0 0.0
    %1742 = vmatprep.subr.mxu0 0.0
    %1743 = vmatpush1.msra.mxu0 0.0
    %1744 = vmatprep.subr.mxu0 0.0
    %1745 = vmatpush1.msra.mxu0 0.0
    %1746 = vmatprep.subr.mxu0 0.0
    %1747 = vmatpush1.msra.mxu0 0.0
    %1748 = vmatprep.mubr.f32.mxu0 0.0
    %1749 = vmatmul.mubr.f32.gmra.mrb[0].mxu0 %v1679
    %v1750 = vpop.f32.mrb[0].mxu0
    %v1751 = vadd.f32 0.0, %v1750
    %v1752 = vpop.f32.mrb[0].mxu0
    %v1753 = vadd.f32 0.0, %v1752
    %1754 = vmatprep.mubr.f32.mxu0 0.0
    %1755 = vmatmul.mubr.f32.gmra.mrb[0].mxu0 %v1682
    %v1756 = vpop.f32.mrb[0].mxu0
    %v1757 = vadd.f32 0.0, %v1756
    %v1758 = vpop.f32.mrb[0].mxu0
    %v1759 = vadd.f32 0.0, %v1758
    %1760 = vdwg.mxu0
    %v1761 = vmul.f32 %v1751, %v1319
    %v1762 = vmul.f32 %v1753, %v1320
    %v1763 = vmul.f32 %v1757, %v1321
    %v1764 = vmul.f32 %v1759, %v1322
    %v1765 = vadd.f32 %v1761, %v1763
    %v1766 = vrot.slane %v1765, 4
    %v1767 = vadd.f32 %v1765, %v1766
    %v1768 = vrot.slane %v1767, 2
    %v1769 = vadd.f32 %v1767, %v1768
    %v1770 = vrot.slane %v1769, 1
    %v1771 = vadd.f32 %v1769, %v1770
    %v1772 = vadd.f32 %v1762, %v1764
    %v1773 = vrot.slane %v1772, 4
    %v1774 = vadd.f32 %v1772, %v1773
    %v1775 = vrot.slane %v1774, 2
    %v1776 = vadd.f32 %v1774, %v1775
    %v1777 = vrot.slane %v1776, 1
    %v1778 = vadd.f32 %v1776, %v1777
    %v1780 = vsel %vm1677, %v1675, 0
    %v1783 = vsel %vm1677, %v1676, 0
    %1785 = vmatprep.subr.mxu0 %v1316
    %1786 = vmatpush1.msra.mxu0 %v1315
    %1787 = vmatprep.subr.mxu0 %v1318
    %1788 = vmatpush1.msra.mxu0 %v1317
    %1789 = vmatprep.subr.mxu0 0.0
    %1790 = vmatpush1.msra.mxu0 0.0
    %1791 = vmatprep.subr.mxu0 0.0
    %1792 = vmatpush1.msra.mxu0 0.0
    %1793 = vmatprep.subr.mxu0 0.0
    %1794 = vmatpush1.msra.mxu0 0.0
    %1795 = vmatprep.subr.mxu0 0.0
    %1796 = vmatpush1.msra.mxu0 0.0
    %1797 = vmatprep.subr.mxu0 0.0
    %1798 = vmatpush1.msra.mxu0 0.0
    %1799 = vmatprep.subr.mxu0 0.0
    %1800 = vmatpush1.msra.mxu0 0.0
    %1801 = vmatprep.subr.mxu0 0.0
    %1802 = vmatpush1.msra.mxu0 0.0
    %1803 = vmatprep.subr.mxu0 0.0
    %1804 = vmatpush1.msra.mxu0 0.0
    %1805 = vmatprep.subr.mxu0 0.0
    %1806 = vmatpush1.msra.mxu0 0.0
    %1807 = vmatprep.subr.mxu0 0.0
    %1808 = vmatpush1.msra.mxu0 0.0
    %1809 = vmatprep.subr.mxu0 0.0
    %1810 = vmatpush1.msra.mxu0 0.0
    %1811 = vmatprep.subr.mxu0 0.0
    %1812 = vmatpush1.msra.mxu0 0.0
    %1813 = vmatprep.subr.mxu0 0.0
    %1814 = vmatpush1.msra.mxu0 0.0
    %1815 = vmatprep.subr.mxu0 0.0
    %1816 = vmatpush1.msra.mxu0 0.0
    %1817 = vmatprep.subr.mxu0 0.0
    %1818 = vmatpush1.msra.mxu0 0.0
    %1819 = vmatprep.subr.mxu0 0.0
    %1820 = vmatpush1.msra.mxu0 0.0
    %1821 = vmatprep.subr.mxu0 0.0
    %1822 = vmatpush1.msra.mxu0 0.0
    %1823 = vmatprep.subr.mxu0 0.0
    %1824 = vmatpush1.msra.mxu0 0.0
    %1825 = vmatprep.subr.mxu0 0.0
    %1826 = vmatpush1.msra.mxu0 0.0
    %1827 = vmatprep.subr.mxu0 0.0
    %1828 = vmatpush1.msra.mxu0 0.0
    %1829 = vmatprep.subr.mxu0 0.0
    %1830 = vmatpush1.msra.mxu0 0.0
    %1831 = vmatprep.subr.mxu0 0.0
    %1832 = vmatpush1.msra.mxu0 0.0
    %1833 = vmatprep.subr.mxu0 0.0
    %1834 = vmatpush1.msra.mxu0 0.0
    %1835 = vmatprep.subr.mxu0 0.0
    %1836 = vmatpush1.msra.mxu0 0.0
    %1837 = vmatprep.subr.mxu0 0.0
    %1838 = vmatpush1.msra.mxu0 0.0
    %1839 = vmatprep.subr.mxu0 0.0
    %1840 = vmatpush1.msra.mxu0 0.0
    %1841 = vmatprep.subr.mxu0 0.0
    %1842 = vmatpush1.msra.mxu0 0.0
    %1843 = vmatprep.subr.mxu0 0.0
    %1844 = vmatpush1.msra.mxu0 0.0
    %1845 = vmatprep.subr.mxu0 0.0
    %1846 = vmatpush1.msra.mxu0 0.0
    %1847 = vmatprep.subr.mxu0 0.0
    %1848 = vmatpush1.msra.mxu0 0.0
    %1849 = vmatprep.mubr.f32.mxu0 0.0
    %1850 = vmatmul.mubr.f32.gmra.mrb[0].mxu0 %v1780
    %v1851 = vpop.f32.mrb[0].mxu0
    %v1852 = vadd.f32 0.0, %v1851
    %v1853 = vpop.f32.mrb[0].mxu0
    %v1854 = vadd.f32 0.0, %v1853
    %1855 = vmatprep.mubr.f32.mxu0 0.0
    %1856 = vmatmul.mubr.f32.gmra.mrb[0].mxu0 %v1783
    %v1857 = vpop.f32.mrb[0].mxu0
    %v1858 = vadd.f32 0.0, %v1857
    %v1859 = vpop.f32.mrb[0].mxu0
    %v1860 = vadd.f32 0.0, %v1859
    %1861 = vdwg.mxu0
    %v1862 = vmul.f32 %v1852, %v1319
    %v1863 = vmul.f32 %v1854, %v1320
    %v1864 = vmul.f32 %v1858, %v1321
    %v1865 = vmul.f32 %v1860, %v1322
    %v1866 = vadd.f32 %v1862, %v1864
    %v1867 = vrot.slane %v1866, 4
    %v1868 = vadd.f32 %v1866, %v1867
    %v1869 = vrot.slane %v1868, 2
    %v1870 = vadd.f32 %v1868, %v1869
    %v1871 = vrot.slane %v1870, 1
    %v1872 = vadd.f32 %v1870, %v1871
    %v1873 = vadd.f32 %v1863, %v1865
    %v1874 = vrot.slane %v1873, 4
    %v1875 = vadd.f32 %v1873, %v1874
    %v1876 = vrot.slane %v1875, 2
    %v1877 = vadd.f32 %v1875, %v1876
    %v1878 = vrot.slane %v1877, 1
    %v1879 = vadd.f32 %v1877, %v1878
    %1882 = vrot.lane.b32.xlu0 %v1771, 17
    %v1883 = vpop.permute.xlu0 %1882
    %1884 = vrot.lane.b32.xlu0 %v1778, 17
    %v1885 = vpop.permute.xlu0 %1884
    %vm1886 = vcmask 138240
    %v1887 = vsel %vm1886, %v1883, %v1885
    %v1890 = vsel %vm1886, 0.0, %v1883
    %v1891 = vmul.f32 %v1890, %v1311
    %v1892 = vmul.f32 %v1887, %v1312
    %1894 = vset.pattern.permute.xlu0 0
    %1895 = vperm.xlu0 %1894, %v1309
    %v1896 = vpop.permute.xlu0 %1895
    %v1898 = vlaneseq
    %v1899 = vshrl.u32 %v1898, 7
    %v1900 = vsub.s32 0, %v1899
    %v1901 = vrot.slane %v1891, %v1900
    %v1902 = vlaneseq
    %v1903 = vshrl.u32 %v1902, 7
    %v1904 = vsub.s32 0, %v1903
    %v1905 = vrot.slane %v1892, %v1904
    %v1906 = vmul.f32 %v1896, %v1901
    %v1907 = vmul.f32 %v1896, %v1905
    %v1908 = vadd.f32 %v1906, 0.0
    %v1909 = vadd.f32 %v1907, 0.0
    %1912 = vrot.lane.b32.xlu0 %v1872, 17
    %v1913 = vpop.permute.xlu0 %1912
    %1914 = vrot.lane.b32.xlu0 %v1879, 17
    %v1915 = vpop.permute.xlu0 %1914
    %v1916 = vsel %vm1886, %v1913, %v1915
    %v1919 = vsel %vm1886, 0.0, %v1913
    %v1920 = vmul.f32 %v1919, %v1311
    %v1921 = vmul.f32 %v1916, %v1312
    %1922 = vset.pattern.permute.xlu0 1
    %1923 = vperm.xlu0 %1922, %v1309
    %v1924 = vpop.permute.xlu0 %1923
    %v1926 = vlaneseq
    %v1927 = vshrl.u32 %v1926, 7
    %v1928 = vsub.s32 0, %v1927
    %v1929 = vrot.slane %v1920, %v1928
    %v1930 = vlaneseq
    %v1931 = vshrl.u32 %v1930, 7
    %v1932 = vsub.s32 0, %v1931
    %v1933 = vrot.slane %v1921, %v1932
    %v1934 = vmul.f32 %v1924, %v1929
    %v1935 = vmul.f32 %v1924, %v1933
    %v1936 = vadd.f32 %v1908, %v1934
    %v1937 = vadd.f32 %v1909, %v1935
    %1938 = vrot.lane.b32.xlu0 %v1771, 16
    %v1939 = vpop.permute.xlu0 %1938
    %1940 = vrot.lane.b32.xlu0 %v1778, 16
    %v1941 = vpop.permute.xlu0 %1940
    %v1942 = vsel %vm1677, %v1939, %v1941
    %v1945 = vsel %vm1677, 0.0, %v1939
    %v1948 = vrot.slane %v1311, 1
    %v1949 = vrot.slane %v1312, 1
    %v1952 = vmul.f32 %v1945, %v1948
    %v1953 = vmul.f32 %v1942, %v1949
    %1954 = vset.pattern.permute.xlu0 2
    %1955 = vperm.xlu0 %1954, %v1309
    %v1956 = vpop.permute.xlu0 %1955
    %v1958 = vlaneseq
    %v1959 = vshrl.u32 %v1958, 7
    %v1960 = vsub.s32 0, %v1959
    %v1961 = vrot.slane %v1952, %v1960
    %v1962 = vlaneseq
    %v1963 = vshrl.u32 %v1962, 7
    %v1964 = vsub.s32 0, %v1963
    %v1965 = vrot.slane %v1953, %v1964
    %v1966 = vmul.f32 %v1956, %v1961
    %v1967 = vmul.f32 %v1956, %v1965
    %v1968 = vadd.f32 %v1936, %v1966
    %v1969 = vadd.f32 %v1937, %v1967
    %1970 = vrot.lane.b32.xlu0 %v1872, 16
    %v1971 = vpop.permute.xlu0 %1970
    %1972 = vrot.lane.b32.xlu0 %v1879, 16
    %v1973 = vpop.permute.xlu0 %1972
    %v1974 = vsel %vm1677, %v1971, %v1973
    %v1977 = vsel %vm1677, 0.0, %v1971
    %v1978 = vmul.f32 %v1977, %v1948
    %v1979 = vmul.f32 %v1974, %v1949
    %1980 = vset.pattern.permute.xlu0 3
    %1981 = vperm.xlu0 %1980, %v1309
    %v1982 = vpop.permute.xlu0 %1981
    %v1984 = vlaneseq
    %v1985 = vshrl.u32 %v1984, 7
    %v1986 = vsub.s32 0, %v1985
    %v1987 = vrot.slane %v1978, %v1986
    %v1988 = vlaneseq
    %v1989 = vshrl.u32 %v1988, 7
    %v1990 = vsub.s32 0, %v1989
    %v1991 = vrot.slane %v1979, %v1990
    %v1992 = vmul.f32 %v1982, %v1987
    %v1993 = vmul.f32 %v1982, %v1991
    %v1994 = vadd.f32 %v1968, %v1992
    %v1995 = vadd.f32 %v1969, %v1993
    %1996 = vrot.lane.b32.xlu0 %v1771, 15
    %v1997 = vpop.permute.xlu0 %1996
    %1998 = vrot.lane.b32.xlu0 %v1778, 15
    %v1999 = vpop.permute.xlu0 %1998
    %vm2000 = vcmask 121856
    %v2001 = vsel %vm2000, %v1997, %v1999
    %v2004 = vsel %vm2000, 0.0, %v1997
    %v2005 = vrot.slane %v1311, 2
    %v2006 = vrot.slane %v1312, 2
    %v2009 = vmul.f32 %v2004, %v2005
    %v2010 = vmul.f32 %v2001, %v2006
    %2011 = vset.pattern.permute.xlu0 4
    %2012 = vperm.xlu0 %2011, %v1309
    %v2013 = vpop.permute.xlu0 %2012
    %v2015 = vlaneseq
    %v2016 = vshrl.u32 %v2015, 7
    %v2017 = vsub.s32 0, %v2016
    %v2018 = vrot.slane %v2009, %v2017
    %v2019 = vlaneseq
    %v2020 = vshrl.u32 %v2019, 7
    %v2021 = vsub.s32 0, %v2020
    %v2022 = vrot.slane %v2010, %v2021
    %v2023 = vmul.f32 %v2013, %v2018
    %v2024 = vmul.f32 %v2013, %v2022
    %v2025 = vadd.f32 %v1994, %v2023
    %v2026 = vadd.f32 %v1995, %v2024
    %2027 = vrot.lane.b32.xlu0 %v1872, 15
    %v2028 = vpop.permute.xlu0 %2027
    %2029 = vrot.lane.b32.xlu0 %v1879, 15
    %v2030 = vpop.permute.xlu0 %2029
    %v2031 = vsel %vm2000, %v2028, %v2030
    %v2034 = vsel %vm2000, 0.0, %v2028
    %v2035 = vmul.f32 %v2034, %v2005
    %v2036 = vmul.f32 %v2031, %v2006
    %2037 = vset.pattern.permute.xlu0 5
    %2038 = vperm.xlu0 %2037, %v1309
    %v2039 = vpop.permute.xlu0 %2038
    %v2041 = vlaneseq
    %v2042 = vshrl.u32 %v2041, 7
    %v2043 = vsub.s32 0, %v2042
    %v2044 = vrot.slane %v2035, %v2043
    %v2045 = vlaneseq
    %v2046 = vshrl.u32 %v2045, 7
    %v2047 = vsub.s32 0, %v2046
    %v2048 = vrot.slane %v2036, %v2047
    %v2049 = vmul.f32 %v2039, %v2044
    %v2050 = vmul.f32 %v2039, %v2048
    %v2051 = vadd.f32 %v2025, %v2049
    %v2052 = vadd.f32 %v2026, %v2050
    %2053 = vrot.lane.b32.xlu0 %v1771, 1
    %v2054 = vpop.permute.xlu0 %2053
    %2055 = vrot.lane.b32.xlu0 %v1778, 1
    %v2056 = vpop.permute.xlu0 %2055
    %vm2057 = vcmask 7168
    %v2058 = vsel %vm2057, %v2054, %v2056
    %v2061 = vsel %vm2057, 0.0, %v2054
    %v2062 = vrot.slane %v1311, 3
    %v2063 = vrot.slane %v1312, 3
    %v2066 = vmul.f32 %v2061, %v2062
    %v2067 = vmul.f32 %v2058, %v2063
    %2068 = vset.pattern.permute.xlu0 6
    %2069 = vperm.xlu0 %2068, %v1309
    %v2070 = vpop.permute.xlu0 %2069
    %v2072 = vlaneseq
    %v2073 = vshrl.u32 %v2072, 7
    %v2074 = vsub.s32 0, %v2073
    %v2075 = vrot.slane %v2066, %v2074
    %v2076 = vlaneseq
    %v2077 = vshrl.u32 %v2076, 7
    %v2078 = vsub.s32 0, %v2077
    %v2079 = vrot.slane %v2067, %v2078
    %v2080 = vmul.f32 %v2070, %v2075
    %v2081 = vmul.f32 %v2070, %v2079
    %v2082 = vadd.f32 %v2051, %v2080
    %v2083 = vadd.f32 %v2052, %v2081
    %2084 = vrot.lane.b32.xlu0 %v1872, 1
    %v2085 = vpop.permute.xlu0 %2084
    %2086 = vrot.lane.b32.xlu0 %v1879, 1
    %v2087 = vpop.permute.xlu0 %2086
    %v2088 = vsel %vm2057, %v2085, %v2087
    %v2091 = vsel %vm2057, 0.0, %v2085
    %v2092 = vmul.f32 %v2091, %v2062
    %v2093 = vmul.f32 %v2088, %v2063
    %2094 = vset.pattern.permute.xlu0 7
    %2095 = vperm.xlu0 %2094, %v1309
    %v2096 = vpop.permute.xlu0 %2095
    %v2098 = vlaneseq
    %v2099 = vshrl.u32 %v2098, 7
    %v2100 = vsub.s32 0, %v2099
    %v2101 = vrot.slane %v2092, %v2100
    %v2102 = vlaneseq
    %v2103 = vshrl.u32 %v2102, 7
    %v2104 = vsub.s32 0, %v2103
    %v2105 = vrot.slane %v2093, %v2104
    %v2106 = vmul.f32 %v2096, %v2101
    %v2107 = vmul.f32 %v2096, %v2105
    %v2108 = vadd.f32 %v2082, %v2106
    %v2109 = vadd.f32 %v2083, %v2107
    %v2110 = vmul.f32 %v1771, %v1311
    %v2111 = vmul.f32 %v1778, %v1312
    %2112 = vset.pattern.permute.xlu0 8
    %2113 = vperm.xlu0 %2112, %v1309
    %v2114 = vpop.permute.xlu0 %2113
    %v2116 = vlaneseq
    %v2117 = vshrl.u32 %v2116, 7
    %v2118 = vsub.s32 4, %v2117
    %v2119 = vrot.slane %v2110, %v2118
    %v2120 = vlaneseq
    %v2121 = vshrl.u32 %v2120, 7
    %v2122 = vsub.s32 4, %v2121
    %v2123 = vrot.slane %v2111, %v2122
    %v2124 = vmul.f32 %v2114, %v2119
    %v2125 = vmul.f32 %v2114, %v2123
    %v2126 = vadd.f32 %v2108, %v2124
    %v2127 = vadd.f32 %v2109, %v2125
    %v2128 = vmul.f32 %v1872, %v1311
    %v2129 = vmul.f32 %v1879, %v1312
    %2130 = vset.pattern.permute.xlu0 9
    %2131 = vperm.xlu0 %2130, %v1309
    %v2132 = vpop.permute.xlu0 %2131
    %v2134 = vlaneseq
    %v2135 = vshrl.u32 %v2134, 7
    %v2136 = vsub.s32 4, %v2135
    %v2137 = vrot.slane %v2128, %v2136
    %v2138 = vlaneseq
    %v2139 = vshrl.u32 %v2138, 7
    %v2140 = vsub.s32 4, %v2139
    %v2141 = vrot.slane %v2129, %v2140
    %v2142 = vmul.f32 %v2132, %v2137
    %v2143 = vmul.f32 %v2132, %v2141
    %v2144 = vadd.f32 %v2126, %v2142
    %v2145 = vadd.f32 %v2127, %v2143
    %2146 = vrot.lane.b32.xlu0 %v1771, 127
    %v2147 = vpop.permute.xlu0 %2146
    %2148 = vrot.lane.b32.xlu0 %v1778, 127
    %v2149 = vpop.permute.xlu0 %2148
    %vm2150 = vcmask 1039360
    %v2151 = vsel %vm2150, %v2147, %v2149
    %v2154 = vsel %vm2150, %v2149, 0.0
    %v2155 = vrot.slane %v1311, 5
    %v2156 = vrot.slane %v1312, 5
    %v2159 = vmul.f32 %v2151, %v2155
    %v2160 = vmul.f32 %v2154, %v2156
    %2161 = vset.pattern.permute.xlu0 10
    %2162 = vperm.xlu0 %2161, %v1309
    %v2163 = vpop.permute.xlu0 %2162
    %v2165 = vlaneseq
    %v2166 = vshrl.u32 %v2165, 7
    %v2167 = vsub.s32 0, %v2166
    %v2168 = vrot.slane %v2159, %v2167
    %v2169 = vlaneseq
    %v2170 = vshrl.u32 %v2169, 7
    %v2171 = vsub.s32 0, %v2170
    %v2172 = vrot.slane %v2160, %v2171
    %v2173 = vmul.f32 %v2163, %v2168
    %v2174 = vmul.f32 %v2163, %v2172
    %v2175 = vadd.f32 %v2144, %v2173
    %v2176 = vadd.f32 %v2145, %v2174
    %2177 = vrot.lane.b32.xlu0 %v1872, 127
    %v2178 = vpop.permute.xlu0 %2177
    %2179 = vrot.lane.b32.xlu0 %v1879, 127
    %v2180 = vpop.permute.xlu0 %2179
    %v2181 = vsel %vm2150, %v2178, %v2180
    %v2184 = vsel %vm2150, %v2180, 0.0
    %v2185 = vmul.f32 %v2181, %v2155
    %v2186 = vmul.f32 %v2184, %v2156
    %2187 = vset.pattern.permute.xlu0 11
    %2188 = vperm.xlu0 %2187, %v1309
    %v2189 = vpop.permute.xlu0 %2188
    %v2191 = vlaneseq
    %v2192 = vshrl.u32 %v2191, 7
    %v2193 = vsub.s32 0, %v2192
    %v2194 = vrot.slane %v2185, %v2193
    %v2195 = vlaneseq
    %v2196 = vshrl.u32 %v2195, 7
    %v2197 = vsub.s32 0, %v2196
    %v2198 = vrot.slane %v2186, %v2197
    %v2199 = vmul.f32 %v2189, %v2194
    %v2200 = vmul.f32 %v2189, %v2198
    %v2201 = vadd.f32 %v2175, %v2199
    %v2202 = vadd.f32 %v2176, %v2200
    %2203 = vrot.lane.b32.xlu0 %v1771, 113
    %v2204 = vpop.permute.xlu0 %2203
    %2205 = vrot.lane.b32.xlu0 %v1778, 113
    %v2206 = vpop.permute.xlu0 %2205
    %vm2207 = vcmask 924672
    %v2208 = vsel %vm2207, %v2204, %v2206
    %v2211 = vsel %vm2207, %v2206, 0.0
    %v2212 = vrot.slane %v1311, 6
    %v2213 = vrot.slane %v1312, 6
    %v2216 = vmul.f32 %v2208, %v2212
    %v2217 = vmul.f32 %v2211, %v2213
    %2218 = vset.pattern.permute.xlu0 12
    %2219 = vperm.xlu0 %2218, %v1309
    %v2220 = vpop.permute.xlu0 %2219
    %v2222 = vlaneseq
    %v2223 = vshrl.u32 %v2222, 7
    %v2224 = vsub.s32 0, %v2223
    %v2225 = vrot.slane %v2216, %v2224
    %v2226 = vlaneseq
    %v2227 = vshrl.u32 %v2226, 7
    %v2228 = vsub.s32 0, %v2227
    %v2229 = vrot.slane %v2217, %v2228
    %v2230 = vmul.f32 %v2220, %v2225
    %v2231 = vmul.f32 %v2220, %v2229
    %v2232 = vadd.f32 %v2201, %v2230
    %v2233 = vadd.f32 %v2202, %v2231
    %2234 = vrot.lane.b32.xlu0 %v1872, 113
    %v2235 = vpop.permute.xlu0 %2234
    %2236 = vrot.lane.b32.xlu0 %v1879, 113
    %v2237 = vpop.permute.xlu0 %2236
    %v2238 = vsel %vm2207, %v2235, %v2237
    %v2241 = vsel %vm2207, %v2237, 0.0
    %v2242 = vmul.f32 %v2238, %v2212
    %v2243 = vmul.f32 %v2241, %v2213
    %2244 = vset.pattern.permute.xlu0 13
    %2245 = vperm.xlu0 %2244, %v1309
    %v2246 = vpop.permute.xlu0 %2245
    %v2248 = vlaneseq
    %v2249 = vshrl.u32 %v2248, 7
    %v2250 = vsub.s32 0, %v2249
    %v2251 = vrot.slane %v2242, %v2250
    %v2252 = vlaneseq
    %v2253 = vshrl.u32 %v2252, 7
    %v2254 = vsub.s32 0, %v2253
    %v2255 = vrot.slane %v2243, %v2254
    %v2256 = vmul.f32 %v2246, %v2251
    %v2257 = vmul.f32 %v2246, %v2255
    %v2258 = vadd.f32 %v2232, %v2256
    %v2259 = vadd.f32 %v2233, %v2257
    %2260 = vrot.lane.b32.xlu0 %v1771, 112
    %v2261 = vpop.permute.xlu0 %2260
    %2262 = vrot.lane.b32.xlu0 %v1778, 112
    %v2263 = vpop.permute.xlu0 %2262
    %vm2264 = vcmask 916480
    %v2265 = vsel %vm2264, %v2261, %v2263
    %v2268 = vsel %vm2264, %v2263, 0.0
    %v2269 = vrot.slane %v1311, 7
    %v2270 = vrot.slane %v1312, 7
    %v2273 = vmul.f32 %v2265, %v2269
    %v2274 = vmul.f32 %v2268, %v2270
    %2275 = vset.pattern.permute.xlu0 14
    %2276 = vperm.xlu0 %2275, %v1309
    %v2277 = vpop.permute.xlu0 %2276
    %v2279 = vlaneseq
    %v2280 = vshrl.u32 %v2279, 7
    %v2281 = vsub.s32 0, %v2280
    %v2282 = vrot.slane %v2273, %v2281
    %v2283 = vlaneseq
    %v2284 = vshrl.u32 %v2283, 7
    %v2285 = vsub.s32 0, %v2284
    %v2286 = vrot.slane %v2274, %v2285
    %v2287 = vmul.f32 %v2277, %v2282
    %v2288 = vmul.f32 %v2277, %v2286
    %v2289 = vadd.f32 %v2258, %v2287
    %v2290 = vadd.f32 %v2259, %v2288
    %2291 = vrot.lane.b32.xlu0 %v1872, 112
    %v2292 = vpop.permute.xlu0 %2291
    %2293 = vrot.lane.b32.xlu0 %v1879, 112
    %v2294 = vpop.permute.xlu0 %2293
    %v2295 = vsel %vm2264, %v2292, %v2294
    %v2298 = vsel %vm2264, %v2294, 0.0
    %v2299 = vmul.f32 %v2295, %v2269
    %v2300 = vmul.f32 %v2298, %v2270
    %2301 = vset.pattern.permute.xlu0 15
    %2302 = vperm.xlu0 %2301, %v1309
    %v2303 = vpop.permute.xlu0 %2302
    %v2305 = vlaneseq
    %v2306 = vshrl.u32 %v2305, 7
    %v2307 = vsub.s32 0, %v2306
    %v2308 = vrot.slane %v2299, %v2307
    %v2309 = vlaneseq
    %v2310 = vshrl.u32 %v2309, 7
    %v2311 = vsub.s32 0, %v2310
    %v2312 = vrot.slane %v2300, %v2311
    %v2313 = vmul.f32 %v2303, %v2308
    %v2314 = vmul.f32 %v2303, %v2312
    %v2315 = vadd.f32 %v2289, %v2313
    %v2316 = vadd.f32 %v2290, %v2314
    %2317 = vrot.lane.b32.xlu0 %v1771, 111
    %v2318 = vpop.permute.xlu0 %2317
    %2319 = vrot.lane.b32.xlu0 %v1778, 111
    %v2320 = vpop.permute.xlu0 %2319
    %vm2321 = vcmask 908288
    %v2322 = vsel %vm2321, %v2318, %v2320
    %v2325 = vsel %vm2321, %v2320, 0.0
    %v2326 = vmul.f32 %v2322, %v1313
    %v2327 = vmul.f32 %v2325, %v1314
    %2328 = vset.pattern.permute.xlu0 16
    %2329 = vperm.xlu0 %2328, %v1309
    %v2330 = vpop.permute.xlu0 %2329
    %v2332 = vlaneseq
    %v2333 = vshrl.u32 %v2332, 7
    %v2334 = vsub.s32 0, %v2333
    %v2335 = vrot.slane %v2326, %v2334
    %v2336 = vlaneseq
    %v2337 = vshrl.u32 %v2336, 7
    %v2338 = vsub.s32 0, %v2337
    %v2339 = vrot.slane %v2327, %v2338
    %v2340 = vmul.f32 %v2330, %v2335
    %v2341 = vmul.f32 %v2330, %v2339
    %v2342 = vadd.f32 %v2315, %v2340
    %v2343 = vadd.f32 %v2316, %v2341
    %2344 = vrot.lane.b32.xlu0 %v1872, 111
    %v2345 = vpop.permute.xlu0 %2344
    %2346 = vrot.lane.b32.xlu0 %v1879, 111
    %v2347 = vpop.permute.xlu0 %2346
    %v2348 = vsel %vm2321, %v2345, %v2347
    %v2351 = vsel %vm2321, %v2347, 0.0
    %v2352 = vmul.f32 %v2348, %v1313
    %v2353 = vmul.f32 %v2351, %v1314
    %2354 = vset.pattern.permute.xlu0 17
    %2355 = vperm.xlu0 %2354, %v1309
    %v2356 = vpop.permute.xlu0 %2355
    %v2358 = vlaneseq
    %v2359 = vshrl.u32 %v2358, 7
    %v2360 = vsub.s32 0, %v2359
    %v2361 = vrot.slane %v2352, %v2360
    %v2362 = vlaneseq
    %v2363 = vshrl.u32 %v2362, 7
    %v2364 = vsub.s32 0, %v2363
    %v2365 = vrot.slane %v2353, %v2364
    %v2366 = vmul.f32 %v2356, %v2361
    %v2367 = vmul.f32 %v2356, %v2365
    %v2368 = vadd.f32 %v2342, %v2366
    %v2369 = vadd.f32 %v2343, %v2367
    %2371 = vset.pattern.permute.xlu0 0
    %2372 = vperm.xlu0 %2371, %v1310
    %v2373 = vpop.permute.xlu0 %2372
    %v2375 = vadd.f32 %v2368, %v2373
    %v2376 = vadd.f32 %v2369, %v2373
    %v2377 = vmax.f32 %v2375, 0.0
    %v2378 = vmax.f32 %v2376, 0.0
    %2381 = vrot.lane.b32.xlu0 %v2377, 127
    %v2382 = vpop.permute.xlu0 %2381
    %2383 = vrot.lane.b32.xlu0 %v2378, 127
    %v2384 = vpop.permute.xlu0 %2383
    %v2385 = vsel %vm2150, %v2382, %v2384
    %v2388 = vsel %vm2150, %v2384, 0.0
    %2389 = vrot.lane.b32.xlu0 %v2377, 126
    %v2390 = vpop.permute.xlu0 %2389
    %2391 = vrot.lane.b32.xlu0 %v2378, 126
    %v2392 = vpop.permute.xlu0 %2391
    %vm2393 = vcmask 1031168
    %v2394 = vsel %vm2393, %v2390, %v2392
    %v2397 = vsel %vm2393, %v2392, 0.0
    %v2398 = vmax.f32 %v2385, %v2394
    %v2399 = vmax.f32 %v2388, %v2397
    %v2400 = vmax.f32 %v2377, %v2398
    %v2401 = vmax.f32 %v2378, %v2399
    %2404 = vrot.lane.b32.xlu0 %v2400, 112
    %v2405 = vpop.permute.xlu0 %2404
    %2406 = vrot.lane.b32.xlu0 %v2401, 112
    %v2407 = vpop.permute.xlu0 %2406
    %v2408 = vsel %vm2264, %v2405, %v2407
    %v2411 = vsel %vm2264, %v2407, 0.0
    %2412 = vrot.lane.b32.xlu0 %v2400, 96
    %v2413 = vpop.permute.xlu0 %2412
    %2414 = vrot.lane.b32.xlu0 %v2401, 96
    %v2415 = vpop.permute.xlu0 %2414
    %vm2416 = vcmask 785408
    %v2417 = vsel %vm2416, %v2413, %v2415
    %v2420 = vsel %vm2416, %v2415, 0.0
    %v2421 = vmax.f32 %v2408, %v2417
    %v2422 = vmax.f32 %v2411, %v2420
    %v2423 = vmax.f32 %v2400, %v2421
    %v2424 = vmax.f32 %v2401, %v2422
    %2425 = vmatprep.subr.mxu0 0.0
    %2426 = vmatpush1.msra.mxu0 %v1323
    %2427 = vmatprep.subr.mxu0 0.0
    %2428 = vmatpush1.msra.mxu0 %v1324
    %2429 = vmatprep.subr.mxu0 0.0
    %2430 = vmatpush1.msra.mxu0 %v1325
    %2431 = vmatprep.subr.mxu0 0.0
    %2432 = vmatpush1.msra.mxu0 %v1326
    %2433 = vmatprep.subr.mxu0 0.0
    %2434 = vmatpush1.msra.mxu0 %v1327
    %2435 = vmatprep.subr.mxu0 0.0
    %2436 = vmatpush1.msra.mxu0 %v1328
    %2437 = vmatprep.subr.mxu0 0.0
    %2438 = vmatpush1.msra.mxu0 %v1329
    %2439 = vmatprep.subr.mxu0 0.0
    %2440 = vmatpush1.msra.mxu0 %v1330
    %2441 = vmatprep.subr.mxu0 0.0
    %2442 = vmatpush1.msra.mxu0 %v1331
    %2443 = vmatprep.subr.mxu0 0.0
    %2444 = vmatpush1.msra.mxu0 %v1332
    %2445 = vmatprep.subr.mxu0 0.0
    %2446 = vmatpush1.msra.mxu0 %v1333
    %2447 = vmatprep.subr.mxu0 0.0
    %2448 = vmatpush1.msra.mxu0 %v1334
    %2449 = vmatprep.subr.mxu0 0.0
    %2450 = vmatpush1.msra.mxu0 %v1335
    %2451 = vmatprep.subr.mxu0 0.0
    %2452 = vmatpush1.msra.mxu0 %v1336
    %2453 = vmatprep.subr.mxu0 0.0
    %2454 = vmatpush1.msra.mxu0 %v1337
    %2455 = vmatprep.subr.mxu0 0.0
    %2456 = vmatpush1.msra.mxu0 %v1338
    %2457 = vmatprep.subr.mxu0 0.0
    %2458 = vmatpush1.msra.mxu0 %v1339
    %2459 = vmatprep.subr.mxu0 0.0
    %2460 = vmatpush1.msra.mxu0 %v1340
    %2461 = vmatprep.subr.mxu0 0.0
    %2462 = vmatpush1.msra.mxu0 %v1341
    %2463 = vmatprep.subr.mxu0 0.0
    %2464 = vmatpush1.msra.mxu0 %v1342
    %2465 = vmatprep.subr.mxu0 0.0
    %2466 = vmatpush1.msra.mxu0 %v1343
    %2467 = vmatprep.subr.mxu0 0.0
    %2468 = vmatpush1.msra.mxu0 %v1344
    %2469 = vmatprep.subr.mxu0 0.0
    %2470 = vmatpush1.msra.mxu0 %v1345
    %2471 = vmatprep.subr.mxu0 0.0
    %2472 = vmatpush1.msra.mxu0 %v1346
    %2473 = vmatprep.subr.mxu0 0.0
    %2474 = vmatpush1.msra.mxu0 %v1347
    %2475 = vmatprep.subr.mxu0 0.0
    %2476 = vmatpush1.msra.mxu0 %v1348
    %2477 = vmatprep.subr.mxu0 0.0
    %2478 = vmatpush1.msra.mxu0 %v1349
    %2479 = vmatprep.subr.mxu0 0.0
    %2480 = vmatpush1.msra.mxu0 %v1350
    %2481 = vmatprep.subr.mxu0 0.0
    %2482 = vmatpush1.msra.mxu0 %v1351
    %2483 = vmatprep.subr.mxu0 0.0
    %2484 = vmatpush1.msra.mxu0 %v1352
    %2485 = vmatprep.subr.mxu0 0.0
    %2486 = vmatpush1.msra.mxu0 %v1353
    %2487 = vmatprep.subr.mxu0 0.0
    %2488 = vmatpush1.msra.mxu0 %v1354
    %2489 = vmatprep.mubr.f32.mxu0 %v2424
    %2490 = vmatmul.mubr.f32.gmra.mrb[0].mxu0 %v2423
    %v2491 = vpop.f32.mrb[0].mxu0
    %v2492 = vadd.f32 0.0, %v2491
    %v2493 = vpop.f32.mrb[0].mxu0
    %2494 = vdwg.mxu0
    %vm2495 = vcmask 203776
    %v2497 = vsel %vm2495, %v2492, 0
    %vm2499 = vcmask 1040384
    %v2501 = vsel %vm2499, %v1361, 0
    %v2504 = vsel %vm2499, %v1362, 0
    %2506 = vmatprep.subr.mxu0 %v1356
    %2507 = vmatpush1.msra.mxu0 %v1355
    %2508 = vmatprep.subr.mxu0 %v1358
    %2509 = vmatpush1.msra.mxu0 %v1357
    %2510 = vmatprep.subr.mxu0 %v1360
    %2511 = vmatpush1.msra.mxu0 %v1359
    %2512 = vmatprep.subr.mxu0 %v2504
    %2513 = vmatpush1.msra.mxu0 %v2501
    %2514 = vmatprep.subr.mxu0 0.0
    %2515 = vmatpush1.msra.mxu0 0.0
    %2516 = vmatprep.subr.mxu0 0.0
    %2517 = vmatpush1.msra.mxu0 0.0
    %2518 = vmatprep.subr.mxu0 0.0
    %2519 = vmatpush1.msra.mxu0 0.0
    %2520 = vmatprep.subr.mxu0 0.0
    %2521 = vmatpush1.msra.mxu0 0.0
    %2522 = vmatprep.subr.mxu0 0.0
    %2523 = vmatpush1.msra.mxu0 0.0
    %2524 = vmatprep.subr.mxu0 0.0
    %2525 = vmatpush1.msra.mxu0 0.0
    %2526 = vmatprep.subr.mxu0 0.0
    %2527 = vmatpush1.msra.mxu0 0.0
    %2528 = vmatprep.subr.mxu0 0.0
    %2529 = vmatpush1.msra.mxu0 0.0
    %2530 = vmatprep.subr.mxu0 0.0
    %2531 = vmatpush1.msra.mxu0 0.0
    %2532 = vmatprep.subr.mxu0 0.0
    %2533 = vmatpush1.msra.mxu0 0.0
    %2534 = vmatprep.subr.mxu0 0.0
    %2535 = vmatpush1.msra.mxu0 0.0
    %2536 = vmatprep.subr.mxu0 0.0
    %2537 = vmatpush1.msra.mxu0 0.0
    %2538 = vmatprep.subr.mxu0 0.0
    %2539 = vmatpush1.msra.mxu0 0.0
    %2540 = vmatprep.subr.mxu0 0.0
    %2541 = vmatpush1.msra.mxu0 0.0
    %2542 = vmatprep.subr.mxu0 0.0
    %2543 = vmatpush1.msra.mxu0 0.0
    %2544 = vmatprep.subr.mxu0 0.0
    %2545 = vmatpush1.msra.mxu0 0.0
    %2546 = vmatprep.subr.mxu0 0.0
    %2547 = vmatpush1.msra.mxu0 0.0
    %2548 = vmatprep.subr.mxu0 0.0
    %2549 = vmatpush1.msra.mxu0 0.0
    %2550 = vmatprep.subr.mxu0 0.0
    %2551 = vmatpush1.msra.mxu0 0.0
    %2552 = vmatprep.subr.mxu0 0.0
    %2553 = vmatpush1.msra.mxu0 0.0
    %2554 = vmatprep.subr.mxu0 0.0
    %2555 = vmatpush1.msra.mxu0 0.0
    %2556 = vmatprep.subr.mxu0 0.0
    %2557 = vmatpush1.msra.mxu0 0.0
    %2558 = vmatprep.subr.mxu0 0.0
    %2559 = vmatpush1.msra.mxu0 0.0
    %2560 = vmatprep.subr.mxu0 0.0
    %2561 = vmatpush1.msra.mxu0 0.0
    %2562 = vmatprep.subr.mxu0 0.0
    %2563 = vmatpush1.msra.mxu0 0.0
    %2564 = vmatprep.subr.mxu0 0.0
    %2565 = vmatpush1.msra.mxu0 0.0
    %2566 = vmatprep.subr.mxu0 0.0
    %2567 = vmatpush1.msra.mxu0 0.0
    %2568 = vmatprep.subr.mxu0 0.0
    %2569 = vmatpush1.msra.mxu0 0.0
    %2570 = vmatprep.mubr.f32.mxu0 0.0
    %2571 = vmatmul.mubr.f32.gmra.mrb[0].mxu0 %v2497
    %v2572 = vpop.f32.mrb[0].mxu0
    %v2573 = vadd.f32 0.0, %v2572
    %v2574 = vpop.f32.mrb[0].mxu0
    %v2575 = vadd.f32 0.0, %v2574
    %2576 = vdwg.mxu0
    %v2577 = vmul.f32 %v2573, %v1363
    %v2578 = vmul.f32 %v2575, %v1364
    %v2579 = vrot.slane %v2577, 4
    %v2580 = vadd.f32 %v2577, %v2579
    %v2581 = vrot.slane %v2580, 2
    %v2582 = vadd.f32 %v2580, %v2581
    %v2583 = vrot.slane %v2582, 1
    %v2584 = vadd.f32 %v2582, %v2583
    %vm2585 = vcmask 588800
    %v2586 = vsel %vm2585, %v2578, 0.0
    %v2587 = vrot.slane %v2586, 4
    %v2588 = vadd.f32 %v2586, %v2587
    %v2589 = vrot.slane %v2588, 2
    %v2590 = vadd.f32 %v2588, %v2589
    %v2591 = vrot.slane %v2590, 1
    %v2592 = vadd.f32 %v2590, %v2591
    %v2594 = vsel %vm2585, %v2592, 0
    %2596 = vmatprep.subr.mxu0 0.0
    %2597 = vmatpush1.msra.mxu0 %v1365
    %2598 = vmatprep.subr.mxu0 0.0
    %2599 = vmatpush1.msra.mxu0 %v1366
    %2600 = vmatprep.subr.mxu0 0.0
    %2601 = vmatpush1.msra.mxu0 %v1367
    %2602 = vmatprep.subr.mxu0 0.0
    %2603 = vmatpush1.msra.mxu0 %v1368
    %2604 = vmatprep.subr.mxu0 0.0
    %2605 = vmatpush1.msra.mxu0 %v1369
    %2606 = vmatprep.subr.mxu0 0.0
    %2607 = vmatpush1.msra.mxu0 %v1370
    %2608 = vmatprep.subr.mxu0 0.0
    %2609 = vmatpush1.msra.mxu0 %v1371
    %2610 = vmatprep.subr.mxu0 0.0
    %2611 = vmatpush1.msra.mxu0 %v1372
    %2612 = vmatprep.subr.mxu0 0.0
    %2613 = vmatpush1.msra.mxu0 %v1373
    %2614 = vmatprep.subr.mxu0 0.0
    %2615 = vmatpush1.msra.mxu0 %v1374
    %2616 = vmatprep.subr.mxu0 0.0
    %2617 = vmatpush1.msra.mxu0 %v1375
    %2618 = vmatprep.subr.mxu0 0.0
    %2619 = vmatpush1.msra.mxu0 %v1376
    %2620 = vmatprep.subr.mxu0 0.0
    %2621 = vmatpush1.msra.mxu0 %v1377
    %2622 = vmatprep.subr.mxu0 0.0
    %2623 = vmatpush1.msra.mxu0 %v1378
    %2624 = vmatprep.subr.mxu0 0.0
    %2625 = vmatpush1.msra.mxu0 %v1379
    %2626 = vmatprep.subr.mxu0 0.0
    %2627 = vmatpush1.msra.mxu0 %v1380
    %2628 = vmatprep.subr.mxu0 0.0
    %2629 = vmatpush1.msra.mxu0 %v1381
    %2630 = vmatprep.subr.mxu0 0.0
    %2631 = vmatpush1.msra.mxu0 %v1382
    %2632 = vmatprep.subr.mxu0 0.0
    %2633 = vmatpush1.msra.mxu0 %v1383
    %2634 = vmatprep.subr.mxu0 0.0
    %2635 = vmatpush1.msra.mxu0 %v1384
    %2636 = vmatprep.subr.mxu0 0.0
    %2637 = vmatpush1.msra.mxu0 %v1385
    %2638 = vmatprep.subr.mxu0 0.0
    %2639 = vmatpush1.msra.mxu0 %v1386
    %2640 = vmatprep.subr.mxu0 0.0
    %2641 = vmatpush1.msra.mxu0 %v1387
    %2642 = vmatprep.subr.mxu0 0.0
    %2643 = vmatpush1.msra.mxu0 %v1388
    %2644 = vmatprep.subr.mxu0 0.0
    %2645 = vmatpush1.msra.mxu0 %v1389
    %2646 = vmatprep.subr.mxu0 0.0
    %2647 = vmatpush1.msra.mxu0 0.0
    %2648 = vmatprep.subr.mxu0 0.0
    %2649 = vmatpush1.msra.mxu0 0.0
    %2650 = vmatprep.subr.mxu0 0.0
    %2651 = vmatpush1.msra.mxu0 0.0
    %2652 = vmatprep.subr.mxu0 0.0
    %2653 = vmatpush1.msra.mxu0 0.0
    %2654 = vmatprep.subr.mxu0 0.0
    %2655 = vmatpush1.msra.mxu0 0.0
    %2656 = vmatprep.subr.mxu0 0.0
    %2657 = vmatpush1.msra.mxu0 0.0
    %2658 = vmatprep.subr.mxu0 0.0
    %2659 = vmatpush1.msra.mxu0 0.0
    %2660 = vmatprep.mubr.f32.mxu0 %v2594
    %2661 = vmatmul.mubr.f32.gmra.mrb[0].mxu0 %v2584
    %v2662 = vpop.f32.mrb[0].mxu0
    %v2663 = vadd.f32 %v1390, %v2662
    %v2664 = vpop.f32.mrb[0].mxu0
    %2665 = vdwg.mxu0
    %v2666 = vmax.f32 %v2663, 0.0
    %v2668 = vsel %vm109, %v2666, 0
    %2670 = vmatprep.subr.mxu0 0.0
    %2671 = vmatpush1.msra.mxu0 %v1391
    %2672 = vmatprep.subr.mxu0 0.0
    %2673 = vmatpush1.msra.mxu0 %v1392
    %2674 = vmatprep.subr.mxu0 0.0
    %2675 = vmatpush1.msra.mxu0 %v1393
    %2676 = vmatprep.subr.mxu0 0.0
    %2677 = vmatpush1.msra.mxu0 %v1394
    %2678 = vmatprep.subr.mxu0 0.0
    %2679 = vmatpush1.msra.mxu0 0.0
    %2680 = vmatprep.subr.mxu0 0.0
    %2681 = vmatpush1.msra.mxu0 0.0
    %2682 = vmatprep.subr.mxu0 0.0
    %2683 = vmatpush1.msra.mxu0 0.0
    %2684 = vmatprep.subr.mxu0 0.0
    %2685 = vmatpush1.msra.mxu0 0.0
    %2686 = vmatprep.subr.mxu0 0.0
    %2687 = vmatpush1.msra.mxu0 0.0
    %2688 = vmatprep.subr.mxu0 0.0
    %2689 = vmatpush1.msra.mxu0 0.0
    %2690 = vmatprep.subr.mxu0 0.0
    %2691 = vmatpush1.msra.mxu0 0.0
    %2692 = vmatprep.subr.mxu0 0.0
    %2693 = vmatpush1.msra.mxu0 0.0
    %2694 = vmatprep.subr.mxu0 0.0
    %2695 = vmatpush1.msra.mxu0 0.0
    %2696 = vmatprep.subr.mxu0 0.0
    %2697 = vmatpush1.msra.mxu0 0.0
    %2698 = vmatprep.subr.mxu0 0.0
    %2699 = vmatpush1.msra.mxu0 0.0
    %2700 = vmatprep.subr.mxu0 0.0
    %2701 = vmatpush1.msra.mxu0 0.0
    %2702 = vmatprep.subr.mxu0 0.0
    %2703 = vmatpush1.msra.mxu0 0.0
    %2704 = vmatprep.subr.mxu0 0.0
    %2705 = vmatpush1.msra.mxu0 0.0
    %2706 = vmatprep.subr.mxu0 0.0
    %2707 = vmatpush1.msra.mxu0 0.0
    %2708 = vmatprep.subr.mxu0 0.0
    %2709 = vmatpush1.msra.mxu0 0.0
    %2710 = vmatprep.subr.mxu0 0.0
    %2711 = vmatpush1.msra.mxu0 0.0
    %2712 = vmatprep.subr.mxu0 0.0
    %2713 = vmatpush1.msra.mxu0 0.0
    %2714 = vmatprep.subr.mxu0 0.0
    %2715 = vmatpush1.msra.mxu0 0.0
    %2716 = vmatprep.subr.mxu0 0.0
    %2717 = vmatpush1.msra.mxu0 0.0
    %2718 = vmatprep.subr.mxu0 0.0
    %2719 = vmatpush1.msra.mxu0 0.0
    %2720 = vmatprep.subr.mxu0 0.0
    %2721 = vmatpush1.msra.mxu0 0.0
    %2722 = vmatprep.subr.mxu0 0.0
    %2723 = vmatpush1.msra.mxu0 0.0
    %2724 = vmatprep.subr.mxu0 0.0
    %2725 = vmatpush1.msra.mxu0 0.0
    %2726 = vmatprep.subr.mxu0 0.0
    %2727 = vmatpush1.msra.mxu0 0.0
    %2728 = vmatprep.subr.mxu0 0.0
    %2729 = vmatpush1.msra.mxu0 0.0
    %2730 = vmatprep.subr.mxu0 0.0
    %2731 = vmatpush1.msra.mxu0 0.0
    %2732 = vmatprep.subr.mxu0 0.0
    %2733 = vmatpush1.msra.mxu0 0.0
    %2734 = vmatprep.mubr.f32.mxu0 0.0
    %2735 = vmatmul.mubr.f32.gmra.mrb[0].mxu0 %v2668
    %v2736 = vpop.f32.mrb[0].mxu0
    %v2737 = vadd.f32 %v1395, %v2736
    %v2738 = vpop.f32.mrb[0].mxu0
    %2739 = vdwg.mxu0
    %2744 = vrot.lane.b32.xlu0 %v707, 96
    %v2745 = vpop.permute.xlu0 %2744
    %2746 = vrot.lane.b32.xlu0 %v708, 96
    %v2747 = vpop.permute.xlu0 %2746
    %2748 = vrot.lane.b32.xlu0 %v709, 96
    %v2749 = vpop.permute.xlu0 %2748
    %2750 = vrot.lane.b32.xlu0 %v710, 96
    %v2751 = vpop.permute.xlu0 %2750
    %v2756 = vsel %vm109, %v2745, %v1003
    %v2757 = vsel %vm109, %v2747, %v1004
    %v2758 = vsel %vm109, %v2749, %v1005
    %v2759 = vsel %vm109, %v2751, %v1006
    %v2760 = vld [vmem:[%s87] sm:$0xff]
    %v2761 = vld [vmem:[%s87 + $0x8] sm:$0xff]
    %v2762 = vld [vmem:[%s90] sm:$0xff]
    %v2763 = vld [vmem:[%s90 + $0x8] sm:$0xff]
    %s2764 = scalar_lea.vmem %s2, 16
    %v2765 = vld [vmem:[%s2764] sm:$0xff]
    %v2766 = vld [vmem:[%s2764 + $0x8] sm:$0xff]
    %s2767 = scalar_lea.vmem %s3, 1
    %v2768 = vld [vmem:[%s2767] sm:$0x1]
    %2770 = vset.pattern.permute.xlu0 0
    %2771 = vperm.xlu0 %2770, %v2765
    %v2772 = vpop.permute.xlu0 %2771
    %2775 = vset.pattern.permute.xlu0 0
    %2776 = vperm.xlu0 %2775, %v2766
    %v2777 = vpop.permute.xlu0 %2776
    %v2780 = vlaneseq
    %v2781 = vshrl.u32 %v2780, 7
    %v2782 = vsub.s32 0, %v2781
    %v2783 = vrot.slane %v2768, %v2782
    %v2785 = vmul.f32 %v2772, %v2783
    %v2786 = vmul.f32 %v2777, %v2783
    %v2788 = vsel %vm109, %v2760, 0
    %v2791 = vsel %vm109, %v2761, 0
    %v2794 = vsel %vm109, %v2762, 0
    %v2797 = vsel %vm109, %v2763, 0
    %2799 = vmatprep.subr.mxu0 0.0
    %2800 = vmatpush1.xpose.msra.mxu0 %v2794
    %2801 = vmatprep.subr.mxu0 0.0
    %2802 = vmatpush1.xpose.msra.mxu0 %v2797
    %2803 = vmatprep.subr.mxu0 0.0
    %2804 = vmatpush1.xpose.msra.mxu0 0.0
    %2805 = vmatprep.subr.mxu0 0.0
    %2806 = vmatpush1.xpose.msra.mxu0 0.0
    %2807 = vmatprep.subr.mxu0 0.0
    %2808 = vmatpush1.xpose.msra.mxu0 0.0
    %2809 = vmatprep.subr.mxu0 0.0
    %2810 = vmatpush1.xpose.msra.mxu0 0.0
    %2811 = vmatprep.subr.mxu0 0.0
    %2812 = vmatpush1.xpose.msra.mxu0 0.0
    %2813 = vmatprep.subr.mxu0 0.0
    %2814 = vmatpush1.xpose.msra.mxu0 0.0
    %2815 = vmatprep.subr.mxu0 0.0
    %2816 = vmatpush1.xpose.msra.mxu0 0.0
    %2817 = vmatprep.subr.mxu0 0.0
    %2818 = vmatpush1.xpose.msra.mxu0 0.0
    %2819 = vmatprep.subr.mxu0 0.0
    %2820 = vmatpush1.xpose.msra.mxu0 0.0
    %2821 = vmatprep.subr.mxu0 0.0
    %2822 = vmatpush1.xpose.msra.mxu0 0.0
    %2823 = vmatprep.subr.mxu0 0.0
    %2824 = vmatpush1.xpose.msra.mxu0 0.0
    %2825 = vmatprep.subr.mxu0 0.0
    %2826 = vmatpush1.xpose.msra.mxu0 0.0
    %2827 = vmatprep.subr.mxu0 0.0
    %2828 = vmatpush1.xpose.msra.mxu0 0.0
    %2829 = vmatprep.subr.mxu0 0.0
    %2830 = vmatpush1.xpose.msra.mxu0 0.0
    %2831 = vmatprep.subr.mxu0 0.0
    %2832 = vmatpush1.xpose.msra.mxu0 0.0
    %2833 = vmatprep.subr.mxu0 0.0
    %2834 = vmatpush1.xpose.msra.mxu0 0.0
    %2835 = vmatprep.subr.mxu0 0.0
    %2836 = vmatpush1.xpose.msra.mxu0 0.0
    %2837 = vmatprep.subr.mxu0 0.0
    %2838 = vmatpush1.xpose.msra.mxu0 0.0
    %2839 = vmatprep.subr.mxu0 0.0
    %2840 = vmatpush1.xpose.msra.mxu0 0.0
    %2841 = vmatprep.subr.mxu0 0.0
    %2842 = vmatpush1.xpose.msra.mxu0 0.0
    %2843 = vmatprep.subr.mxu0 0.0
    %2844 = vmatpush1.xpose.msra.mxu0 0.0
    %2845 = vmatprep.subr.mxu0 0.0
    %2846 = vmatpush1.xpose.msra.mxu0 0.0
    %2847 = vmatprep.subr.mxu0 0.0
    %2848 = vmatpush1.xpose.msra.mxu0 0.0
    %2849 = vmatprep.subr.mxu0 0.0
    %2850 = vmatpush1.xpose.msra.mxu0 0.0
    %2851 = vmatprep.subr.mxu0 0.0
    %2852 = vmatpush1.xpose.msra.mxu0 0.0
    %2853 = vmatprep.subr.mxu0 0.0
    %2854 = vmatpush1.xpose.msra.mxu0 0.0
    %2855 = vmatprep.subr.mxu0 0.0
    %2856 = vmatpush1.xpose.msra.mxu0 0.0
    %2857 = vmatprep.subr.mxu0 0.0
    %2858 = vmatpush1.xpose.msra.mxu0 0.0
    %2859 = vmatprep.subr.mxu0 0.0
    %2860 = vmatpush1.xpose.msra.mxu0 0.0
    %2861 = vmatprep.subr.mxu0 0.0
    %2862 = vmatpush1.xpose.msra.mxu0 0.0
    %2863 = vmatprep.mubr.f32.mxu0 0.0
    %2864 = vmatmul.mubr.f32.gmra.mrb[0].mxu0 %v2788
    %v2865 = vpop.f32.mrb[0].mxu0
    %v2866 = vadd.f32 0.0, %v2865
    %v2867 = vpop.f32.mrb[0].mxu0
    %2868 = vmatprep.mubr.f32.mxu0 0.0
    %2869 = vmatmul.mubr.f32.gmra.mrb[0].mxu0 %v2791
    %v2870 = vpop.f32.mrb[0].mxu0
    %v2871 = vadd.f32 0.0, %v2870
    %v2872 = vpop.f32.mrb[0].mxu0
    %2873 = vdwg.mxu0
    %v2875 = vsel %vm1500, %v2756, 0
    %v2878 = vsel %vm1500, %v2757, 0
    %2880 = vmatprep.subr.mxu0 0.0
    %2881 = vmatpush1.msra.mxu0 %v1301
    %2882 = vmatprep.subr.mxu0 0.0
    %2883 = vmatpush1.msra.mxu0 %v1302
    %2884 = vmatprep.subr.mxu0 0.0
    %2885 = vmatpush1.msra.mxu0 %v1303
    %2886 = vmatprep.subr.mxu0 0.0
    %2887 = vmatpush1.msra.mxu0 %v1304
    %2888 = vmatprep.subr.mxu0 0.0
    %2889 = vmatpush1.msra.mxu0 %v1305
    %2890 = vmatprep.subr.mxu0 0.0
    %2891 = vmatpush1.msra.mxu0 %v1306
    %2892 = vmatprep.subr.mxu0 0.0
    %2893 = vmatpush1.msra.mxu0 %v1307
    %2894 = vmatprep.subr.mxu0 0.0
    %2895 = vmatpush1.msra.mxu0 %v1308
    %2896 = vmatprep.subr.mxu0 0.0
    %2897 = vmatpush1.msra.mxu0 0.0
    %2898 = vmatprep.subr.mxu0 0.0
    %2899 = vmatpush1.msra.mxu0 0.0
    %2900 = vmatprep.subr.mxu0 0.0
    %2901 = vmatpush1.msra.mxu0 0.0
    %2902 = vmatprep.subr.mxu0 0.0
    %2903 = vmatpush1.msra.mxu0 0.0
    %2904 = vmatprep.subr.mxu0 0.0
    %2905 = vmatpush1.msra.mxu0 0.0
    %2906 = vmatprep.subr.mxu0 0.0
    %2907 = vmatpush1.msra.mxu0 0.0
    %2908 = vmatprep.subr.mxu0 0.0
    %2909 = vmatpush1.msra.mxu0 0.0
    %2910 = vmatprep.subr.mxu0 0.0
    %2911 = vmatpush1.msra.mxu0 0.0
    %2912 = vmatprep.subr.mxu0 0.0
    %2913 = vmatpush1.msra.mxu0 0.0
    %2914 = vmatprep.subr.mxu0 0.0
    %2915 = vmatpush1.msra.mxu0 0.0
    %2916 = vmatprep.subr.mxu0 0.0
    %2917 = vmatpush1.msra.mxu0 0.0
    %2918 = vmatprep.subr.mxu0 0.0
    %2919 = vmatpush1.msra.mxu0 0.0
    %2920 = vmatprep.subr.mxu0 0.0
    %2921 = vmatpush1.msra.mxu0 0.0
    %2922 = vmatprep.subr.mxu0 0.0
    %2923 = vmatpush1.msra.mxu0 0.0
    %2924 = vmatprep.subr.mxu0 0.0
    %2925 = vmatpush1.msra.mxu0 0.0
    %2926 = vmatprep.subr.mxu0 0.0
    %2927 = vmatpush1.msra.mxu0 0.0
    %2928 = vmatprep.subr.mxu0 0.0
    %2929 = vmatpush1.msra.mxu0 0.0
    %2930 = vmatprep.subr.mxu0 0.0
    %2931 = vmatpush1.msra.mxu0 0.0
    %2932 = vmatprep.subr.mxu0 0.0
    %2933 = vmatpush1.msra.mxu0 0.0
    %2934 = vmatprep.subr.mxu0 0.0
    %2935 = vmatpush1.msra.mxu0 0.0
    %2936 = vmatprep.subr.mxu0 0.0
    %2937 = vmatpush1.msra.mxu0 0.0
    %2938 = vmatprep.subr.mxu0 0.0
    %2939 = vmatpush1.msra.mxu0 0.0
    %2940 = vmatprep.subr.mxu0 0.0
    %2941 = vmatpush1.msra.mxu0 0.0
    %2942 = vmatprep.subr.mxu0 0.0
    %2943 = vmatpush1.msra.mxu0 0.0
    %2944 = vmatprep.mubr.f32.mxu0 0.0
    %2945 = vmatmul.mubr.f32.gmra.mrb[0].mxu0 %v2875
    %v2946 = vpop.f32.mrb[0].mxu0
    %v2947 = vadd.f32 0.0, %v2946
    %v2948 = vpop.f32.mrb[0].mxu0
    %2949 = vmatprep.mubr.f32.mxu0 0.0
    %2950 = vmatmul.mubr.f32.gmra.mrb[0].mxu0 %v2878
    %v2951 = vpop.f32.mrb[0].mxu0
    %v2952 = vadd.f32 0.0, %v2951
    %v2953 = vpop.f32.mrb[0].mxu0
    %2954 = vdwg.mxu0
    %v2956 = vsel %vm1500, %v2947, 0
    %v2959 = vsel %vm1500, %v2952, 0
    %v2962 = vsel %vm1500, %v2758, 0
    %v2965 = vsel %vm1500, %v2759, 0
    %2967 = vmatprep.subr.mxu0 0.0
    %2968 = vmatpush1.xpose.msra.mxu0 %v2962
    %2969 = vmatprep.subr.mxu0 0.0
    %2970 = vmatpush1.xpose.msra.mxu0 %v2965
    %2971 = vmatprep.subr.mxu0 0.0
    %2972 = vmatpush1.xpose.msra.mxu0 0.0
    %2973 = vmatprep.subr.mxu0 0.0
    %2974 = vmatpush1.xpose.msra.mxu0 0.0
    %2975 = vmatprep.subr.mxu0 0.0
    %2976 = vmatpush1.xpose.msra.mxu0 0.0
    %2977 = vmatprep.subr.mxu0 0.0
    %2978 = vmatpush1.xpose.msra.mxu0 0.0
    %2979 = vmatprep.subr.mxu0 0.0
    %2980 = vmatpush1.xpose.msra.mxu0 0.0
    %2981 = vmatprep.subr.mxu0 0.0
    %2982 = vmatpush1.xpose.msra.mxu0 0.0
    %2983 = vmatprep.subr.mxu0 0.0
    %2984 = vmatpush1.xpose.msra.mxu0 0.0
    %2985 = vmatprep.subr.mxu0 0.0
    %2986 = vmatpush1.xpose.msra.mxu0 0.0
    %2987 = vmatprep.subr.mxu0 0.0
    %2988 = vmatpush1.xpose.msra.mxu0 0.0
    %2989 = vmatprep.subr.mxu0 0.0
    %2990 = vmatpush1.xpose.msra.mxu0 0.0
    %2991 = vmatprep.subr.mxu0 0.0
    %2992 = vmatpush1.xpose.msra.mxu0 0.0
    %2993 = vmatprep.subr.mxu0 0.0
    %2994 = vmatpush1.xpose.msra.mxu0 0.0
    %2995 = vmatprep.subr.mxu0 0.0
    %2996 = vmatpush1.xpose.msra.mxu0 0.0
    %2997 = vmatprep.subr.mxu0 0.0
    %2998 = vmatpush1.xpose.msra.mxu0 0.0
    %2999 = vmatprep.subr.mxu0 0.0
    %3000 = vmatpush1.xpose.msra.mxu0 0.0
    %3001 = vmatprep.subr.mxu0 0.0
    %3002 = vmatpush1.xpose.msra.mxu0 0.0
    %3003 = vmatprep.subr.mxu0 0.0
    %3004 = vmatpush1.xpose.msra.mxu0 0.0
    %3005 = vmatprep.subr.mxu0 0.0
    %3006 = vmatpush1.xpose.msra.mxu0 0.0
    %3007 = vmatprep.subr.mxu0 0.0
    %3008 = vmatpush1.xpose.msra.mxu0 0.0
    %3009 = vmatprep.subr.mxu0 0.0
    %3010 = vmatpush1.xpose.msra.mxu0 0.0
    %3011 = vmatprep.subr.mxu0 0.0
    %3012 = vmatpush1.xpose.msra.mxu0 0.0
    %3013 = vmatprep.subr.mxu0 0.0
    %3014 = vmatpush1.xpose.msra.mxu0 0.0
    %3015 = vmatprep.subr.mxu0 0.0
    %3016 = vmatpush1.xpose.msra.mxu0 0.0
    %3017 = vmatprep.subr.mxu0 0.0
    %3018 = vmatpush1.xpose.msra.mxu0 0.0
    %3019 = vmatprep.subr.mxu0 0.0
    %3020 = vmatpush1.xpose.msra.mxu0 0.0
    %3021 = vmatprep.subr.mxu0 0.0
    %3022 = vmatpush1.xpose.msra.mxu0 0.0
    %3023 = vmatprep.subr.mxu0 0.0
    %3024 = vmatpush1.xpose.msra.mxu0 0.0
    %3025 = vmatprep.subr.mxu0 0.0
    %3026 = vmatpush1.xpose.msra.mxu0 0.0
    %3027 = vmatprep.subr.mxu0 0.0
    %3028 = vmatpush1.xpose.msra.mxu0 0.0
    %3029 = vmatprep.subr.mxu0 0.0
    %3030 = vmatpush1.xpose.msra.mxu0 0.0
    %3031 = vmatprep.mubr.f32.mxu0 0.0
    %3032 = vmatmul.mubr.f32.gmra.mrb[0].mxu0 %v2956
    %v3033 = vpop.f32.mrb[0].mxu0
    %v3034 = vadd.f32 0.0, %v3033
    %v3035 = vpop.f32.mrb[0].mxu0
    %3036 = vmatprep.mubr.f32.mxu0 0.0
    %3037 = vmatmul.mubr.f32.gmra.mrb[0].mxu0 %v2959
    %v3038 = vpop.f32.mrb[0].mxu0
    %v3039 = vadd.f32 0.0, %v3038
    %v3040 = vpop.f32.mrb[0].mxu0
    %3041 = vdwg.mxu0
    %v3042 = vmax.f32 %v2866, 0.0
    %v3043 = vmax.f32 %v2871, 0.0
    %v3044 = vmul.f32 %v3042, %v2785
    %v3045 = vmul.f32 %v3043, %v2786
    %v3046 = vmax.f32 %v3034, 0.0
    %v3047 = vmax.f32 %v3039, 0.0
    %v3048 = vmul.f32 %v3046, %v2785
    %v3049 = vmul.f32 %v3047, %v2786
    %v3051 = vsel %vm1677, %v3044, 0
    %v3054 = vsel %vm1677, %v3045, 0
    %3056 = vmatprep.subr.mxu0 %v1316
    %3057 = vmatpush1.msra.mxu0 %v1315
    %3058 = vmatprep.subr.mxu0 %v1318
    %3059 = vmatpush1.msra.mxu0 %v1317
    %3060 = vmatprep.subr.mxu0 0.0
    %3061 = vmatpush1.msra.mxu0 0.0
    %3062 = vmatprep.subr.mxu0 0.0
    %3063 = vmatpush1.msra.mxu0 0.0
    %3064 = vmatprep.subr.mxu0 0.0
    %3065 = vmatpush1.msra.mxu0 0.0
    %3066 = vmatprep.subr.mxu0 0.0
    %3067 = vmatpush1.msra.mxu0 0.0
    %3068 = vmatprep.subr.mxu0 0.0
    %3069 = vmatpush1.msra.mxu0 0.0
    %3070 = vmatprep.subr.mxu0 0.0
    %3071 = vmatpush1.msra.mxu0 0.0
    %3072 = vmatprep.subr.mxu0 0.0
    %3073 = vmatpush1.msra.mxu0 0.0
    %3074 = vmatprep.subr.mxu0 0.0
    %3075 = vmatpush1.msra.mxu0 0.0
    %3076 = vmatprep.subr.mxu0 0.0
    %3077 = vmatpush1.msra.mxu0 0.0
    %3078 = vmatprep.subr.mxu0 0.0
    %3079 = vmatpush1.msra.mxu0 0.0
    %3080 = vmatprep.subr.mxu0 0.0
    %3081 = vmatpush1.msra.mxu0 0.0
    %3082 = vmatprep.subr.mxu0 0.0
    %3083 = vmatpush1.msra.mxu0 0.0
    %3084 = vmatprep.subr.mxu0 0.0
    %3085 = vmatpush1.msra.mxu0 0.0
    %3086 = vmatprep.subr.mxu0 0.0
    %3087 = vmatpush1.msra.mxu0 0.0
    %3088 = vmatprep.subr.mxu0 0.0
    %3089 = vmatpush1.msra.mxu0 0.0
    %3090 = vmatprep.subr.mxu0 0.0
    %3091 = vmatpush1.msra.mxu0 0.0
    %3092 = vmatprep.subr.mxu0 0.0
    %3093 = vmatpush1.msra.mxu0 0.0
    %3094 = vmatprep.subr.mxu0 0.0
    %3095 = vmatpush1.msra.mxu0 0.0
    %3096 = vmatprep.subr.mxu0 0.0
    %3097 = vmatpush1.msra.mxu0 0.0
    %3098 = vmatprep.subr.mxu0 0.0
    %3099 = vmatpush1.msra.mxu0 0.0
    %3100 = vmatprep.subr.mxu0 0.0
    %3101 = vmatpush1.msra.mxu0 0.0
    %3102 = vmatprep.subr.mxu0 0.0
    %3103 = vmatpush1.msra.mxu0 0.0
    %3104 = vmatprep.subr.mxu0 0.0
    %3105 = vmatpush1.msra.mxu0 0.0
    %3106 = vmatprep.subr.mxu0 0.0
    %3107 = vmatpush1.msra.mxu0 0.0
    %3108 = vmatprep.subr.mxu0 0.0
    %3109 = vmatpush1.msra.mxu0 0.0
    %3110 = vmatprep.subr.mxu0 0.0
    %3111 = vmatpush1.msra.mxu0 0.0
    %3112 = vmatprep.subr.mxu0 0.0
    %3113 = vmatpush1.msra.mxu0 0.0
    %3114 = vmatprep.subr.mxu0 0.0
    %3115 = vmatpush1.msra.mxu0 0.0
    %3116 = vmatprep.subr.mxu0 0.0
    %3117 = vmatpush1.msra.mxu0 0.0
    %3118 = vmatprep.subr.mxu0 0.0
    %3119 = vmatpush1.msra.mxu0 0.0
    %3120 = vmatprep.mubr.f32.mxu0 0.0
    %3121 = vmatmul.mubr.f32.gmra.mrb[0].mxu0 %v3051
    %v3122 = vpop.f32.mrb[0].mxu0
    %v3123 = vadd.f32 0.0, %v3122
    %v3124 = vpop.f32.mrb[0].mxu0
    %v3125 = vadd.f32 0.0, %v3124
    %3126 = vmatprep.mubr.f32.mxu0 0.0
    %3127 = vmatmul.mubr.f32.gmra.mrb[0].mxu0 %v3054
    %v3128 = vpop.f32.mrb[0].mxu0
    %v3129 = vadd.f32 0.0, %v3128
    %v3130 = vpop.f32.mrb[0].mxu0
    %v3131 = vadd.f32 0.0, %v3130
    %3132 = vdwg.mxu0
    %v3133 = vmul.f32 %v3123, %v1319
    %v3134 = vmul.f32 %v3125, %v1320
    %v3135 = vmul.f32 %v3129, %v1321
    %v3136 = vmul.f32 %v3131, %v1322
    %v3137 = vadd.f32 %v3133, %v3135
    %v3138 = vrot.slane %v3137, 4
    %v3139 = vadd.f32 %v3137, %v3138
    %v3140 = vrot.slane %v3139, 2
    %v3141 = vadd.f32 %v3139, %v3140
    %v3142 = vrot.slane %v3141, 1
    %v3143 = vadd.f32 %v3141, %v3142
    %v3144 = vadd.f32 %v3134, %v3136
    %v3145 = vrot.slane %v3144, 4
    %v3146 = vadd.f32 %v3144, %v3145
    %v3147 = vrot.slane %v3146, 2
    %v3148 = vadd.f32 %v3146, %v3147
    %v3149 = vrot.slane %v3148, 1
    %v3150 = vadd.f32 %v3148, %v3149
    %v3152 = vsel %vm1677, %v3048, 0
    %v3155 = vsel %vm1677, %v3049, 0
    %3157 = vmatprep.subr.mxu0 %v1316
    %3158 = vmatpush1.msra.mxu0 %v1315
    %3159 = vmatprep.subr.mxu0 %v1318
    %3160 = vmatpush1.msra.mxu0 %v1317
    %3161 = vmatprep.subr.mxu0 0.0
    %3162 = vmatpush1.msra.mxu0 0.0
    %3163 = vmatprep.subr.mxu0 0.0
    %3164 = vmatpush1.msra.mxu0 0.0
    %3165 = vmatprep.subr.mxu0 0.0
    %3166 = vmatpush1.msra.mxu0 0.0
    %3167 = vmatprep.subr.mxu0 0.0
    %3168 = vmatpush1.msra.mxu0 0.0
    %3169 = vmatprep.subr.mxu0 0.0
    %3170 = vmatpush1.msra.mxu0 0.0
    %3171 = vmatprep.subr.mxu0 0.0
    %3172 = vmatpush1.msra.mxu0 0.0
    %3173 = vmatprep.subr.mxu0 0.0
    %3174 = vmatpush1.msra.mxu0 0.0
    %3175 = vmatprep.subr.mxu0 0.0
    %3176 = vmatpush1.msra.mxu0 0.0
    %3177 = vmatprep.subr.mxu0 0.0
    %3178 = vmatpush1.msra.mxu0 0.0
    %3179 = vmatprep.subr.mxu0 0.0
    %3180 = vmatpush1.msra.mxu0 0.0
    %3181 = vmatprep.subr.mxu0 0.0
    %3182 = vmatpush1.msra.mxu0 0.0
    %3183 = vmatprep.subr.mxu0 0.0
    %3184 = vmatpush1.msra.mxu0 0.0
    %3185 = vmatprep.subr.mxu0 0.0
    %3186 = vmatpush1.msra.mxu0 0.0
    %3187 = vmatprep.subr.mxu0 0.0
    %3188 = vmatpush1.msra.mxu0 0.0
    %3189 = vmatprep.subr.mxu0 0.0
    %3190 = vmatpush1.msra.mxu0 0.0
    %3191 = vmatprep.subr.mxu0 0.0
    %3192 = vmatpush1.msra.mxu0 0.0
    %3193 = vmatprep.subr.mxu0 0.0
    %3194 = vmatpush1.msra.mxu0 0.0
    %3195 = vmatprep.subr.mxu0 0.0
    %3196 = vmatpush1.msra.mxu0 0.0
    %3197 = vmatprep.subr.mxu0 0.0
    %3198 = vmatpush1.msra.mxu0 0.0
    %3199 = vmatprep.subr.mxu0 0.0
    %3200 = vmatpush1.msra.mxu0 0.0
    %3201 = vmatprep.subr.mxu0 0.0
    %3202 = vmatpush1.msra.mxu0 0.0
    %3203 = vmatprep.subr.mxu0 0.0
    %3204 = vmatpush1.msra.mxu0 0.0
    %3205 = vmatprep.subr.mxu0 0.0
    %3206 = vmatpush1.msra.mxu0 0.0
    %3207 = vmatprep.subr.mxu0 0.0
    %3208 = vmatpush1.msra.mxu0 0.0
    %3209 = vmatprep.subr.mxu0 0.0
    %3210 = vmatpush1.msra.mxu0 0.0
    %3211 = vmatprep.subr.mxu0 0.0
    %3212 = vmatpush1.msra.mxu0 0.0
    %3213 = vmatprep.subr.mxu0 0.0
    %3214 = vmatpush1.msra.mxu0 0.0
    %3215 = vmatprep.subr.mxu0 0.0
    %3216 = vmatpush1.msra.mxu0 0.0
    %3217 = vmatprep.subr.mxu0 0.0
    %3218 = vmatpush1.msra.mxu0 0.0
    %3219 = vmatprep.subr.mxu0 0.0
    %3220 = vmatpush1.msra.mxu0 0.0
    %3221 = vmatprep.mubr.f32.mxu0 0.0
    %3222 = vmatmul.mubr.f32.gmra.mrb[0].mxu0 %v3152
    %v3223 = vpop.f32.mrb[0].mxu0
    %v3224 = vadd.f32 0.0, %v3223
    %v3225 = vpop.f32.mrb[0].mxu0
    %v3226 = vadd.f32 0.0, %v3225
    %3227 = vmatprep.mubr.f32.mxu0 0.0
    %3228 = vmatmul.mubr.f32.gmra.mrb[0].mxu0 %v3155
    %v3229 = vpop.f32.mrb[0].mxu0
    %v3230 = vadd.f32 0.0, %v3229
    %v3231 = vpop.f32.mrb[0].mxu0
    %v3232 = vadd.f32 0.0, %v3231
    %3233 = vdwg.mxu0
    %v3234 = vmul.f32 %v3224, %v1319
    %v3235 = vmul.f32 %v3226, %v1320
    %v3236 = vmul.f32 %v3230, %v1321
    %v3237 = vmul.f32 %v3232, %v1322
    %v3238 = vadd.f32 %v3234, %v3236
    %v3239 = vrot.slane %v3238, 4
    %v3240 = vadd.f32 %v3238, %v3239
    %v3241 = vrot.slane %v3240, 2
    %v3242 = vadd.f32 %v3240, %v3241
    %v3243 = vrot.slane %v3242, 1
    %v3244 = vadd.f32 %v3242, %v3243
    %v3245 = vadd.f32 %v3235, %v3237
    %v3246 = vrot.slane %v3245, 4
    %v3247 = vadd.f32 %v3245, %v3246
    %v3248 = vrot.slane %v3247, 2
    %v3249 = vadd.f32 %v3247, %v3248
    %v3250 = vrot.slane %v3249, 1
    %v3251 = vadd.f32 %v3249, %v3250
    %3254 = vrot.lane.b32.xlu0 %v3143, 17
    %v3255 = vpop.permute.xlu0 %3254
    %3256 = vrot.lane.b32.xlu0 %v3150, 17
    %v3257 = vpop.permute.xlu0 %3256
    %v3258 = vsel %vm1886, %v3255, %v3257
    %v3261 = vsel %vm1886, 0.0, %v3255
    %v3262 = vmul.f32 %v3261, %v1311
    %v3263 = vmul.f32 %v3258, %v1312
    %v3264 = vlaneseq
    %v3265 = vshrl.u32 %v3264, 7
    %v3266 = vsub.s32 0, %v3265
    %v3267 = vrot.slane %v3262, %v3266
    %v3268 = vlaneseq
    %v3269 = vshrl.u32 %v3268, 7
    %v3270 = vsub.s32 0, %v3269
    %v3271 = vrot.slane %v3263, %v3270
    %v3272 = vmul.f32 %v1896, %v3267
    %v3273 = vmul.f32 %v1896, %v3271
    %v3274 = vadd.f32 %v3272, 0.0
    %v3275 = vadd.f32 %v3273, 0.0
    %3278 = vrot.lane.b32.xlu0 %v3244, 17
    %v3279 = vpop.permute.xlu0 %3278
    %3280 = vrot.lane.b32.xlu0 %v3251, 17
    %v3281 = vpop.permute.xlu0 %3280
    %v3282 = vsel %vm1886, %v3279, %v3281
    %v3285 = vsel %vm1886, 0.0, %v3279
    %v3286 = vmul.f32 %v3285, %v1311
    %v3287 = vmul.f32 %v3282, %v1312
    %v3288 = vlaneseq
    %v3289 = vshrl.u32 %v3288, 7
    %v3290 = vsub.s32 0, %v3289
    %v3291 = vrot.slane %v3286, %v3290
    %v3292 = vlaneseq
    %v3293 = vshrl.u32 %v3292, 7
    %v3294 = vsub.s32 0, %v3293
    %v3295 = vrot.slane %v3287, %v3294
    %v3296 = vmul.f32 %v1924, %v3291
    %v3297 = vmul.f32 %v1924, %v3295
    %v3298 = vadd.f32 %v3274, %v3296
    %v3299 = vadd.f32 %v3275, %v3297
    %3300 = vrot.lane.b32.xlu0 %v3143, 16
    %v3301 = vpop.permute.xlu0 %3300
    %3302 = vrot.lane.b32.xlu0 %v3150, 16
    %v3303 = vpop.permute.xlu0 %3302
    %v3304 = vsel %vm1677, %v3301, %v3303
    %v3307 = vsel %vm1677, 0.0, %v3301
    %v3308 = vmul.f32 %v3307, %v1948
    %v3309 = vmul.f32 %v3304, %v1949
    %v3310 = vlaneseq
    %v3311 = vshrl.u32 %v3310, 7
    %v3312 = vsub.s32 0, %v3311
    %v3313 = vrot.slane %v3308, %v3312
    %v3314 = vlaneseq
    %v3315 = vshrl.u32 %v3314, 7
    %v3316 = vsub.s32 0, %v3315
    %v3317 = vrot.slane %v3309, %v3316
    %v3318 = vmul.f32 %v1956, %v3313
    %v3319 = vmul.f32 %v1956, %v3317
    %v3320 = vadd.f32 %v3298, %v3318
    %v3321 = vadd.f32 %v3299, %v3319
    %3322 = vrot.lane.b32.xlu0 %v3244, 16
    %v3323 = vpop.permute.xlu0 %3322
    %3324 = vrot.lane.b32.xlu0 %v3251, 16
    %v3325 = vpop.permute.xlu0 %3324
    %v3326 = vsel %vm1677, %v3323, %v3325
    %v3329 = vsel %vm1677, 0.0, %v3323
    %v3330 = vmul.f32 %v3329, %v1948
    %v3331 = vmul.f32 %v3326, %v1949
    %v3332 = vlaneseq
    %v3333 = vshrl.u32 %v3332, 7
    %v3334 = vsub.s32 0, %v3333
    %v3335 = vrot.slane %v3330, %v3334
    %v3336 = vlaneseq
    %v3337 = vshrl.u32 %v3336, 7
    %v3338 = vsub.s32 0, %v3337
    %v3339 = vrot.slane %v3331, %v3338
    %v3340 = vmul.f32 %v1982, %v3335
    %v3341 = vmul.f32 %v1982, %v3339
    %v3342 = vadd.f32 %v3320, %v3340
    %v3343 = vadd.f32 %v3321, %v3341
    %3344 = vrot.lane.b32.xlu0 %v3143, 15
    %v3345 = vpop.permute.xlu0 %3344
    %3346 = vrot.lane.b32.xlu0 %v3150, 15
    %v3347 = vpop.permute.xlu0 %3346
    %v3348 = vsel %vm2000, %v3345, %v3347
    %v3351 = vsel %vm2000, 0.0, %v3345
    %v3352 = vmul.f32 %v3351, %v2005
    %v3353 = vmul.f32 %v3348, %v2006
    %v3354 = vlaneseq
    %v3355 = vshrl.u32 %v3354, 7
    %v3356 = vsub.s32 0, %v3355
    %v3357 = vrot.slane %v3352, %v3356
    %v3358 = vlaneseq
    %v3359 = vshrl.u32 %v3358, 7
    %v3360 = vsub.s32 0, %v3359
    %v3361 = vrot.slane %v3353, %v3360
    %v3362 = vmul.f32 %v2013, %v3357
    %v3363 = vmul.f32 %v2013, %v3361
    %v3364 = vadd.f32 %v3342, %v3362
    %v3365 = vadd.f32 %v3343, %v3363
    %3366 = vrot.lane.b32.xlu0 %v3244, 15
    %v3367 = vpop.permute.xlu0 %3366
    %3368 = vrot.lane.b32.xlu0 %v3251, 15
    %v3369 = vpop.permute.xlu0 %3368
    %v3370 = vsel %vm2000, %v3367, %v3369
    %v3373 = vsel %vm2000, 0.0, %v3367
    %v3374 = vmul.f32 %v3373, %v2005
    %v3375 = vmul.f32 %v3370, %v2006
    %v3376 = vlaneseq
    %v3377 = vshrl.u32 %v3376, 7
    %v3378 = vsub.s32 0, %v3377
    %v3379 = vrot.slane %v3374, %v3378
    %v3380 = vlaneseq
    %v3381 = vshrl.u32 %v3380, 7
    %v3382 = vsub.s32 0, %v3381
    %v3383 = vrot.slane %v3375, %v3382
    %v3384 = vmul.f32 %v2039, %v3379
    %v3385 = vmul.f32 %v2039, %v3383
    %v3386 = vadd.f32 %v3364, %v3384
    %v3387 = vadd.f32 %v3365, %v3385
    %3388 = vrot.lane.b32.xlu0 %v3143, 1
    %v3389 = vpop.permute.xlu0 %3388
    %3390 = vrot.lane.b32.xlu0 %v3150, 1
    %v3391 = vpop.permute.xlu0 %3390
    %v3392 = vsel %vm2057, %v3389, %v3391
    %v3395 = vsel %vm2057, 0.0, %v3389
    %v3396 = vmul.f32 %v3395, %v2062
    %v3397 = vmul.f32 %v3392, %v2063
    %v3398 = vlaneseq
    %v3399 = vshrl.u32 %v3398, 7
    %v3400 = vsub.s32 0, %v3399
    %v3401 = vrot.slane %v3396, %v3400
    %v3402 = vlaneseq
    %v3403 = vshrl.u32 %v3402, 7
    %v3404 = vsub.s32 0, %v3403
    %v3405 = vrot.slane %v3397, %v3404
    %v3406 = vmul.f32 %v2070, %v3401
    %v3407 = vmul.f32 %v2070, %v3405
    %v3408 = vadd.f32 %v3386, %v3406
    %v3409 = vadd.f32 %v3387, %v3407
    %3410 = vrot.lane.b32.xlu0 %v3244, 1
    %v3411 = vpop.permute.xlu0 %3410
    %3412 = vrot.lane.b32.xlu0 %v3251, 1
    %v3413 = vpop.permute.xlu0 %3412
    %v3414 = vsel %vm2057, %v3411, %v3413
    %v3417 = vsel %vm2057, 0.0, %v3411
    %v3418 = vmul.f32 %v3417, %v2062
    %v3419 = vmul.f32 %v3414, %v2063
    %v3420 = vlaneseq
    %v3421 = vshrl.u32 %v3420, 7
    %v3422 = vsub.s32 0, %v3421
    %v3423 = vrot.slane %v3418, %v3422
    %v3424 = vlaneseq
    %v3425 = vshrl.u32 %v3424, 7
    %v3426 = vsub.s32 0, %v3425
    %v3427 = vrot.slane %v3419, %v3426
    %v3428 = vmul.f32 %v2096, %v3423
    %v3429 = vmul.f32 %v2096, %v3427
    %v3430 = vadd.f32 %v3408, %v3428
    %v3431 = vadd.f32 %v3409, %v3429
    %v3432 = vmul.f32 %v3143, %v1311
    %v3433 = vmul.f32 %v3150, %v1312
    %v3434 = vlaneseq
    %v3435 = vshrl.u32 %v3434, 7
    %v3436 = vsub.s32 4, %v3435
    %v3437 = vrot.slane %v3432, %v3436
    %v3438 = vlaneseq
    %v3439 = vshrl.u32 %v3438, 7
    %v3440 = vsub.s32 4, %v3439
    %v3441 = vrot.slane %v3433, %v3440
    %v3442 = vmul.f32 %v2114, %v3437
    %v3443 = vmul.f32 %v2114, %v3441
    %v3444 = vadd.f32 %v3430, %v3442
    %v3445 = vadd.f32 %v3431, %v3443
    %v3446 = vmul.f32 %v3244, %v1311
    %v3447 = vmul.f32 %v3251, %v1312
    %v3448 = vlaneseq
    %v3449 = vshrl.u32 %v3448, 7
    %v3450 = vsub.s32 4, %v3449
    %v3451 = vrot.slane %v3446, %v3450
    %v3452 = vlaneseq
    %v3453 = vshrl.u32 %v3452, 7
    %v3454 = vsub.s32 4, %v3453
    %v3455 = vrot.slane %v3447, %v3454
    %v3456 = vmul.f32 %v2132, %v3451
    %v3457 = vmul.f32 %v2132, %v3455
    %v3458 = vadd.f32 %v3444, %v3456
    %v3459 = vadd.f32 %v3445, %v3457
    %3460 = vrot.lane.b32.xlu0 %v3143, 127
    %v3461 = vpop.permute.xlu0 %3460
    %3462 = vrot.lane.b32.xlu0 %v3150, 127
    %v3463 = vpop.permute.xlu0 %3462
    %v3464 = vsel %vm2150, %v3461, %v3463
    %v3467 = vsel %vm2150, %v3463, 0.0
    %v3468 = vmul.f32 %v3464, %v2155
    %v3469 = vmul.f32 %v3467, %v2156
    %v3470 = vlaneseq
    %v3471 = vshrl.u32 %v3470, 7
    %v3472 = vsub.s32 0, %v3471
    %v3473 = vrot.slane %v3468, %v3472
    %v3474 = vlaneseq
    %v3475 = vshrl.u32 %v3474, 7
    %v3476 = vsub.s32 0, %v3475
    %v3477 = vrot.slane %v3469, %v3476
    %v3478 = vmul.f32 %v2163, %v3473
    %v3479 = vmul.f32 %v2163, %v3477
    %v3480 = vadd.f32 %v3458, %v3478
    %v3481 = vadd.f32 %v3459, %v3479
    %3482 = vrot.lane.b32.xlu0 %v3244, 127
    %v3483 = vpop.permute.xlu0 %3482
    %3484 = vrot.lane.b32.xlu0 %v3251, 127
    %v3485 = vpop.permute.xlu0 %3484
    %v3486 = vsel %vm2150, %v3483, %v3485
    %v3489 = vsel %vm2150, %v3485, 0.0
    %v3490 = vmul.f32 %v3486, %v2155
    %v3491 = vmul.f32 %v3489, %v2156
    %v3492 = vlaneseq
    %v3493 = vshrl.u32 %v3492, 7
    %v3494 = vsub.s32 0, %v3493
    %v3495 = vrot.slane %v3490, %v3494
    %v3496 = vlaneseq
    %v3497 = vshrl.u32 %v3496, 7
    %v3498 = vsub.s32 0, %v3497
    %v3499 = vrot.slane %v3491, %v3498
    %v3500 = vmul.f32 %v2189, %v3495
    %v3501 = vmul.f32 %v2189, %v3499
    %v3502 = vadd.f32 %v3480, %v3500
    %v3503 = vadd.f32 %v3481, %v3501
    %3504 = vrot.lane.b32.xlu0 %v3143, 113
    %v3505 = vpop.permute.xlu0 %3504
    %3506 = vrot.lane.b32.xlu0 %v3150, 113
    %v3507 = vpop.permute.xlu0 %3506
    %v3508 = vsel %vm2207, %v3505, %v3507
    %v3511 = vsel %vm2207, %v3507, 0.0
    %v3512 = vmul.f32 %v3508, %v2212
    %v3513 = vmul.f32 %v3511, %v2213
    %v3514 = vlaneseq
    %v3515 = vshrl.u32 %v3514, 7
    %v3516 = vsub.s32 0, %v3515
    %v3517 = vrot.slane %v3512, %v3516
    %v3518 = vlaneseq
    %v3519 = vshrl.u32 %v3518, 7
    %v3520 = vsub.s32 0, %v3519
    %v3521 = vrot.slane %v3513, %v3520
    %v3522 = vmul.f32 %v2220, %v3517
    %v3523 = vmul.f32 %v2220, %v3521
    %v3524 = vadd.f32 %v3502, %v3522
    %v3525 = vadd.f32 %v3503, %v3523
    %3526 = vrot.lane.b32.xlu0 %v3244, 113
    %v3527 = vpop.permute.xlu0 %3526
    %3528 = vrot.lane.b32.xlu0 %v3251, 113
    %v3529 = vpop.permute.xlu0 %3528
    %v3530 = vsel %vm2207, %v3527, %v3529
    %v3533 = vsel %vm2207, %v3529, 0.0
    %v3534 = vmul.f32 %v3530, %v2212
    %v3535 = vmul.f32 %v3533, %v2213
    %v3536 = vlaneseq
    %v3537 = vshrl.u32 %v3536, 7
    %v3538 = vsub.s32 0, %v3537
    %v3539 = vrot.slane %v3534, %v3538
    %v3540 = vlaneseq
    %v3541 = vshrl.u32 %v3540, 7
    %v3542 = vsub.s32 0, %v3541
    %v3543 = vrot.slane %v3535, %v3542
    %v3544 = vmul.f32 %v2246, %v3539
    %v3545 = vmul.f32 %v2246, %v3543
    %v3546 = vadd.f32 %v3524, %v3544
    %v3547 = vadd.f32 %v3525, %v3545
    %3548 = vrot.lane.b32.xlu0 %v3143, 112
    %v3549 = vpop.permute.xlu0 %3548
    %3550 = vrot.lane.b32.xlu0 %v3150, 112
    %v3551 = vpop.permute.xlu0 %3550
    %v3552 = vsel %vm2264, %v3549, %v3551
    %v3555 = vsel %vm2264, %v3551, 0.0
    %v3556 = vmul.f32 %v3552, %v2269
    %v3557 = vmul.f32 %v3555, %v2270
    %v3558 = vlaneseq
    %v3559 = vshrl.u32 %v3558, 7
    %v3560 = vsub.s32 0, %v3559
    %v3561 = vrot.slane %v3556, %v3560
    %v3562 = vlaneseq
    %v3563 = vshrl.u32 %v3562, 7
    %v3564 = vsub.s32 0, %v3563
    %v3565 = vrot.slane %v3557, %v3564
    %v3566 = vmul.f32 %v2277, %v3561
    %v3567 = vmul.f32 %v2277, %v3565
    %v3568 = vadd.f32 %v3546, %v3566
    %v3569 = vadd.f32 %v3547, %v3567
    %3570 = vrot.lane.b32.xlu0 %v3244, 112
    %v3571 = vpop.permute.xlu0 %3570
    %3572 = vrot.lane.b32.xlu0 %v3251, 112
    %v3573 = vpop.permute.xlu0 %3572
    %v3574 = vsel %vm2264, %v3571, %v3573
    %v3577 = vsel %vm2264, %v3573, 0.0
    %v3578 = vmul.f32 %v3574, %v2269
    %v3579 = vmul.f32 %v3577, %v2270
    %v3580 = vlaneseq
    %v3581 = vshrl.u32 %v3580, 7
    %v3582 = vsub.s32 0, %v3581
    %v3583 = vrot.slane %v3578, %v3582
    %v3584 = vlaneseq
    %v3585 = vshrl.u32 %v3584, 7
    %v3586 = vsub.s32 0, %v3585
    %v3587 = vrot.slane %v3579, %v3586
    %v3588 = vmul.f32 %v2303, %v3583
    %v3589 = vmul.f32 %v2303, %v3587
    %v3590 = vadd.f32 %v3568, %v3588
    %v3591 = vadd.f32 %v3569, %v3589
    %3592 = vrot.lane.b32.xlu0 %v3143, 111
    %v3593 = vpop.permute.xlu0 %3592
    %3594 = vrot.lane.b32.xlu0 %v3150, 111
    %v3595 = vpop.permute.xlu0 %3594
    %v3596 = vsel %vm2321, %v3593, %v3595
    %v3599 = vsel %vm2321, %v3595, 0.0
    %v3600 = vmul.f32 %v3596, %v1313
    %v3601 = vmul.f32 %v3599, %v1314
    %v3602 = vlaneseq
    %v3603 = vshrl.u32 %v3602, 7
    %v3604 = vsub.s32 0, %v3603
    %v3605 = vrot.slane %v3600, %v3604
    %v3606 = vlaneseq
    %v3607 = vshrl.u32 %v3606, 7
    %v3608 = vsub.s32 0, %v3607
    %v3609 = vrot.slane %v3601, %v3608
    %v3610 = vmul.f32 %v2330, %v3605
    %v3611 = vmul.f32 %v2330, %v3609
    %v3612 = vadd.f32 %v3590, %v3610
    %v3613 = vadd.f32 %v3591, %v3611
    %3614 = vrot.lane.b32.xlu0 %v3244, 111
    %v3615 = vpop.permute.xlu0 %3614
    %3616 = vrot.lane.b32.xlu0 %v3251, 111
    %v3617 = vpop.permute.xlu0 %3616
    %v3618 = vsel %vm2321, %v3615, %v3617
    %v3621 = vsel %vm2321, %v3617, 0.0
    %v3622 = vmul.f32 %v3618, %v1313
    %v3623 = vmul.f32 %v3621, %v1314
    %v3624 = vlaneseq
    %v3625 = vshrl.u32 %v3624, 7
    %v3626 = vsub.s32 0, %v3625
    %v3627 = vrot.slane %v3622, %v3626
    %v3628 = vlaneseq
    %v3629 = vshrl.u32 %v3628, 7
    %v3630 = vsub.s32 0, %v3629
    %v3631 = vrot.slane %v3623, %v3630
    %v3632 = vmul.f32 %v2356, %v3627
    %v3633 = vmul.f32 %v2356, %v3631
    %v3634 = vadd.f32 %v3612, %v3632
    %v3635 = vadd.f32 %v3613, %v3633
    %v3636 = vadd.f32 %v3634, %v2373
    %v3637 = vadd.f32 %v3635, %v2373
    %v3638 = vmax.f32 %v3636, 0.0
    %v3639 = vmax.f32 %v3637, 0.0
    %3642 = vrot.lane.b32.xlu0 %v3638, 127
    %v3643 = vpop.permute.xlu0 %3642
    %3644 = vrot.lane.b32.xlu0 %v3639, 127
    %v3645 = vpop.permute.xlu0 %3644
    %v3646 = vsel %vm2150, %v3643, %v3645
    %v3649 = vsel %vm2150, %v3645, 0.0
    %3650 = vrot.lane.b32.xlu0 %v3638, 126
    %v3651 = vpop.permute.xlu0 %3650
    %3652 = vrot.lane.b32.xlu0 %v3639, 126
    %v3653 = vpop.permute.xlu0 %3652
    %v3654 = vsel %vm2393, %v3651, %v3653
    %v3657 = vsel %vm2393, %v3653, 0.0
    %v3658 = vmax.f32 %v3646, %v3654
    %v3659 = vmax.f32 %v3649, %v3657
    %v3660 = vmax.f32 %v3638, %v3658
    %v3661 = vmax.f32 %v3639, %v3659
    %3664 = vrot.lane.b32.xlu0 %v3660, 112
    %v3665 = vpop.permute.xlu0 %3664
    %3666 = vrot.lane.b32.xlu0 %v3661, 112
    %v3667 = vpop.permute.xlu0 %3666
    %v3668 = vsel %vm2264, %v3665, %v3667
    %v3671 = vsel %vm2264, %v3667, 0.0
    %3672 = vrot.lane.b32.xlu0 %v3660, 96
    %v3673 = vpop.permute.xlu0 %3672
    %3674 = vrot.lane.b32.xlu0 %v3661, 96
    %v3675 = vpop.permute.xlu0 %3674
    %v3676 = vsel %vm2416, %v3673, %v3675
    %v3679 = vsel %vm2416, %v3675, 0.0
    %v3680 = vmax.f32 %v3668, %v3676
    %v3681 = vmax.f32 %v3671, %v3679
    %v3682 = vmax.f32 %v3660, %v3680
    %v3683 = vmax.f32 %v3661, %v3681
    %3684 = vmatprep.subr.mxu0 0.0
    %3685 = vmatpush1.msra.mxu0 %v1323
    %3686 = vmatprep.subr.mxu0 0.0
    %3687 = vmatpush1.msra.mxu0 %v1324
    %3688 = vmatprep.subr.mxu0 0.0
    %3689 = vmatpush1.msra.mxu0 %v1325
    %3690 = vmatprep.subr.mxu0 0.0
    %3691 = vmatpush1.msra.mxu0 %v1326
    %3692 = vmatprep.subr.mxu0 0.0
    %3693 = vmatpush1.msra.mxu0 %v1327
    %3694 = vmatprep.subr.mxu0 0.0
    %3695 = vmatpush1.msra.mxu0 %v1328
    %3696 = vmatprep.subr.mxu0 0.0
    %3697 = vmatpush1.msra.mxu0 %v1329
    %3698 = vmatprep.subr.mxu0 0.0
    %3699 = vmatpush1.msra.mxu0 %v1330
    %3700 = vmatprep.subr.mxu0 0.0
    %3701 = vmatpush1.msra.mxu0 %v1331
    %3702 = vmatprep.subr.mxu0 0.0
    %3703 = vmatpush1.msra.mxu0 %v1332
    %3704 = vmatprep.subr.mxu0 0.0
    %3705 = vmatpush1.msra.mxu0 %v1333
    %3706 = vmatprep.subr.mxu0 0.0
    %3707 = vmatpush1.msra.mxu0 %v1334
    %3708 = vmatprep.subr.mxu0 0.0
    %3709 = vmatpush1.msra.mxu0 %v1335
    %3710 = vmatprep.subr.mxu0 0.0
    %3711 = vmatpush1.msra.mxu0 %v1336
    %3712 = vmatprep.subr.mxu0 0.0
    %3713 = vmatpush1.msra.mxu0 %v1337
    %3714 = vmatprep.subr.mxu0 0.0
    %3715 = vmatpush1.msra.mxu0 %v1338
    %3716 = vmatprep.subr.mxu0 0.0
    %3717 = vmatpush1.msra.mxu0 %v1339
    %3718 = vmatprep.subr.mxu0 0.0
    %3719 = vmatpush1.msra.mxu0 %v1340
    %3720 = vmatprep.subr.mxu0 0.0
    %3721 = vmatpush1.msra.mxu0 %v1341
    %3722 = vmatprep.subr.mxu0 0.0
    %3723 = vmatpush1.msra.mxu0 %v1342
    %3724 = vmatprep.subr.mxu0 0.0
    %3725 = vmatpush1.msra.mxu0 %v1343
    %3726 = vmatprep.subr.mxu0 0.0
    %3727 = vmatpush1.msra.mxu0 %v1344
    %3728 = vmatprep.subr.mxu0 0.0
    %3729 = vmatpush1.msra.mxu0 %v1345
    %3730 = vmatprep.subr.mxu0 0.0
    %3731 = vmatpush1.msra.mxu0 %v1346
    %3732 = vmatprep.subr.mxu0 0.0
    %3733 = vmatpush1.msra.mxu0 %v1347
    %3734 = vmatprep.subr.mxu0 0.0
    %3735 = vmatpush1.msra.mxu0 %v1348
    %3736 = vmatprep.subr.mxu0 0.0
    %3737 = vmatpush1.msra.mxu0 %v1349
    %3738 = vmatprep.subr.mxu0 0.0
    %3739 = vmatpush1.msra.mxu0 %v1350
    %3740 = vmatprep.subr.mxu0 0.0
    %3741 = vmatpush1.msra.mxu0 %v1351
    %3742 = vmatprep.subr.mxu0 0.0
    %3743 = vmatpush1.msra.mxu0 %v1352
    %3744 = vmatprep.subr.mxu0 0.0
    %3745 = vmatpush1.msra.mxu0 %v1353
    %3746 = vmatprep.subr.mxu0 0.0
    %3747 = vmatpush1.msra.mxu0 %v1354
    %3748 = vmatprep.mubr.f32.mxu0 %v3683
    %3749 = vmatmul.mubr.f32.gmra.mrb[0].mxu0 %v3682
    %v3750 = vpop.f32.mrb[0].mxu0
    %v3751 = vadd.f32 0.0, %v3750
    %v3752 = vpop.f32.mrb[0].mxu0
    %3753 = vdwg.mxu0
    %v3755 = vsel %vm2495, %v3751, 0
    %3757 = vmatprep.subr.mxu0 %v1356
    %3758 = vmatpush1.msra.mxu0 %v1355
    %3759 = vmatprep.subr.mxu0 %v1358
    %3760 = vmatpush1.msra.mxu0 %v1357
    %3761 = vmatprep.subr.mxu0 %v1360
    %3762 = vmatpush1.msra.mxu0 %v1359
    %3763 = vmatprep.subr.mxu0 %v2504
    %3764 = vmatpush1.msra.mxu0 %v2501
    %3765 = vmatprep.subr.mxu0 0.0
    %3766 = vmatpush1.msra.mxu0 0.0
    %3767 = vmatprep.subr.mxu0 0.0
    %3768 = vmatpush1.msra.mxu0 0.0
    %3769 = vmatprep.subr.mxu0 0.0
    %3770 = vmatpush1.msra.mxu0 0.0
    %3771 = vmatprep.subr.mxu0 0.0
    %3772 = vmatpush1.msra.mxu0 0.0
    %3773 = vmatprep.subr.mxu0 0.0
    %3774 = vmatpush1.msra.mxu0 0.0
    %3775 = vmatprep.subr.mxu0 0.0
    %3776 = vmatpush1.msra.mxu0 0.0
    %3777 = vmatprep.subr.mxu0 0.0
    %3778 = vmatpush1.msra.mxu0 0.0
    %3779 = vmatprep.subr.mxu0 0.0
    %3780 = vmatpush1.msra.mxu0 0.0
    %3781 = vmatprep.subr.mxu0 0.0
    %3782 = vmatpush1.msra.mxu0 0.0
    %3783 = vmatprep.subr.mxu0 0.0
    %3784 = vmatpush1.msra.mxu0 0.0
    %3785 = vmatprep.subr.mxu0 0.0
    %3786 = vmatpush1.msra.mxu0 0.0
    %3787 = vmatprep.subr.mxu0 0.0
    %3788 = vmatpush1.msra.mxu0 0.0
    %3789 = vmatprep.subr.mxu0 0.0
    %3790 = vmatpush1.msra.mxu0 0.0
    %3791 = vmatprep.subr.mxu0 0.0
    %3792 = vmatpush1.msra.mxu0 0.0
    %3793 = vmatprep.subr.mxu0 0.0
    %3794 = vmatpush1.msra.mxu0 0.0
    %3795 = vmatprep.subr.mxu0 0.0
    %3796 = vmatpush1.msra.mxu0 0.0
    %3797 = vmatprep.subr.mxu0 0.0
    %3798 = vmatpush1.msra.mxu0 0.0
    %3799 = vmatprep.subr.mxu0 0.0
    %3800 = vmatpush1.msra.mxu0 0.0
    %3801 = vmatprep.subr.mxu0 0.0
    %3802 = vmatpush1.msra.mxu0 0.0
    %3803 = vmatprep.subr.mxu0 0.0
    %3804 = vmatpush1.msra.mxu0 0.0
    %3805 = vmatprep.subr.mxu0 0.0
    %3806 = vmatpush1.msra.mxu0 0.0
    %3807 = vmatprep.subr.mxu0 0.0
    %3808 = vmatpush1.msra.mxu0 0.0
    %3809 = vmatprep.subr.mxu0 0.0
    %3810 = vmatpush1.msra.mxu0 0.0
    %3811 = vmatprep.subr.mxu0 0.0
    %3812 = vmatpush1.msra.mxu0 0.0
    %3813 = vmatprep.subr.mxu0 0.0
    %3814 = vmatpush1.msra.mxu0 0.0
    %3815 = vmatprep.subr.mxu0 0.0
    %3816 = vmatpush1.msra.mxu0 0.0
    %3817 = vmatprep.subr.mxu0 0.0
    %3818 = vmatpush1.msra.mxu0 0.0
    %3819 = vmatprep.subr.mxu0 0.0
    %3820 = vmatpush1.msra.mxu0 0.0
    %3821 = vmatprep.mubr.f32.mxu0 0.0
    %3822 = vmatmul.mubr.f32.gmra.mrb[0].mxu0 %v3755
    %v3823 = vpop.f32.mrb[0].mxu0
    %v3824 = vadd.f32 0.0, %v3823
    %v3825 = vpop.f32.mrb[0].mxu0
    %v3826 = vadd.f32 0.0, %v3825
    %3827 = vdwg.mxu0
    %v3828 = vmul.f32 %v3824, %v1363
    %v3829 = vmul.f32 %v3826, %v1364
    %v3830 = vrot.slane %v3828, 4
    %v3831 = vadd.f32 %v3828, %v3830
    %v3832 = vrot.slane %v3831, 2
    %v3833 = vadd.f32 %v3831, %v3832
    %v3834 = vrot.slane %v3833, 1
    %v3835 = vadd.f32 %v3833, %v3834
    %v3836 = vsel %vm2585, %v3829, 0.0
    %v3837 = vrot.slane %v3836, 4
    %v3838 = vadd.f32 %v3836, %v3837
    %v3839 = vrot.slane %v3838, 2
    %v3840 = vadd.f32 %v3838, %v3839
    %v3841 = vrot.slane %v3840, 1
    %v3842 = vadd.f32 %v3840, %v3841
    %v3844 = vsel %vm2585, %v3842, 0
    %3846 = vmatprep.subr.mxu0 0.0
    %3847 = vmatpush1.msra.mxu0 %v1365
    %3848 = vmatprep.subr.mxu0 0.0
    %3849 = vmatpush1.msra.mxu0 %v1366
    %3850 = vmatprep.subr.mxu0 0.0
    %3851 = vmatpush1.msra.mxu0 %v1367
    %3852 = vmatprep.subr.mxu0 0.0
    %3853 = vmatpush1.msra.mxu0 %v1368
    %3854 = vmatprep.subr.mxu0 0.0
    %3855 = vmatpush1.msra.mxu0 %v1369
    %3856 = vmatprep.subr.mxu0 0.0
    %3857 = vmatpush1.msra.mxu0 %v1370
    %3858 = vmatprep.subr.mxu0 0.0
    %3859 = vmatpush1.msra.mxu0 %v1371
    %3860 = vmatprep.subr.mxu0 0.0
    %3861 = vmatpush1.msra.mxu0 %v1372
    %3862 = vmatprep.subr.mxu0 0.0
    %3863 = vmatpush1.msra.mxu0 %v1373
    %3864 = vmatprep.subr.mxu0 0.0
    %3865 = vmatpush1.msra.mxu0 %v1374
    %3866 = vmatprep.subr.mxu0 0.0
    %3867 = vmatpush1.msra.mxu0 %v1375
    %3868 = vmatprep.subr.mxu0 0.0
    %3869 = vmatpush1.msra.mxu0 %v1376
    %3870 = vmatprep.subr.mxu0 0.0
    %3871 = vmatpush1.msra.mxu0 %v1377
    %3872 = vmatprep.subr.mxu0 0.0
    %3873 = vmatpush1.msra.mxu0 %v1378
    %3874 = vmatprep.subr.mxu0 0.0
    %3875 = vmatpush1.msra.mxu0 %v1379
    %3876 = vmatprep.subr.mxu0 0.0
    %3877 = vmatpush1.msra.mxu0 %v1380
    %3878 = vmatprep.subr.mxu0 0.0
    %3879 = vmatpush1.msra.mxu0 %v1381
    %3880 = vmatprep.subr.mxu0 0.0
    %3881 = vmatpush1.msra.mxu0 %v1382
    %3882 = vmatprep.subr.mxu0 0.0
    %3883 = vmatpush1.msra.mxu0 %v1383
    %3884 = vmatprep.subr.mxu0 0.0
    %3885 = vmatpush1.msra.mxu0 %v1384
    %3886 = vmatprep.subr.mxu0 0.0
    %3887 = vmatpush1.msra.mxu0 %v1385
    %3888 = vmatprep.subr.mxu0 0.0
    %3889 = vmatpush1.msra.mxu0 %v1386
    %3890 = vmatprep.subr.mxu0 0.0
    %3891 = vmatpush1.msra.mxu0 %v1387
    %3892 = vmatprep.subr.mxu0 0.0
    %3893 = vmatpush1.msra.mxu0 %v1388
    %3894 = vmatprep.subr.mxu0 0.0
    %3895 = vmatpush1.msra.mxu0 %v1389
    %3896 = vmatprep.subr.mxu0 0.0
    %3897 = vmatpush1.msra.mxu0 0.0
    %3898 = vmatprep.subr.mxu0 0.0
    %3899 = vmatpush1.msra.mxu0 0.0
    %3900 = vmatprep.subr.mxu0 0.0
    %3901 = vmatpush1.msra.mxu0 0.0
    %3902 = vmatprep.subr.mxu0 0.0
    %3903 = vmatpush1.msra.mxu0 0.0
    %3904 = vmatprep.subr.mxu0 0.0
    %3905 = vmatpush1.msra.mxu0 0.0
    %3906 = vmatprep.subr.mxu0 0.0
    %3907 = vmatpush1.msra.mxu0 0.0
    %3908 = vmatprep.subr.mxu0 0.0
    %3909 = vmatpush1.msra.mxu0 0.0
    %3910 = vmatprep.mubr.f32.mxu0 %v3844
    %3911 = vmatmul.mubr.f32.gmra.mrb[0].mxu0 %v3835
    %v3912 = vpop.f32.mrb[0].mxu0
    %v3913 = vadd.f32 %v1390, %v3912
    %v3914 = vpop.f32.mrb[0].mxu0
    %3915 = vdwg.mxu0
    %v3916 = vmax.f32 %v3913, 0.0
    %v3918 = vsel %vm109, %v3916, 0
    %3920 = vmatprep.subr.mxu0 0.0
    %3921 = vmatpush1.msra.mxu0 %v1391
    %3922 = vmatprep.subr.mxu0 0.0
    %3923 = vmatpush1.msra.mxu0 %v1392
    %3924 = vmatprep.subr.mxu0 0.0
    %3925 = vmatpush1.msra.mxu0 %v1393
    %3926 = vmatprep.subr.mxu0 0.0
    %3927 = vmatpush1.msra.mxu0 %v1394
    %3928 = vmatprep.subr.mxu0 0.0
    %3929 = vmatpush1.msra.mxu0 0.0
    %3930 = vmatprep.subr.mxu0 0.0
    %3931 = vmatpush1.msra.mxu0 0.0
    %3932 = vmatprep.subr.mxu0 0.0
    %3933 = vmatpush1.msra.mxu0 0.0
    %3934 = vmatprep.subr.mxu0 0.0
    %3935 = vmatpush1.msra.mxu0 0.0
    %3936 = vmatprep.subr.mxu0 0.0
    %3937 = vmatpush1.msra.mxu0 0.0
    %3938 = vmatprep.subr.mxu0 0.0
    %3939 = vmatpush1.msra.mxu0 0.0
    %3940 = vmatprep.subr.mxu0 0.0
    %3941 = vmatpush1.msra.mxu0 0.0
    %3942 = vmatprep.subr.mxu0 0.0
    %3943 = vmatpush1.msra.mxu0 0.0
    %3944 = vmatprep.subr.mxu0 0.0
    %3945 = vmatpush1.msra.mxu0 0.0
    %3946 = vmatprep.subr.mxu0 0.0
    %3947 = vmatpush1.msra.mxu0 0.0
    %3948 = vmatprep.subr.mxu0 0.0
    %3949 = vmatpush1.msra.mxu0 0.0
    %3950 = vmatprep.subr.mxu0 0.0
    %3951 = vmatpush1.msra.mxu0 0.0
    %3952 = vmatprep.subr.mxu0 0.0
    %3953 = vmatpush1.msra.mxu0 0.0
    %3954 = vmatprep.subr.mxu0 0.0
    %3955 = vmatpush1.msra.mxu0 0.0
    %3956 = vmatprep.subr.mxu0 0.0
    %3957 = vmatpush1.msra.mxu0 0.0
    %3958 = vmatprep.subr.mxu0 0.0
    %3959 = vmatpush1.msra.mxu0 0.0
    %3960 = vmatprep.subr.mxu0 0.0
    %3961 = vmatpush1.msra.mxu0 0.0
    %3962 = vmatprep.subr.mxu0 0.0
    %3963 = vmatpush1.msra.mxu0 0.0
    %3964 = vmatprep.subr.mxu0 0.0
    %3965 = vmatpush1.msra.mxu0 0.0
    %3966 = vmatprep.subr.mxu0 0.0
    %3967 = vmatpush1.msra.mxu0 0.0
    %3968 = vmatprep.subr.mxu0 0.0
    %3969 = vmatpush1.msra.mxu0 0.0
    %3970 = vmatprep.subr.mxu0 0.0
    %3971 = vmatpush1.msra.mxu0 0.0
    %3972 = vmatprep.subr.mxu0 0.0
    %3973 = vmatpush1.msra.mxu0 0.0
    %3974 = vmatprep.subr.mxu0 0.0
    %3975 = vmatpush1.msra.mxu0 0.0
    %3976 = vmatprep.subr.mxu0 0.0
    %3977 = vmatpush1.msra.mxu0 0.0
    %3978 = vmatprep.subr.mxu0 0.0
    %3979 = vmatpush1.msra.mxu0 0.0
    %3980 = vmatprep.subr.mxu0 0.0
    %3981 = vmatpush1.msra.mxu0 0.0
    %3982 = vmatprep.subr.mxu0 0.0
    %3983 = vmatpush1.msra.mxu0 0.0
    %3984 = vmatprep.mubr.f32.mxu0 0.0
    %3985 = vmatmul.mubr.f32.gmra.mrb[0].mxu0 %v3918
    %v3986 = vpop.f32.mrb[0].mxu0
    %v3987 = vadd.f32 %v1395, %v3986
    %v3988 = vpop.f32.mrb[0].mxu0
    %3989 = vdwg.mxu0
    %3991 = vrot.lane.b32.xlu0 %v3987, 1
    %v3992 = vpop.permute.xlu0 %3991
    %v3994 = vsel %vm2057, %v2737, %v3992
    %vm3995 = vcmask 8192
    %3996 = vst.msk [vmem:[#allocation3] sm:$0x1] %vm3995, %v3994
    // Predicated region
    $region102: #{flat_smn_forward.1} parent=1 // pred_check
      _
    $region103: #{flat_smn_forward.1} parent=1 // pred_check_branch
      %3998 = sbr.rel (0) target = $region105
    $region104: #{flat_smn_forward.1} parent=1 // pred_region
      %s4000 = ssub.s32 16, 16
      %4001 = vsyncadd [#allocation4], %s4000
      %s4003 = sshll.u32 [#allocation3], 4
      %s4004 = int_to_ptr.vmem [resolvable:$true] %s4003
      %4006 = dma.vmem_to_hbm [thread:$0]  %s4004, 16, %s25, [#allocation4]
    $region105: #{flat_smn_forward.1} parent=1 // pred_fallthru
      _
    // Predicated region
    $region106: #{flat_smn_forward.1} parent=1 // pred_check
      _
    $region107: #{flat_smn_forward.1} parent=1 // pred_check_branch
      %4008 = sbr.rel (0) target = $region109
    $region108: #{flat_smn_forward.1} parent=1 // pred_region
      %4009 = dma.done [#allocation4], 16
    $region109: #{flat_smn_forward.1} parent=1 // pred_fallthru
      _
    %4010 = vsyncpa [#allocation4], 1

</llo_original>
